<compile_context>
chip_gen: v6e
topology: v6e:2x2x1
jax: 0.10.0
libtpu: 0.0.40
codegen_flags: <defaults>
</compile_context>

<pallas_src>
import functools
import math

import jax
import jax.numpy as jnp
from jax import lax
from jax.experimental import pallas as pl
from jax.experimental.pallas import tpu as pltpu

SEQ_MAX_LEN = 240


# ---------------------------------------------------------------------------
# Generation-aware VMEM budget (v5e/v6e: 128 MiB physical, v7x: 64 MiB per TC).
# ---------------------------------------------------------------------------
@functools.lru_cache(maxsize=None)
def _vmem_limit_bytes():
    cap = 0
    try:
        info = pltpu.get_tpu_info()
        cap = int(getattr(info, "vmem_capacity_bytes", 0) or 0)
    except Exception:
        cap = 0
    if cap <= 0:
        cap = 64 * 1024 * 1024  # conservative: v7x physical per-TC capacity
    return (cap * 3) // 4        # leave headroom for the compiler


def _full_spec(shape):
    """BlockSpec for a grid-invariant tensor loaded whole (weights, bias slabs)."""
    return pl.BlockSpec(shape, lambda *_: (0,) * len(shape))


def _token_tile(t_pad, hid, pf, vmem_limit):
    """Token-tile size for the MLP kernel: prefer 512/256 rows, bound the (tt, Pf)
    f32 FFN intermediate so the kernel never blows VMEM (esp. v7x's 64 MiB)."""
    for t in (512, 256, 128):
        if t_pad % t != 0:
            continue
        live = t * pf * 4 + 6 * t * hid * 4  # h1 (f32) + activation tiles / buffers
        if 3 * live <= vmem_limit:           # headroom for weight slabs + pipelining
            return t
    return 128                               # t_pad is always a multiple of 128


def _layer_norm(v, w, b, eps=1e-5):
    mu = jnp.mean(v, axis=-1, keepdims=True)
    var = jnp.mean((v - mu) ** 2, axis=-1, keepdims=True)
    return (v - mu) * lax.rsqrt(var + eps) * w + b


# ---------------------------------------------------------------------------
# Kernel 1: fused QKV projection + multi-head self-attention, grid=(batch,).
# ---------------------------------------------------------------------------
def _qkv_attn_kernel(x_ref, wqkv_ref, bqkv_ref, mask_ref, o_ref, *, n_heads, hd):
    hid = n_heads * hd
    inv_sqrt_hd = 1.0 / math.sqrt(hd)

    x = x_ref[...].astype(jnp.bfloat16)                       # (S, H)
    qkv = jnp.dot(x, wqkv_ref[...],
                  preferred_element_type=jnp.float32) + bqkv_ref[...]  # (S, 3H) f32
    mask = mask_ref[...]                                       # (1, S) additive bias

    # Fold the 1/sqrt(hd) scale into q once (cheap on (S, H); not on the SxS scores).
    q = (qkv[:, :hid] * inv_sqrt_hd).astype(jnp.bfloat16)
    k = qkv[:, hid:2 * hid].astype(jnp.bfloat16)
    v = qkv[:, 2 * hid:].astype(jnp.bfloat16)

    ctxs = []
    for h in range(n_heads):                                   # static unroll
        lo, hi = h * hd, (h + 1) * hd
        qh, kh, vh = q[:, lo:hi], k[:, lo:hi], v[:, lo:hi]     # (S, hd) bf16
        # scores = qh @ kh^T without materializing the transpose
        s = lax.dot_general(qh, kh, dimension_numbers=(((1,), (1,)), ((), ())),
                            preferred_element_type=jnp.float32)        # (S, S)
        s = s + mask                                           # key-padding bias
        s = s - jnp.max(s, axis=-1, keepdims=True)
        p = jnp.exp(s)
        p = p * pl.reciprocal(jnp.sum(p, axis=-1, keepdims=True), approx=True)
        ctxs.append(jnp.dot(p.astype(jnp.bfloat16), vh,
                            preferred_element_type=jnp.float32))       # (S, hd)

    # Single lane-dense (S, H) store.
    o_ref[...] = jnp.concatenate(ctxs, axis=-1).astype(o_ref.dtype)


def qkv_attention(x, mask_bias, p, n_heads):
    B, S_pad, H = x.shape
    assert H % n_heads == 0
    hd = H // n_heads
    seq_spec = pl.BlockSpec((None, S_pad, H), lambda b: (b, 0, 0))
    mask_spec = pl.BlockSpec((None, 1, S_pad), lambda b: (b, 0, 0))
    return pl.pallas_call(
        functools.partial(_qkv_attn_kernel, n_heads=n_heads, hd=hd),
        out_shape=jax.ShapeDtypeStruct((B, S_pad, H), jnp.bfloat16),
        grid=(B,),
        in_specs=[seq_spec,
                  _full_spec((H, 3 * H)), _full_spec((1, 3 * H)),
                  mask_spec],
        out_specs=seq_spec,
        compiler_params=pltpu.CompilerParams(
            dimension_semantics=("parallel",),
            vmem_limit_bytes=_vmem_limit_bytes()),
    )(x, p["wqkv"], p["bqkv"], mask_bias)


# ---------------------------------------------------------------------------
# Kernel 2: out-proj + residual + LN1 + FFN + residual + LN2 (token-flattened).
# ---------------------------------------------------------------------------
def _mlp_kernel(x_ref, ctx_ref, wo_ref, w1_ref, w2_ref, vecs_ref, b1_ref, o_ref):
    x = x_ref[...]                       # (tt, H) f32 residual input
    vecs = vecs_ref[...]                 # (8, H) packed: bo, ln1w, ln1b, b2, ln2w, ln2b
    bo, ln1w, ln1b = vecs[0:1], vecs[1:2], vecs[2:3]
    b2, ln2w, ln2b = vecs[3:4], vecs[4:5], vecs[5:6]

    attn = jnp.dot(ctx_ref[...], wo_ref[...],
                   preferred_element_type=jnp.float32) + bo
    y = _layer_norm(x + attn, ln1w, ln1b)
    h1 = jnp.dot(y.astype(jnp.bfloat16), w1_ref[...],
                 preferred_element_type=jnp.float32) + b1_ref[...]
    h1 = jnp.maximum(h1, 0.0).astype(jnp.bfloat16)
    h2 = jnp.dot(h1, w2_ref[...], preferred_element_type=jnp.float32) + b2
    z = _layer_norm(y + h2, ln2w, ln2b)
    o_ref[...] = z.astype(o_ref.dtype)


def mlp_block(x2d, ctx2d, p):
    T, H = x2d.shape
    Pf = p["w1"].shape[1]
    vmem_limit = _vmem_limit_bytes()
    tt = _token_tile(T, H, Pf, vmem_limit)
    act_spec = pl.BlockSpec((tt, H), lambda i: (i, 0))
    return pl.pallas_call(
        _mlp_kernel,
        out_shape=jax.ShapeDtypeStruct((T, H), jnp.float32),
        grid=(T // tt,),
        in_specs=[act_spec, act_spec,
                  _full_spec((H, H)), _full_spec((H, Pf)), _full_spec((Pf, H)),
                  _full_spec((8, H)), _full_spec((1, Pf))],
        out_specs=act_spec,
        compiler_params=pltpu.CompilerParams(
            dimension_semantics=("parallel",),
            vmem_limit_bytes=vmem_limit),
    )(x2d, ctx2d, p["wo"], p["w1"], p["w2"], p["vecs"], p["b1"])


# ---------------------------------------------------------------------------
# One encoder layer / full encoder forward.
# ---------------------------------------------------------------------------
def encoder_layer(x, mask_bias, p, n_heads):
    B, S_pad, H = x.shape
    ctx = qkv_attention(x, mask_bias, p, n_heads)          # (B, S_pad, H) bf16
    y2d = mlp_block(x.reshape(B * S_pad, H), ctx.reshape(B * S_pad, H), p)
    return y2d.reshape(B, S_pad, H)


def encoder_forward(src_tokens, key_padding_mask, params, n_heads):
    B, S = src_tokens.shape
    H = params["tok_emb"].shape[1]
    scale = jnp.float32(math.sqrt(H))

    # Embedding gather is data-dependent; scale + positional add fuse into it in XLA.
    # TODO(synk): dropout layers are identity here (inference mode).
    x = jnp.take(params["tok_emb"], src_tokens, axis=0) * scale + params["pos_emb"][:S]

    # Pad the sequence to a multiple of 128 so all lane dims are dense/unmasked.
    S_pad = ((S + 127) // 128) * 128
    if S_pad != S:
        x = jnp.pad(x, ((0, 0), (0, S_pad - S), (0, 0)))
        key_padding_mask = jnp.pad(key_padding_mask, ((0, 0), (0, S_pad - S)),
                                   constant_values=True)

    # key_padding_mask: True = "ignore this key" -> large negative additive bias.
    # (PyTorch uses -inf; -1e9 avoids NaN for fully masked rows.)
    mask_bias = jnp.where(key_padding_mask, -1e9, 0.0).astype(jnp.float32)
    mask_bias = mask_bias.reshape(B, 1, S_pad)

    for lp in params["layers"]:
        x = encoder_layer(x, mask_bias, lp, n_heads)
    return x[:, :S]


# ---------------------------------------------------------------------------
# Deterministic synthetic parameter init (shapes follow the PyTorch module).
# Matmul weights stored bf16 [in, out]; biases / LayerNorm params packed in f32.
# ---------------------------------------------------------------------------
def init_params(key, vocab, hid_dim, n_layers, pf_dim):
    bf = jnp.bfloat16

    def nrm(k, shape, s=0.05, dtype=jnp.float32):
        return (jax.random.normal(k, shape, jnp.float32) * s).astype(dtype)

    keys = jax.random.split(key, 2 + n_layers)
    params = {
        "tok_emb": nrm(keys[0], (vocab, hid_dim), 0.1),
        "pos_emb": nrm(keys[1], (SEQ_MAX_LEN, hid_dim), 0.1),
        "layers": [],
    }
    for li in range(n_layers):
        lk = jax.random.split(keys[2 + li], 8)
        wqkv = jnp.concatenate([nrm(lk[0], (hid_dim, hid_dim)),
                                nrm(lk[1], (hid_dim, hid_dim)),
                                nrm(lk[2], (hid_dim, hid_dim))], axis=1).astype(bf)
        # Packed per-token vectors: rows = [bo, ln1_w, ln1_b, b2, ln2_w, ln2_b, 0, 0]
        vecs = jnp.zeros((8, hid_dim), jnp.float32)
        vecs = vecs.at[0].set(nrm(lk[5], (hid_dim,)))   # out-proj bias
        vecs = vecs.at[1].set(1.0)                      # ln1 weight
        vecs = vecs.at[4].set(1.0)                      # ln2 weight
        params["layers"].append({
            "wqkv": wqkv,                               # (H, 3H) bf16
            "bqkv": nrm(lk[3], (1, 3 * hid_dim)),       # (1, 3H) f32
            "wo":   nrm(lk[4], (hid_dim, hid_dim), dtype=bf),
            "w1":   nrm(lk[6], (hid_dim, pf_dim), dtype=bf),
            "b1":   jnp.zeros((1, pf_dim), jnp.float32),
            "w2":   nrm(lk[7], (pf_dim, hid_dim), dtype=bf),
            "vecs": vecs,                               # (8, H) f32
        })
    return params


if __name__ == "__main__":
    B, S = 2, 8
    HID, N_HEADS, PF_DIM, N_LAYERS = 32, 4, 64, 2
    VOCAB = 24

    root = jax.random.PRNGKey(0)
    k_params, k_src = jax.random.split(root)
    params = init_params(k_params, VOCAB, HID, N_LAYERS, PF_DIM)

    src = jax.random.randint(k_src, (B, S), 0, VOCAB, dtype=jnp.int32)   # token ids
    # key_padding_mask: True = padded position (second sequence has 2 padded keys)
    src_mask = jnp.zeros((B, S), dtype=bool).at[1, 6:].set(True)

    fwd = jax.jit(encoder_forward, static_argnums=(3,))
    out = jax.block_until_ready(fwd(src, src_mask, params, N_HEADS))

    assert out.shape == (B, S, HID), out.shape
    assert bool(jnp.all(jnp.isfinite(out.astype(jnp.float32))))
    print("KERNEL_OK")
</pallas_src>

<mosaic_0001>
module attributes {stable_mosaic.version = 11 : i64} {
  func.func @_qkv_attn_kernel(%arg0: i32, %arg1: memref<1x128x32xf32, #tpu.memory_space<vmem>>, %arg2: memref<32x96xbf16, #tpu.memory_space<vmem>>, %arg3: memref<1x96xf32, #tpu.memory_space<vmem>>, %arg4: memref<1x1x128xf32, #tpu.memory_space<vmem>>, %arg5: memref<1x128x32xbf16, #tpu.memory_space<vmem>>) attributes {dimension_semantics = [#tpu.dimension_semantics<parallel>], iteration_bounds = array<i64: 2>, scalar_prefetch = 0 : i64, scratch_operands = 0 : i64, tpu.core_type = #tpu.core_type<tc>, window_params = [{transform_indices = @transform_0, window_bounds = array<i64: 1, 128, 32>}, {pipeline_mode = #tpu.pipeline_mode<synchronous>, transform_indices = @transform_1, window_bounds = array<i64: 32, 96>}, {pipeline_mode = #tpu.pipeline_mode<synchronous>, transform_indices = @transform_2, window_bounds = array<i64: 1, 96>}, {transform_indices = @transform_3, window_bounds = array<i64: 1, 1, 128>}, {transform_indices = @transform_4, window_bounds = array<i64: 1, 128, 32>}]} {
    %c0 = arith.constant 0 : index
    %c0_0 = arith.constant 0 : index
    %c0_1 = arith.constant 0 : index
    %0 = vector.load %arg1[%c0, %c0_0, %c0_1] : memref<1x128x32xf32, #tpu.memory_space<vmem>>, vector<1x128x32xf32>
    %1 = vector.shape_cast %0 : vector<1x128x32xf32> to vector<128x32xf32>
    %2 = arith.truncf %1 : vector<128x32xf32> to vector<128x32xbf16>
    %c0_2 = arith.constant 0 : index
    %c0_3 = arith.constant 0 : index
    %3 = vector.load %arg2[%c0_2, %c0_3] : memref<32x96xbf16, #tpu.memory_space<vmem>>, vector<32x96xbf16>
    %cst = arith.constant dense<0.000000e+00> : vector<128x96xf32>
    %4 = tpu.matmul %2, %3, %cst {dimension_numbers = #tpu.dot_dimension_numbers<[1], [0], [0], [1], [0, 0, 1, 1], [], []>} : vector<128x32xbf16>, vector<32x96xbf16>, vector<128x96xf32> -> vector<128x96xf32>
    %c0_4 = arith.constant 0 : index
    %c0_5 = arith.constant 0 : index
    %5 = vector.load %arg3[%c0_4, %c0_5] : memref<1x96xf32, #tpu.memory_space<vmem>>, vector<1x96xf32>
    %6 = vector.broadcast %5 : vector<1x96xf32> to vector<128x96xf32>
    %7 = arith.addf %4, %6 : vector<128x96xf32>
    %c0_6 = arith.constant 0 : index
    %c0_7 = arith.constant 0 : index
    %c0_8 = arith.constant 0 : index
    %8 = vector.load %arg4[%c0_6, %c0_7, %c0_8] : memref<1x1x128xf32, #tpu.memory_space<vmem>>, vector<1x1x128xf32>
    %9 = vector.shape_cast %8 : vector<1x1x128xf32> to vector<1x128xf32>
    %10 = vector.extract_strided_slice %7 {offsets = [0, 0], sizes = [128, 32], strides = [1, 1]} : vector<128x96xf32> to vector<128x32xf32>
    %cst_9 = arith.constant 0.353553385 : f32
    %11 = vector.broadcast %cst_9 : f32 to vector<128x32xf32>
    %12 = arith.mulf %10, %11 : vector<128x32xf32>
    %13 = arith.truncf %12 : vector<128x32xf32> to vector<128x32xbf16>
    %14 = vector.extract_strided_slice %7 {offsets = [0, 32], sizes = [128, 32], strides = [1, 1]} : vector<128x96xf32> to vector<128x32xf32>
    %15 = arith.truncf %14 : vector<128x32xf32> to vector<128x32xbf16>
    %16 = vector.extract_strided_slice %7 {offsets = [0, 64], sizes = [128, 32], strides = [1, 1]} : vector<128x96xf32> to vector<128x32xf32>
    %17 = arith.truncf %16 : vector<128x32xf32> to vector<128x32xbf16>
    %18 = vector.extract_strided_slice %13 {offsets = [0, 0], sizes = [128, 8], strides = [1, 1]} : vector<128x32xbf16> to vector<128x8xbf16>
    %19 = vector.extract_strided_slice %15 {offsets = [0, 0], sizes = [128, 8], strides = [1, 1]} : vector<128x32xbf16> to vector<128x8xbf16>
    %20 = vector.extract_strided_slice %17 {offsets = [0, 0], sizes = [128, 8], strides = [1, 1]} : vector<128x32xbf16> to vector<128x8xbf16>
    %cst_10 = arith.constant dense<0.000000e+00> : vector<128x128xf32>
    %21 = tpu.matmul %18, %19, %cst_10 {dimension_numbers = #tpu.dot_dimension_numbers<[1], [1], [0], [0], [0, 0, 1, 0], [], []>} : vector<128x8xbf16>, vector<128x8xbf16>, vector<128x128xf32> -> vector<128x128xf32>
    %22 = vector.broadcast %9 : vector<1x128xf32> to vector<128x128xf32>
    %23 = arith.addf %21, %22 : vector<128x128xf32>
    %cst_11 = arith.constant dense<0xFF800000> : vector<128xf32>
    %24 = vector.multi_reduction <maximumf>, %23, %cst_11 [1] : vector<128x128xf32> to vector<128xf32>
    %25 = vector.shape_cast %24 : vector<128xf32> to vector<128x1xf32>
    %26 = vector.broadcast %25 : vector<128x1xf32> to vector<128x128xf32>
    %27 = arith.subf %23, %26 : vector<128x128xf32>
    %28 = math.exp %27 : vector<128x128xf32>
    %cst_12 = arith.constant dense<0.000000e+00> : vector<128xf32>
    %29 = vector.multi_reduction <add>, %28, %cst_12 [1] : vector<128x128xf32> to vector<128xf32>
    %30 = vector.shape_cast %29 : vector<128xf32> to vector<128x1xf32>
    %31 = tpu.reciprocal %30 {approx = true} : vector<128x1xf32> -> vector<128x1xf32>
    %32 = vector.broadcast %31 : vector<128x1xf32> to vector<128x128xf32>
    %33 = arith.mulf %28, %32 : vector<128x128xf32>
    %34 = arith.truncf %33 : vector<128x128xf32> to vector<128x128xbf16>
    %cst_13 = arith.constant dense<0.000000e+00> : vector<128x8xf32>
    %35 = tpu.matmul %34, %20, %cst_13 {dimension_numbers = #tpu.dot_dimension_numbers<[1], [0], [0], [1], [0, 0, 1, 1], [], []>} : vector<128x128xbf16>, vector<128x8xbf16>, vector<128x8xf32> -> vector<128x8xf32>
    %36 = vector.extract_strided_slice %13 {offsets = [0, 8], sizes = [128, 8], strides = [1, 1]} : vector<128x32xbf16> to vector<128x8xbf16>
    %37 = vector.extract_strided_slice %15 {offsets = [0, 8], sizes = [128, 8], strides = [1, 1]} : vector<128x32xbf16> to vector<128x8xbf16>
    %38 = vector.extract_strided_slice %17 {offsets = [0, 8], sizes = [128, 8], strides = [1, 1]} : vector<128x32xbf16> to vector<128x8xbf16>
    %cst_14 = arith.constant dense<0.000000e+00> : vector<128x128xf32>
    %39 = tpu.matmul %36, %37, %cst_14 {dimension_numbers = #tpu.dot_dimension_numbers<[1], [1], [0], [0], [0, 0, 1, 0], [], []>} : vector<128x8xbf16>, vector<128x8xbf16>, vector<128x128xf32> -> vector<128x128xf32>
    %40 = vector.broadcast %9 : vector<1x128xf32> to vector<128x128xf32>
    %41 = arith.addf %39, %40 : vector<128x128xf32>
    %cst_15 = arith.constant dense<0xFF800000> : vector<128xf32>
    %42 = vector.multi_reduction <maximumf>, %41, %cst_15 [1] : vector<128x128xf32> to vector<128xf32>
    %43 = vector.shape_cast %42 : vector<128xf32> to vector<128x1xf32>
    %44 = vector.broadcast %43 : vector<128x1xf32> to vector<128x128xf32>
    %45 = arith.subf %41, %44 : vector<128x128xf32>
    %46 = math.exp %45 : vector<128x128xf32>
    %cst_16 = arith.constant dense<0.000000e+00> : vector<128xf32>
    %47 = vector.multi_reduction <add>, %46, %cst_16 [1] : vector<128x128xf32> to vector<128xf32>
    %48 = vector.shape_cast %47 : vector<128xf32> to vector<128x1xf32>
    %49 = tpu.reciprocal %48 {approx = true} : vector<128x1xf32> -> vector<128x1xf32>
    %50 = vector.broadcast %49 : vector<128x1xf32> to vector<128x128xf32>
    %51 = arith.mulf %46, %50 : vector<128x128xf32>
    %52 = arith.truncf %51 : vector<128x128xf32> to vector<128x128xbf16>
    %cst_17 = arith.constant dense<0.000000e+00> : vector<128x8xf32>
    %53 = tpu.matmul %52, %38, %cst_17 {dimension_numbers = #tpu.dot_dimension_numbers<[1], [0], [0], [1], [0, 0, 1, 1], [], []>} : vector<128x128xbf16>, vector<128x8xbf16>, vector<128x8xf32> -> vector<128x8xf32>
    %54 = vector.extract_strided_slice %13 {offsets = [0, 16], sizes = [128, 8], strides = [1, 1]} : vector<128x32xbf16> to vector<128x8xbf16>
    %55 = vector.extract_strided_slice %15 {offsets = [0, 16], sizes = [128, 8], strides = [1, 1]} : vector<128x32xbf16> to vector<128x8xbf16>
    %56 = vector.extract_strided_slice %17 {offsets = [0, 16], sizes = [128, 8], strides = [1, 1]} : vector<128x32xbf16> to vector<128x8xbf16>
    %cst_18 = arith.constant dense<0.000000e+00> : vector<128x128xf32>
    %57 = tpu.matmul %54, %55, %cst_18 {dimension_numbers = #tpu.dot_dimension_numbers<[1], [1], [0], [0], [0, 0, 1, 0], [], []>} : vector<128x8xbf16>, vector<128x8xbf16>, vector<128x128xf32> -> vector<128x128xf32>
    %58 = vector.broadcast %9 : vector<1x128xf32> to vector<128x128xf32>
    %59 = arith.addf %57, %58 : vector<128x128xf32>
    %cst_19 = arith.constant dense<0xFF800000> : vector<128xf32>
    %60 = vector.multi_reduction <maximumf>, %59, %cst_19 [1] : vector<128x128xf32> to vector<128xf32>
    %61 = vector.shape_cast %60 : vector<128xf32> to vector<128x1xf32>
    %62 = vector.broadcast %61 : vector<128x1xf32> to vector<128x128xf32>
    %63 = arith.subf %59, %62 : vector<128x128xf32>
    %64 = math.exp %63 : vector<128x128xf32>
    %cst_20 = arith.constant dense<0.000000e+00> : vector<128xf32>
    %65 = vector.multi_reduction <add>, %64, %cst_20 [1] : vector<128x128xf32> to vector<128xf32>
    %66 = vector.shape_cast %65 : vector<128xf32> to vector<128x1xf32>
    %67 = tpu.reciprocal %66 {approx = true} : vector<128x1xf32> -> vector<128x1xf32>
    %68 = vector.broadcast %67 : vector<128x1xf32> to vector<128x128xf32>
    %69 = arith.mulf %64, %68 : vector<128x128xf32>
    %70 = arith.truncf %69 : vector<128x128xf32> to vector<128x128xbf16>
    %cst_21 = arith.constant dense<0.000000e+00> : vector<128x8xf32>
    %71 = tpu.matmul %70, %56, %cst_21 {dimension_numbers = #tpu.dot_dimension_numbers<[1], [0], [0], [1], [0, 0, 1, 1], [], []>} : vector<128x128xbf16>, vector<128x8xbf16>, vector<128x8xf32> -> vector<128x8xf32>
    %72 = vector.extract_strided_slice %13 {offsets = [0, 24], sizes = [128, 8], strides = [1, 1]} : vector<128x32xbf16> to vector<128x8xbf16>
    %73 = vector.extract_strided_slice %15 {offsets = [0, 24], sizes = [128, 8], strides = [1, 1]} : vector<128x32xbf16> to vector<128x8xbf16>
    %74 = vector.extract_strided_slice %17 {offsets = [0, 24], sizes = [128, 8], strides = [1, 1]} : vector<128x32xbf16> to vector<128x8xbf16>
    %cst_22 = arith.constant dense<0.000000e+00> : vector<128x128xf32>
    %75 = tpu.matmul %72, %73, %cst_22 {dimension_numbers = #tpu.dot_dimension_numbers<[1], [1], [0], [0], [0, 0, 1, 0], [], []>} : vector<128x8xbf16>, vector<128x8xbf16>, vector<128x128xf32> -> vector<128x128xf32>
    %76 = vector.broadcast %9 : vector<1x128xf32> to vector<128x128xf32>
    %77 = arith.addf %75, %76 : vector<128x128xf32>
    %cst_23 = arith.constant dense<0xFF800000> : vector<128xf32>
    %78 = vector.multi_reduction <maximumf>, %77, %cst_23 [1] : vector<128x128xf32> to vector<128xf32>
    %79 = vector.shape_cast %78 : vector<128xf32> to vector<128x1xf32>
    %80 = vector.broadcast %79 : vector<128x1xf32> to vector<128x128xf32>
    %81 = arith.subf %77, %80 : vector<128x128xf32>
    %82 = math.exp %81 : vector<128x128xf32>
    %cst_24 = arith.constant dense<0.000000e+00> : vector<128xf32>
    %83 = vector.multi_reduction <add>, %82, %cst_24 [1] : vector<128x128xf32> to vector<128xf32>
    %84 = vector.shape_cast %83 : vector<128xf32> to vector<128x1xf32>
    %85 = tpu.reciprocal %84 {approx = true} : vector<128x1xf32> -> vector<128x1xf32>
    %86 = vector.broadcast %85 : vector<128x1xf32> to vector<128x128xf32>
    %87 = arith.mulf %82, %86 : vector<128x128xf32>
    %88 = arith.truncf %87 : vector<128x128xf32> to vector<128x128xbf16>
    %cst_25 = arith.constant dense<0.000000e+00> : vector<128x8xf32>
    %89 = tpu.matmul %88, %74, %cst_25 {dimension_numbers = #tpu.dot_dimension_numbers<[1], [0], [0], [1], [0, 0, 1, 1], [], []>} : vector<128x128xbf16>, vector<128x8xbf16>, vector<128x8xf32> -> vector<128x8xf32>
    %90 = tpu.concatenate %35, %53, %71, %89 in 1 : vector<128x8xf32>, vector<128x8xf32>, vector<128x8xf32>, vector<128x8xf32> -> vector<128x32xf32>
    %91 = arith.truncf %90 : vector<128x32xf32> to vector<128x32xbf16>
    %c0_26 = arith.constant 0 : index
    %c0_27 = arith.constant 0 : index
    %c0_28 = arith.constant 0 : index
    %92 = vector.load %arg5[%c0_26, %c0_27, %c0_28] : memref<1x128x32xbf16, #tpu.memory_space<vmem>>, vector<1x128x32xbf16>
    %93 = vector.shape_cast %92 : vector<1x128x32xbf16> to vector<128x32xbf16>
    %94 = vector.shape_cast %91 : vector<128x32xbf16> to vector<1x128x32xbf16>
    tpu.vector_store %arg5[%c0_26, %c0_27, %c0_28], %94 {strides = array<i32>} : memref<1x128x32xbf16, #tpu.memory_space<vmem>>, vector<1x128x32xbf16>,
    return
  }
  func.func @transform_0(%arg0: i32) -> (i32, i32, i32) {
    %c0_i32 = arith.constant 0 : i32
    %c0_i32_0 = arith.constant 0 : i32
    %c0_i32_1 = arith.constant 0 : i32
    return %arg0, %c0_i32, %c0_i32_0 : i32, i32, i32
  }
  func.func @transform_1(%arg0: i32) -> (i32, i32) {
    %c0_i32 = arith.constant 0 : i32
    %c0_i32_0 = arith.constant 0 : i32
    %c0_i32_1 = arith.constant 0 : i32
    return %c0_i32, %c0_i32_0 : i32, i32
  }
  func.func @transform_2(%arg0: i32) -> (i32, i32) {
    %c0_i32 = arith.constant 0 : i32
    %c0_i32_0 = arith.constant 0 : i32
    %c0_i32_1 = arith.constant 0 : i32
    return %c0_i32, %c0_i32_0 : i32, i32
  }
  func.func @transform_3(%arg0: i32) -> (i32, i32, i32) {
    %c0_i32 = arith.constant 0 : i32
    %c0_i32_0 = arith.constant 0 : i32
    %c0_i32_1 = arith.constant 0 : i32
    return %arg0, %c0_i32, %c0_i32_0 : i32, i32, i32
  }
  func.func @transform_4(%arg0: i32) -> (i32, i32, i32) {
    %c0_i32 = arith.constant 0 : i32
    %c0_i32_0 = arith.constant 0 : i32
    %c0_i32_1 = arith.constant 0 : i32
    return %arg0, %c0_i32, %c0_i32_0 : i32, i32, i32
  }
}

module attributes {stable_mosaic.version = 11 : i64} {
  func.func @_mlp_kernel(%arg0: i32, %arg1: memref<256x32xf32, #tpu.memory_space<vmem>>, %arg2: memref<256x32xbf16, #tpu.memory_space<vmem>>, %arg3: memref<32x32xbf16, #tpu.memory_space<vmem>>, %arg4: memref<32x64xbf16, #tpu.memory_space<vmem>>, %arg5: memref<64x32xbf16, #tpu.memory_space<vmem>>, %arg6: memref<8x32xf32, #tpu.memory_space<vmem>>, %arg7: memref<1x64xf32, #tpu.memory_space<vmem>>, %arg8: memref<256x32xf32, #tpu.memory_space<vmem>>) attributes {dimension_semantics = [#tpu.dimension_semantics<parallel>], iteration_bounds = array<i64: 1>, scalar_prefetch = 0 : i64, scratch_operands = 0 : i64, tpu.core_type = #tpu.core_type<tc>, window_params = [{transform_indices = @transform_0, window_bounds = array<i64: 256, 32>}, {transform_indices = @transform_1, window_bounds = array<i64: 256, 32>}, {pipeline_mode = #tpu.pipeline_mode<synchronous>, transform_indices = @transform_2, window_bounds = array<i64: 32, 32>}, {pipeline_mode = #tpu.pipeline_mode<synchronous>, transform_indices = @transform_3, window_bounds = array<i64: 32, 64>}, {pipeline_mode = #tpu.pipeline_mode<synchronous>, transform_indices = @transform_4, window_bounds = array<i64: 64, 32>}, {pipeline_mode = #tpu.pipeline_mode<synchronous>, transform_indices = @transform_5, window_bounds = array<i64: 8, 32>}, {pipeline_mode = #tpu.pipeline_mode<synchronous>, transform_indices = @transform_6, window_bounds = array<i64: 1, 64>}, {transform_indices = @transform_7, window_bounds = array<i64: 256, 32>}]} {
    %c0 = arith.constant 0 : index
    %c0_0 = arith.constant 0 : index
    %0 = vector.load %arg1[%c0, %c0_0] : memref<256x32xf32, #tpu.memory_space<vmem>>, vector<256x32xf32>
    %c0_1 = arith.constant 0 : index
    %c0_2 = arith.constant 0 : index
    %1 = vector.load %arg6[%c0_1, %c0_2] : memref<8x32xf32, #tpu.memory_space<vmem>>, vector<8x32xf32>
    %2 = vector.extract_strided_slice %1 {offsets = [0, 0], sizes = [1, 32], strides = [1, 1]} : vector<8x32xf32> to vector<1x32xf32>
    %3 = vector.extract_strided_slice %1 {offsets = [1, 0], sizes = [1, 32], strides = [1, 1]} : vector<8x32xf32> to vector<1x32xf32>
    %4 = vector.extract_strided_slice %1 {offsets = [2, 0], sizes = [1, 32], strides = [1, 1]} : vector<8x32xf32> to vector<1x32xf32>
    %5 = vector.extract_strided_slice %1 {offsets = [3, 0], sizes = [1, 32], strides = [1, 1]} : vector<8x32xf32> to vector<1x32xf32>
    %6 = vector.extract_strided_slice %1 {offsets = [4, 0], sizes = [1, 32], strides = [1, 1]} : vector<8x32xf32> to vector<1x32xf32>
    %7 = vector.extract_strided_slice %1 {offsets = [5, 0], sizes = [1, 32], strides = [1, 1]} : vector<8x32xf32> to vector<1x32xf32>
    %c0_3 = arith.constant 0 : index
    %c0_4 = arith.constant 0 : index
    %8 = vector.load %arg2[%c0_3, %c0_4] : memref<256x32xbf16, #tpu.memory_space<vmem>>, vector<256x32xbf16>
    %c0_5 = arith.constant 0 : index
    %c0_6 = arith.constant 0 : index
    %9 = vector.load %arg3[%c0_5, %c0_6] : memref<32x32xbf16, #tpu.memory_space<vmem>>, vector<32x32xbf16>
    %cst = arith.constant dense<0.000000e+00> : vector<256x32xf32>
    %10 = tpu.matmul %8, %9, %cst {dimension_numbers = #tpu.dot_dimension_numbers<[1], [0], [0], [1], [0, 0, 1, 1], [], []>} : vector<256x32xbf16>, vector<32x32xbf16>, vector<256x32xf32> -> vector<256x32xf32>
    %11 = vector.broadcast %2 : vector<1x32xf32> to vector<256x32xf32>
    %12 = arith.addf %10, %11 : vector<256x32xf32>
    %13 = arith.addf %0, %12 : vector<256x32xf32>
    %cst_7 = arith.constant dense<0.000000e+00> : vector<256xf32>
    %14 = vector.multi_reduction <add>, %13, %cst_7 [1] : vector<256x32xf32> to vector<256xf32>
    %15 = vector.shape_cast %14 : vector<256xf32> to vector<256x1xf32>
    %cst_8 = arith.constant 3.200000e+01 : f32
    %16 = vector.broadcast %cst_8 : f32 to vector<256x1xf32>
    %17 = arith.divf %15, %16 : vector<256x1xf32>
    %18 = vector.broadcast %17 : vector<256x1xf32> to vector<256x32xf32>
    %19 = arith.subf %13, %18 : vector<256x32xf32>
    %20 = arith.mulf %19, %19 : vector<256x32xf32>
    %cst_9 = arith.constant dense<0.000000e+00> : vector<256xf32>
    %21 = vector.multi_reduction <add>, %20, %cst_9 [1] : vector<256x32xf32> to vector<256xf32>
    %22 = vector.shape_cast %21 : vector<256xf32> to vector<256x1xf32>
    %cst_10 = arith.constant 3.200000e+01 : f32
    %23 = vector.broadcast %cst_10 : f32 to vector<256x1xf32>
    %24 = arith.divf %22, %23 : vector<256x1xf32>
    %25 = vector.broadcast %17 : vector<256x1xf32> to vector<256x32xf32>
    %26 = arith.subf %13, %25 : vector<256x32xf32>
    %cst_11 = arith.constant 9.99999974E-6 : f32
    %27 = vector.broadcast %cst_11 : f32 to vector<256x1xf32>
    %28 = arith.addf %24, %27 : vector<256x1xf32>
    %29 = math.rsqrt %28 : vector<256x1xf32>
    %30 = vector.broadcast %29 : vector<256x1xf32> to vector<256x32xf32>
    %31 = arith.mulf %26, %30 : vector<256x32xf32>
    %32 = vector.broadcast %3 : vector<1x32xf32> to vector<256x32xf32>
    %33 = arith.mulf %31, %32 : vector<256x32xf32>
    %34 = vector.broadcast %4 : vector<1x32xf32> to vector<256x32xf32>
    %35 = arith.addf %33, %34 : vector<256x32xf32>
    %36 = arith.truncf %35 : vector<256x32xf32> to vector<256x32xbf16>
    %c0_12 = arith.constant 0 : index
    %c0_13 = arith.constant 0 : index
    %37 = vector.load %arg4[%c0_12, %c0_13] : memref<32x64xbf16, #tpu.memory_space<vmem>>, vector<32x64xbf16>
    %cst_14 = arith.constant dense<0.000000e+00> : vector<256x64xf32>
    %38 = tpu.matmul %36, %37, %cst_14 {dimension_numbers = #tpu.dot_dimension_numbers<[1], [0], [0], [1], [0, 0, 1, 1], [], []>} : vector<256x32xbf16>, vector<32x64xbf16>, vector<256x64xf32> -> vector<256x64xf32>
    %c0_15 = arith.constant 0 : index
    %c0_16 = arith.constant 0 : index
    %39 = vector.load %arg7[%c0_15, %c0_16] : memref<1x64xf32, #tpu.memory_space<vmem>>, vector<1x64xf32>
    %40 = vector.broadcast %39 : vector<1x64xf32> to vector<256x64xf32>
    %41 = arith.addf %38, %40 : vector<256x64xf32>
    %cst_17 = arith.constant 0.000000e+00 : f32
    %42 = vector.broadcast %cst_17 : f32 to vector<256x64xf32>
    %43 = arith.maximumf %41, %42 : vector<256x64xf32>
    %44 = arith.truncf %43 : vector<256x64xf32> to vector<256x64xbf16>
    %c0_18 = arith.constant 0 : index
    %c0_19 = arith.constant 0 : index
    %45 = vector.load %arg5[%c0_18, %c0_19] : memref<64x32xbf16, #tpu.memory_space<vmem>>, vector<64x32xbf16>
    %cst_20 = arith.constant dense<0.000000e+00> : vector<256x32xf32>
    %46 = tpu.matmul %44, %45, %cst_20 {dimension_numbers = #tpu.dot_dimension_numbers<[1], [0], [0], [1], [0, 0, 1, 1], [], []>} : vector<256x64xbf16>, vector<64x32xbf16>, vector<256x32xf32> -> vector<256x32xf32>
    %47 = vector.broadcast %5 : vector<1x32xf32> to vector<256x32xf32>
    %48 = arith.addf %46, %47 : vector<256x32xf32>
    %49 = arith.addf %35, %48 : vector<256x32xf32>
    %cst_21 = arith.constant dense<0.000000e+00> : vector<256xf32>
    %50 = vector.multi_reduction <add>, %49, %cst_21 [1] : vector<256x32xf32> to vector<256xf32>
    %51 = vector.shape_cast %50 : vector<256xf32> to vector<256x1xf32>
    %cst_22 = arith.constant 3.200000e+01 : f32
    %52 = vector.broadcast %cst_22 : f32 to vector<256x1xf32>
    %53 = arith.divf %51, %52 : vector<256x1xf32>
    %54 = vector.broadcast %53 : vector<256x1xf32> to vector<256x32xf32>
    %55 = arith.subf %49, %54 : vector<256x32xf32>
    %56 = arith.mulf %55, %55 : vector<256x32xf32>
    %cst_23 = arith.constant dense<0.000000e+00> : vector<256xf32>
    %57 = vector.multi_reduction <add>, %56, %cst_23 [1] : vector<256x32xf32> to vector<256xf32>
    %58 = vector.shape_cast %57 : vector<256xf32> to vector<256x1xf32>
    %cst_24 = arith.constant 3.200000e+01 : f32
    %59 = vector.broadcast %cst_24 : f32 to vector<256x1xf32>
    %60 = arith.divf %58, %59 : vector<256x1xf32>
    %61 = vector.broadcast %53 : vector<256x1xf32> to vector<256x32xf32>
    %62 = arith.subf %49, %61 : vector<256x32xf32>
    %cst_25 = arith.constant 9.99999974E-6 : f32
    %63 = vector.broadcast %cst_25 : f32 to vector<256x1xf32>
    %64 = arith.addf %60, %63 : vector<256x1xf32>
    %65 = math.rsqrt %64 : vector<256x1xf32>
    %66 = vector.broadcast %65 : vector<256x1xf32> to vector<256x32xf32>
    %67 = arith.mulf %62, %66 : vector<256x32xf32>
    %68 = vector.broadcast %6 : vector<1x32xf32> to vector<256x32xf32>
    %69 = arith.mulf %67, %68 : vector<256x32xf32>
    %70 = vector.broadcast %7 : vector<1x32xf32> to vector<256x32xf32>
    %71 = arith.addf %69, %70 : vector<256x32xf32>
    %c0_26 = arith.constant 0 : index
    %c0_27 = arith.constant 0 : index
    %72 = vector.load %arg8[%c0_26, %c0_27] : memref<256x32xf32, #tpu.memory_space<vmem>>, vector<256x32xf32>
    tpu.vector_store %arg8[%c0_26, %c0_27], %71 {strides = array<i32>} : memref<256x32xf32, #tpu.memory_space<vmem>>, vector<256x32xf32>,
    return
  }
  func.func @transform_0(%arg0: i32) -> (i32, i32) {
    %c0_i32 = arith.constant 0 : i32
    %c0_i32_0 = arith.constant 0 : i32
    return %arg0, %c0_i32 : i32, i32
  }
  func.func @transform_1(%arg0: i32) -> (i32, i32) {
    %c0_i32 = arith.constant 0 : i32
    %c0_i32_0 = arith.constant 0 : i32
    return %arg0, %c0_i32 : i32, i32
  }
  func.func @transform_2(%arg0: i32) -> (i32, i32) {
    %c0_i32 = arith.constant 0 : i32
    %c0_i32_0 = arith.constant 0 : i32
    %c0_i32_1 = arith.constant 0 : i32
    return %c0_i32, %c0_i32_0 : i32, i32
  }
  func.func @transform_3(%arg0: i32) -> (i32, i32) {
    %c0_i32 = arith.constant 0 : i32
    %c0_i32_0 = arith.constant 0 : i32
    %c0_i32_1 = arith.constant 0 : i32
    return %c0_i32, %c0_i32_0 : i32, i32
  }
  func.func @transform_4(%arg0: i32) -> (i32, i32) {
    %c0_i32 = arith.constant 0 : i32
    %c0_i32_0 = arith.constant 0 : i32
    %c0_i32_1 = arith.constant 0 : i32
    return %c0_i32, %c0_i32_0 : i32, i32
  }
  func.func @transform_5(%arg0: i32) -> (i32, i32) {
    %c0_i32 = arith.constant 0 : i32
    %c0_i32_0 = arith.constant 0 : i32
    %c0_i32_1 = arith.constant 0 : i32
    return %c0_i32, %c0_i32_0 : i32, i32
  }
  func.func @transform_6(%arg0: i32) -> (i32, i32) {
    %c0_i32 = arith.constant 0 : i32
    %c0_i32_0 = arith.constant 0 : i32
    %c0_i32_1 = arith.constant 0 : i32
    return %c0_i32, %c0_i32_0 : i32, i32
  }
  func.func @transform_7(%arg0: i32) -> (i32, i32) {
    %c0_i32 = arith.constant 0 : i32
    %c0_i32_0 = arith.constant 0 : i32
    return %arg0, %c0_i32 : i32, i32
  }
}

</mosaic_0001>

<llo_original>
// kernel: encoder_forward.5
$region0: #{encoder_forward.5}
  #allocation0 [shape = 'u32[]', space=smem, size = 0x4, offset = 0x4, fixed_abs, tag = 'smem constant byte address 0x4 - core index']
  #allocation1 [shape = 'u32[144,128]{1,0:T(1,128)}', space=vmem, size = 0x12000, scoped, tag = 'internal scratch']
  %s0 = inlined_call_operand.vmem [shape: f32[256,32], index: 0, kind: input, shape index: {}]
  %s1 = inlined_call_operand.vmem [shape: bf16[256,32], index: 1, kind: input, shape index: {}]
  %s2 = inlined_call_operand.vmem [shape: bf16[32,32], index: 2, kind: input, shape index: {}]
  %s3 = inlined_call_operand.vmem [shape: bf16[32,64], index: 3, kind: input, shape index: {}]
  %s4 = inlined_call_operand.vmem [shape: bf16[64,32], index: 4, kind: input, shape index: {}]
  %s5 = inlined_call_operand.vmem [shape: f32[8,32], index: 5, kind: input, shape index: {}]
  %s6 = inlined_call_operand.vmem [shape: f32[1,64], index: 6, kind: input, shape index: {}]
  %s7 = inlined_call_operand.vmem [shape: f32[256,32], index: 7, kind: output, shape index: {}]
  %s8 = sld [smem:[#allocation0]]
  $region38: #{encoder_forward.5} parent=0
    _
  %s10 = ssub.s32 1, %s8
  %s11 = scalar_select 0, %s10, %s8
  // Predicated region
  $region2: #{encoder_forward.5} parent=0 // pred_check
    _
  $region3: #{encoder_forward.5} parent=0 // pred_check_branch
    %13 = sbr.rel (0) target = $region5
  $region4: #{encoder_forward.5} parent=0 // pred_region
    _
  $region5: #{encoder_forward.5} parent=0 // pred_fallthru
    _
  // Predicated region
  $region6: #{encoder_forward.5} parent=0 // pred_check
    _
  $region7: #{encoder_forward.5} parent=0 // pred_check_branch
    %15 = sbr.rel (0) target = $region9
  $region8: #{encoder_forward.5} parent=0 // pred_region
    _
  $region9: #{encoder_forward.5} parent=0 // pred_fallthru
    _
  // Predicated region
  $region10: #{encoder_forward.5} parent=0 // pred_check
    _
  $region11: #{encoder_forward.5} parent=0 // pred_check_branch
    %17 = sbr.rel (0) target = $region13
  $region12: #{encoder_forward.5} parent=0 // pred_region
    _
  $region13: #{encoder_forward.5} parent=0 // pred_fallthru
    _
  // Predicated region
  $region14: #{encoder_forward.5} parent=0 // pred_check
    _
  $region15: #{encoder_forward.5} parent=0 // pred_check_branch
    %19 = sbr.rel (0) target = $region17
  $region16: #{encoder_forward.5} parent=0 // pred_region
    _
  $region17: #{encoder_forward.5} parent=0 // pred_fallthru
    _
  // Predicated region
  $region18: #{encoder_forward.5} parent=0 // pred_check
    _
  $region19: #{encoder_forward.5} parent=0 // pred_check_branch
    %21 = sbr.rel (0) target = $region21
  $region20: #{encoder_forward.5} parent=0 // pred_region
    _
  $region21: #{encoder_forward.5} parent=0 // pred_fallthru
    _
  // Predicated region
  $region22: #{encoder_forward.5} parent=0 // pred_check
    _
  $region23: #{encoder_forward.5} parent=0 // pred_check_branch
    %23 = sbr.rel (0) target = $region25
  $region24: #{encoder_forward.5} parent=0 // pred_region
    _
  $region25: #{encoder_forward.5} parent=0 // pred_fallthru
    _
  // Predicated region
  $region26: #{encoder_forward.5} parent=0 // pred_check
    _
  $region27: #{encoder_forward.5} parent=0 // pred_check_branch
    %25 = sbr.rel (0) target = $region29
  $region28: #{encoder_forward.5} parent=0 // pred_region
    _
  $region29: #{encoder_forward.5} parent=0 // pred_fallthru
    _
  %v27 = vld [vmem:[%s0] sm:$0xff]
  %v28 = vld [vmem:[%s0 + $0x8] sm:$0xff]
  %v29 = vld [vmem:[%s0 + $0x10] sm:$0xff]
  %v30 = vld [vmem:[%s0 + $0x18] sm:$0xff]
  %v31 = vld [vmem:[%s0 + $0x20] sm:$0xff]
  %v32 = vld [vmem:[%s0 + $0x28] sm:$0xff]
  %v33 = vld [vmem:[%s0 + $0x30] sm:$0xff]
  %v34 = vld [vmem:[%s0 + $0x38] sm:$0xff]
  %v35 = vld [vmem:[%s0 + $0x40] sm:$0xff]
  %v36 = vld [vmem:[%s0 + $0x48] sm:$0xff]
  %v37 = vld [vmem:[%s0 + $0x50] sm:$0xff]
  %v38 = vld [vmem:[%s0 + $0x58] sm:$0xff]
  %v39 = vld [vmem:[%s0 + $0x60] sm:$0xff]
  %v40 = vld [vmem:[%s0 + $0x68] sm:$0xff]
  %v41 = vld [vmem:[%s0 + $0x70] sm:$0xff]
  %v42 = vld [vmem:[%s0 + $0x78] sm:$0xff]
  %v43 = vld [vmem:[%s0 + $0x80] sm:$0xff]
  %v44 = vld [vmem:[%s0 + $0x88] sm:$0xff]
  %v45 = vld [vmem:[%s0 + $0x90] sm:$0xff]
  %v46 = vld [vmem:[%s0 + $0x98] sm:$0xff]
  %v47 = vld [vmem:[%s0 + $0xa0] sm:$0xff]
  %v48 = vld [vmem:[%s0 + $0xa8] sm:$0xff]
  %v49 = vld [vmem:[%s0 + $0xb0] sm:$0xff]
  %v50 = vld [vmem:[%s0 + $0xb8] sm:$0xff]
  %v51 = vld [vmem:[%s0 + $0xc0] sm:$0xff]
  %v52 = vld [vmem:[%s0 + $0xc8] sm:$0xff]
  %v53 = vld [vmem:[%s0 + $0xd0] sm:$0xff]
  %v54 = vld [vmem:[%s0 + $0xd8] sm:$0xff]
  %v55 = vld [vmem:[%s0 + $0xe0] sm:$0xff]
  %v56 = vld [vmem:[%s0 + $0xe8] sm:$0xff]
  %v57 = vld [vmem:[%s0 + $0xf0] sm:$0xff]
  %v58 = vld [vmem:[%s0 + $0xf8] sm:$0xff]
  %v59 = vld [vmem:[%s5] sm:$0xff]
  %v60 = vld [vmem:[%s1] sm:$0xf]
  %v61 = vld [vmem:[%s1 + $0x4] sm:$0xf]
  %v62 = vld [vmem:[%s1 + $0x8] sm:$0xf]
  %v63 = vld [vmem:[%s1 + $0xc] sm:$0xf]
  %v64 = vld [vmem:[%s1 + $0x10] sm:$0xf]
  %v65 = vld [vmem:[%s1 + $0x14] sm:$0xf]
  %v66 = vld [vmem:[%s1 + $0x18] sm:$0xf]
  %v67 = vld [vmem:[%s1 + $0x1c] sm:$0xf]
  %v68 = vld [vmem:[%s1 + $0x20] sm:$0xf]
  %v69 = vld [vmem:[%s1 + $0x24] sm:$0xf]
  %v70 = vld [vmem:[%s1 + $0x28] sm:$0xf]
  %v71 = vld [vmem:[%s1 + $0x2c] sm:$0xf]
  %v72 = vld [vmem:[%s1 + $0x30] sm:$0xf]
  %v73 = vld [vmem:[%s1 + $0x34] sm:$0xf]
  %v74 = vld [vmem:[%s1 + $0x38] sm:$0xf]
  %v75 = vld [vmem:[%s1 + $0x3c] sm:$0xf]
  %v76 = vld [vmem:[%s1 + $0x40] sm:$0xf]
  %v77 = vld [vmem:[%s1 + $0x44] sm:$0xf]
  %v78 = vld [vmem:[%s1 + $0x48] sm:$0xf]
  %v79 = vld [vmem:[%s1 + $0x4c] sm:$0xf]
  %v80 = vld [vmem:[%s1 + $0x50] sm:$0xf]
  %v81 = vld [vmem:[%s1 + $0x54] sm:$0xf]
  %v82 = vld [vmem:[%s1 + $0x58] sm:$0xf]
  %v83 = vld [vmem:[%s1 + $0x5c] sm:$0xf]
  %v84 = vld [vmem:[%s1 + $0x60] sm:$0xf]
  %v85 = vld [vmem:[%s1 + $0x64] sm:$0xf]
  %v86 = vld [vmem:[%s1 + $0x68] sm:$0xf]
  %v87 = vld [vmem:[%s1 + $0x6c] sm:$0xf]
  %v88 = vld [vmem:[%s1 + $0x70] sm:$0xf]
  %v89 = vld [vmem:[%s1 + $0x74] sm:$0xf]
  %v90 = vld [vmem:[%s1 + $0x78] sm:$0xf]
  %v91 = vld [vmem:[%s1 + $0x7c] sm:$0xf]
  %v92 = vld [vmem:[%s2] sm:$0xf]
  %v93 = vld [vmem:[%s2 + $0x4] sm:$0xf]
  %v94 = vld [vmem:[%s2 + $0x8] sm:$0xf]
  %v95 = vld [vmem:[%s2 + $0xc] sm:$0xf]
  %v96 = vlaneseq
  %v97 = vshrl.u32 %v96, 7
  %v98 = vsub.s32 0, %v97
  %v99 = vrot.slane %v59, %v98
  %v132 = vunpack.c.l.b16 %v60
  %v133 = vunpack.c.l.b16 %v61
  %v134 = vunpack.c.l.b16 %v62
  %v135 = vunpack.c.l.b16 %v63
  %v136 = vunpack.c.l.b16 %v64
  %v137 = vunpack.c.l.b16 %v65
  %v138 = vunpack.c.l.b16 %v66
  %v139 = vunpack.c.l.b16 %v67
  %v140 = vunpack.c.l.b16 %v68
  %v141 = vunpack.c.l.b16 %v69
  %v142 = vunpack.c.l.b16 %v70
  %v143 = vunpack.c.l.b16 %v71
  %v144 = vunpack.c.l.b16 %v72
  %v145 = vunpack.c.l.b16 %v73
  %v146 = vunpack.c.l.b16 %v74
  %v147 = vunpack.c.l.b16 %v75
  %v148 = vunpack.c.l.b16 %v76
  %v149 = vunpack.c.l.b16 %v77
  %v150 = vunpack.c.l.b16 %v78
  %v151 = vunpack.c.l.b16 %v79
  %v152 = vunpack.c.l.b16 %v80
  %v153 = vunpack.c.l.b16 %v81
  %v154 = vunpack.c.l.b16 %v82
  %v155 = vunpack.c.l.b16 %v83
  %v156 = vunpack.c.l.b16 %v84
  %v157 = vunpack.c.l.b16 %v85
  %v158 = vunpack.c.l.b16 %v86
  %v159 = vunpack.c.l.b16 %v87
  %v160 = vunpack.c.l.b16 %v88
  %v161 = vunpack.c.l.b16 %v89
  %v162 = vunpack.c.l.b16 %v90
  %v163 = vunpack.c.l.b16 %v91
  %v164 = vpack.c.b16 %v133, %v132
  %v165 = vpack.c.b16 %v135, %v134
  %v166 = vpack.c.b16 %v137, %v136
  %v167 = vpack.c.b16 %v139, %v138
  %v168 = vpack.c.b16 %v141, %v140
  %v169 = vpack.c.b16 %v143, %v142
  %v170 = vpack.c.b16 %v145, %v144
  %v171 = vpack.c.b16 %v147, %v146
  %v172 = vpack.c.b16 %v149, %v148
  %v173 = vpack.c.b16 %v151, %v150
  %v174 = vpack.c.b16 %v153, %v152
  %v175 = vpack.c.b16 %v155, %v154
  %v176 = vpack.c.b16 %v157, %v156
  %v177 = vpack.c.b16 %v159, %v158
  %v178 = vpack.c.b16 %v161, %v160
  %v179 = vpack.c.b16 %v163, %v162
  %v184 = vunpack.c.l.b16 %v92
  %v185 = vunpack.c.l.b16 %v93
  %v186 = vunpack.c.l.b16 %v94
  %v187 = vunpack.c.l.b16 %v95
  %v188 = vpack.c.b16 %v185, %v184
  %v189 = vpack.c.b16 %v187, %v186
  %vm192 = vcmask 261120
  %v194 = vsel %vm192, %v164, 0
  %v197 = vsel %vm192, %v165, 0
  %v200 = vsel %vm192, %v166, 0
  %v203 = vsel %vm192, %v167, 0
  %v206 = vsel %vm192, %v168, 0
  %v209 = vsel %vm192, %v169, 0
  %v212 = vsel %vm192, %v170, 0
  %v215 = vsel %vm192, %v171, 0
  %v218 = vsel %vm192, %v172, 0
  %v221 = vsel %vm192, %v173, 0
  %v224 = vsel %vm192, %v174, 0
  %v227 = vsel %vm192, %v175, 0
  %v230 = vsel %vm192, %v176, 0
  %v233 = vsel %vm192, %v177, 0
  %v236 = vsel %vm192, %v178, 0
  %v239 = vsel %vm192, %v179, 0
  %241 = vmatprep.subr.bf16.mxu0 0
  %242 = vmatpush1.bf16.msra.mxu0 0
  %243 = vmatprep.subr.bf16.mxu0 0
  %244 = vmatpush1.bf16.msra.mxu0 0
  %245 = vmatprep.subr.bf16.mxu0 0
  %246 = vmatpush1.bf16.msra.mxu0 0
  %247 = vmatprep.subr.bf16.mxu0 0
  %248 = vmatpush1.bf16.msra.mxu0 0
  %249 = vmatprep.subr.bf16.mxu0 0
  %250 = vmatpush1.bf16.msra.mxu0 0
  %251 = vmatprep.subr.bf16.mxu0 0
  %252 = vmatpush1.bf16.msra.mxu0 0
  %253 = vmatprep.subr.bf16.mxu0 0
  %254 = vmatpush1.bf16.msra.mxu0 %v189
  %255 = vmatprep.subr.bf16.mxu0 0
  %256 = vmatpush1.bf16.msra.mxu0 %v188
  %257 = vmatprep.subr.bf16.mxu0 0
  %258 = vmatpush2.bf16.msra.mxu0 0
  %259 = vmatprep.subr.bf16.mxu0 0
  %260 = vmatpush2.bf16.msra.mxu0 0
  %261 = vmatprep.subr.bf16.mxu0 0
  %262 = vmatpush2.bf16.msra.mxu0 0
  %263 = vmatprep.subr.bf16.mxu0 0
  %264 = vmatpush2.bf16.msra.mxu0 0
  %265 = vmatprep.subr.bf16.mxu0 0
  %266 = vmatpush2.bf16.msra.mxu0 0
  %267 = vmatprep.subr.bf16.mxu0 0
  %268 = vmatpush2.bf16.msra.mxu0 0
  %269 = vmatprep.subr.bf16.mxu0 0
  %270 = vmatpush2.bf16.msra.mxu0 0
  %271 = vmatprep.subr.bf16.mxu0 0
  %272 = vmatpush2.bf16.msra.mxu0 0
  %273 = vmatprep.mubr.bf16.mxu0 0
  %274 = vmatmul.mubr.bf16.gmra.mxu0 %v194
  %v275 = vpop.f32.mrf.mxu0
  %v276 = vadd.f32 %v99, %v275
  %v277 = vpop.f32.mrf.mxu0
  %v278 = vpop.f32.mrf.mxu0
  %v279 = vadd.f32 %v99, %v278
  %v280 = vpop.f32.mrf.mxu0
  %281 = vmatprep.mubr.bf16.mxu0 0
  %282 = vmatmul.mubr.bf16.gmra.mxu0 %v197
  %v283 = vpop.f32.mrf.mxu0
  %v284 = vadd.f32 %v99, %v283
  %v285 = vpop.f32.mrf.mxu0
  %v286 = vpop.f32.mrf.mxu0
  %v287 = vadd.f32 %v99, %v286
  %v288 = vpop.f32.mrf.mxu0
  %289 = vmatprep.mubr.bf16.mxu0 0
  %290 = vmatmul.mubr.bf16.gmra.mxu0 %v200
  %v291 = vpop.f32.mrf.mxu0
  %v292 = vadd.f32 %v99, %v291
  %v293 = vpop.f32.mrf.mxu0
  %v294 = vpop.f32.mrf.mxu0
  %v295 = vadd.f32 %v99, %v294
  %v296 = vpop.f32.mrf.mxu0
  %297 = vmatprep.mubr.bf16.mxu0 0
  %298 = vmatmul.mubr.bf16.gmra.mxu0 %v203
  %v299 = vpop.f32.mrf.mxu0
  %v300 = vadd.f32 %v99, %v299
  %v301 = vpop.f32.mrf.mxu0
  %v302 = vpop.f32.mrf.mxu0
  %v303 = vadd.f32 %v99, %v302
  %v304 = vpop.f32.mrf.mxu0
  %305 = vmatprep.mubr.bf16.mxu0 0
  %306 = vmatmul.mubr.bf16.gmra.mxu0 %v206
  %v307 = vpop.f32.mrf.mxu0
  %v308 = vadd.f32 %v99, %v307
  %v309 = vpop.f32.mrf.mxu0
  %v310 = vpop.f32.mrf.mxu0
  %v311 = vadd.f32 %v99, %v310
  %v312 = vpop.f32.mrf.mxu0
  %313 = vmatprep.mubr.bf16.mxu0 0
  %314 = vmatmul.mubr.bf16.gmra.mxu0 %v209
  %v315 = vpop.f32.mrf.mxu0
  %v316 = vadd.f32 %v99, %v315
  %v317 = vpop.f32.mrf.mxu0
  %v318 = vpop.f32.mrf.mxu0
  %v319 = vadd.f32 %v99, %v318
  %v320 = vpop.f32.mrf.mxu0
  %321 = vmatprep.mubr.bf16.mxu0 0
  %322 = vmatmul.mubr.bf16.gmra.mxu0 %v212
  %v323 = vpop.f32.mrf.mxu0
  %v324 = vadd.f32 %v99, %v323
  %v325 = vpop.f32.mrf.mxu0
  %v326 = vpop.f32.mrf.mxu0
  %v327 = vadd.f32 %v99, %v326
  %v328 = vpop.f32.mrf.mxu0
  %329 = vmatprep.mubr.bf16.mxu0 0
  %330 = vmatmul.mubr.bf16.gmra.mxu0 %v215
  %v331 = vpop.f32.mrf.mxu0
  %v332 = vadd.f32 %v99, %v331
  %v333 = vpop.f32.mrf.mxu0
  %v334 = vpop.f32.mrf.mxu0
  %v335 = vadd.f32 %v99, %v334
  %v336 = vpop.f32.mrf.mxu0
  %337 = vmatprep.mubr.bf16.mxu0 0
  %338 = vmatmul.mubr.bf16.gmra.mxu0 %v218
  %v339 = vpop.f32.mrf.mxu0
  %v340 = vadd.f32 %v99, %v339
  %v341 = vpop.f32.mrf.mxu0
  %v342 = vpop.f32.mrf.mxu0
  %v343 = vadd.f32 %v99, %v342
  %v344 = vpop.f32.mrf.mxu0
  %345 = vmatprep.mubr.bf16.mxu0 0
  %346 = vmatmul.mubr.bf16.gmra.mxu0 %v221
  %v347 = vpop.f32.mrf.mxu0
  %v348 = vadd.f32 %v99, %v347
  %v349 = vpop.f32.mrf.mxu0
  %v350 = vpop.f32.mrf.mxu0
  %v351 = vadd.f32 %v99, %v350
  %v352 = vpop.f32.mrf.mxu0
  %353 = vmatprep.mubr.bf16.mxu0 0
  %354 = vmatmul.mubr.bf16.gmra.mxu0 %v224
  %v355 = vpop.f32.mrf.mxu0
  %v356 = vadd.f32 %v99, %v355
  %v357 = vpop.f32.mrf.mxu0
  %v358 = vpop.f32.mrf.mxu0
  %v359 = vadd.f32 %v99, %v358
  %v360 = vpop.f32.mrf.mxu0
  %361 = vmatprep.mubr.bf16.mxu0 0
  %362 = vmatmul.mubr.bf16.gmra.mxu0 %v227
  %v363 = vpop.f32.mrf.mxu0
  %v364 = vadd.f32 %v99, %v363
  %v365 = vpop.f32.mrf.mxu0
  %v366 = vpop.f32.mrf.mxu0
  %v367 = vadd.f32 %v99, %v366
  %v368 = vpop.f32.mrf.mxu0
  %369 = vmatprep.mubr.bf16.mxu0 0
  %370 = vmatmul.mubr.bf16.gmra.mxu0 %v230
  %v371 = vpop.f32.mrf.mxu0
  %v372 = vadd.f32 %v99, %v371
  %v373 = vpop.f32.mrf.mxu0
  %v374 = vpop.f32.mrf.mxu0
  %v375 = vadd.f32 %v99, %v374
  %v376 = vpop.f32.mrf.mxu0
  %377 = vmatprep.mubr.bf16.mxu0 0
  %378 = vmatmul.mubr.bf16.gmra.mxu0 %v233
  %v379 = vpop.f32.mrf.mxu0
  %v380 = vadd.f32 %v99, %v379
  %v381 = vpop.f32.mrf.mxu0
  %v382 = vpop.f32.mrf.mxu0
  %v383 = vadd.f32 %v99, %v382
  %v384 = vpop.f32.mrf.mxu0
  %385 = vmatprep.mubr.bf16.mxu0 0
  %386 = vmatmul.mubr.bf16.gmra.mxu0 %v236
  %v387 = vpop.f32.mrf.mxu0
  %v388 = vadd.f32 %v99, %v387
  %v389 = vpop.f32.mrf.mxu0
  %v390 = vpop.f32.mrf.mxu0
  %v391 = vadd.f32 %v99, %v390
  %v392 = vpop.f32.mrf.mxu0
  %393 = vmatprep.mubr.bf16.mxu0 0
  %394 = vmatmul.mubr.bf16.gmra.mxu0 %v239
  %v395 = vpop.f32.mrf.mxu0
  %v396 = vadd.f32 %v99, %v395
  %v397 = vpop.f32.mrf.mxu0
  %v398 = vpop.f32.mrf.mxu0
  %v399 = vadd.f32 %v99, %v398
  %v400 = vpop.f32.mrf.mxu0
  %401 = vdwg.mxu0
  %v402 = vadd.f32 %v27, %v276
  %v403 = vadd.f32 %v28, %v279
  %v404 = vadd.f32 %v29, %v284
  %v405 = vadd.f32 %v30, %v287
  %v406 = vadd.f32 %v31, %v292
  %v407 = vadd.f32 %v32, %v295
  %v408 = vadd.f32 %v33, %v300
  %v409 = vadd.f32 %v34, %v303
  %v410 = vadd.f32 %v35, %v308
  %v411 = vadd.f32 %v36, %v311
  %v412 = vadd.f32 %v37, %v316
  %v413 = vadd.f32 %v38, %v319
  %v414 = vadd.f32 %v39, %v324
  %v415 = vadd.f32 %v40, %v327
  %v416 = vadd.f32 %v41, %v332
  %v417 = vadd.f32 %v42, %v335
  %v418 = vadd.f32 %v43, %v340
  %v419 = vadd.f32 %v44, %v343
  %v420 = vadd.f32 %v45, %v348
  %v421 = vadd.f32 %v46, %v351
  %v422 = vadd.f32 %v47, %v356
  %v423 = vadd.f32 %v48, %v359
  %v424 = vadd.f32 %v49, %v364
  %v425 = vadd.f32 %v50, %v367
  %v426 = vadd.f32 %v51, %v372
  %v427 = vadd.f32 %v52, %v375
  %v428 = vadd.f32 %v53, %v380
  %v429 = vadd.f32 %v54, %v383
  %v430 = vadd.f32 %v55, %v388
  %v431 = vadd.f32 %v56, %v391
  %v432 = vadd.f32 %v57, %v396
  %v433 = vadd.f32 %v58, %v399
  %v434 = vsel %vm192, %v402, 0.0
  %435 = vadd.xlane.f32.xlu0 %v434
  %v436 = vpop.xlane.xlu0 %435
  %v437 = vsel %vm192, %v403, 0.0
  %438 = vadd.xlane.f32.xlu0 %v437
  %v439 = vpop.xlane.xlu0 %438
  %v440 = vsel %vm192, %v404, 0.0
  %441 = vadd.xlane.f32.xlu0 %v440
  %v442 = vpop.xlane.xlu0 %441
  %v443 = vsel %vm192, %v405, 0.0
  %444 = vadd.xlane.f32.xlu0 %v443
  %v445 = vpop.xlane.xlu0 %444
  %v446 = vsel %vm192, %v406, 0.0
  %447 = vadd.xlane.f32.xlu0 %v446
  %v448 = vpop.xlane.xlu0 %447
  %v449 = vsel %vm192, %v407, 0.0
  %450 = vadd.xlane.f32.xlu0 %v449
  %v451 = vpop.xlane.xlu0 %450
  %v452 = vsel %vm192, %v408, 0.0
  %453 = vadd.xlane.f32.xlu0 %v452
  %v454 = vpop.xlane.xlu0 %453
  %v455 = vsel %vm192, %v409, 0.0
  %456 = vadd.xlane.f32.xlu0 %v455
  %v457 = vpop.xlane.xlu0 %456
  %v458 = vsel %vm192, %v410, 0.0
  %459 = vadd.xlane.f32.xlu0 %v458
  %v460 = vpop.xlane.xlu0 %459
  %v461 = vsel %vm192, %v411, 0.0
  %462 = vadd.xlane.f32.xlu0 %v461
  %v463 = vpop.xlane.xlu0 %462
  %v464 = vsel %vm192, %v412, 0.0
  %465 = vadd.xlane.f32.xlu0 %v464
  %v466 = vpop.xlane.xlu0 %465
  %v467 = vsel %vm192, %v413, 0.0
  %468 = vadd.xlane.f32.xlu0 %v467
  %v469 = vpop.xlane.xlu0 %468
  %v470 = vsel %vm192, %v414, 0.0
  %471 = vadd.xlane.f32.xlu0 %v470
  %v472 = vpop.xlane.xlu0 %471
  %v473 = vsel %vm192, %v415, 0.0
  %474 = vadd.xlane.f32.xlu0 %v473
  %v475 = vpop.xlane.xlu0 %474
  %v476 = vsel %vm192, %v416, 0.0
  %477 = vadd.xlane.f32.xlu0 %v476
  %v478 = vpop.xlane.xlu0 %477
  %v479 = vsel %vm192, %v417, 0.0
  %480 = vadd.xlane.f32.xlu0 %v479
  %v481 = vpop.xlane.xlu0 %480
  %v482 = vsel %vm192, %v418, 0.0
  %483 = vadd.xlane.f32.xlu0 %v482
  %v484 = vpop.xlane.xlu0 %483
  %v485 = vsel %vm192, %v419, 0.0
  %486 = vadd.xlane.f32.xlu0 %v485
  %v487 = vpop.xlane.xlu0 %486
  %v488 = vsel %vm192, %v420, 0.0
  %489 = vadd.xlane.f32.xlu0 %v488
  %v490 = vpop.xlane.xlu0 %489
  %v491 = vsel %vm192, %v421, 0.0
  %492 = vadd.xlane.f32.xlu0 %v491
  %v493 = vpop.xlane.xlu0 %492
  %v494 = vsel %vm192, %v422, 0.0
  %495 = vadd.xlane.f32.xlu0 %v494
  %v496 = vpop.xlane.xlu0 %495
  %v497 = vsel %vm192, %v423, 0.0
  %498 = vadd.xlane.f32.xlu0 %v497
  %v499 = vpop.xlane.xlu0 %498
  %v500 = vsel %vm192, %v424, 0.0
  %501 = vadd.xlane.f32.xlu0 %v500
  %v502 = vpop.xlane.xlu0 %501
  %v503 = vsel %vm192, %v425, 0.0
  %504 = vadd.xlane.f32.xlu0 %v503
  %v505 = vpop.xlane.xlu0 %504
  %v506 = vsel %vm192, %v426, 0.0
  %507 = vadd.xlane.f32.xlu0 %v506
  %v508 = vpop.xlane.xlu0 %507
  %v509 = vsel %vm192, %v427, 0.0
  %510 = vadd.xlane.f32.xlu0 %v509
  %v511 = vpop.xlane.xlu0 %510
  %v512 = vsel %vm192, %v428, 0.0
  %513 = vadd.xlane.f32.xlu0 %v512
  %v514 = vpop.xlane.xlu0 %513
  %v515 = vsel %vm192, %v429, 0.0
  %516 = vadd.xlane.f32.xlu0 %v515
  %v517 = vpop.xlane.xlu0 %516
  %v518 = vsel %vm192, %v430, 0.0
  %519 = vadd.xlane.f32.xlu0 %v518
  %v520 = vpop.xlane.xlu0 %519
  %v521 = vsel %vm192, %v431, 0.0
  %522 = vadd.xlane.f32.xlu0 %v521
  %v523 = vpop.xlane.xlu0 %522
  %v524 = vsel %vm192, %v432, 0.0
  %525 = vadd.xlane.f32.xlu0 %v524
  %v526 = vpop.xlane.xlu0 %525
  %v527 = vsel %vm192, %v433, 0.0
  %528 = vadd.xlane.f32.xlu0 %v527
  %v529 = vpop.xlane.xlu0 %528
  %v530 = vrcp.pop 32.0
  %v531 = vmul.f32 %v436, %v530
  %v532 = vmul.f32 %v439, %v530
  %v533 = vmul.f32 %v442, %v530
  %v534 = vmul.f32 %v445, %v530
  %v535 = vmul.f32 %v448, %v530
  %v536 = vmul.f32 %v451, %v530
  %v537 = vmul.f32 %v454, %v530
  %v538 = vmul.f32 %v457, %v530
  %v539 = vmul.f32 %v460, %v530
  %v540 = vmul.f32 %v463, %v530
  %v541 = vmul.f32 %v466, %v530
  %v542 = vmul.f32 %v469, %v530
  %v543 = vmul.f32 %v472, %v530
  %v544 = vmul.f32 %v475, %v530
  %v545 = vmul.f32 %v478, %v530
  %v546 = vmul.f32 %v481, %v530
  %v547 = vmul.f32 %v484, %v530
  %v548 = vmul.f32 %v487, %v530
  %v549 = vmul.f32 %v490, %v530
  %v550 = vmul.f32 %v493, %v530
  %v551 = vmul.f32 %v496, %v530
  %v552 = vmul.f32 %v499, %v530
  %v553 = vmul.f32 %v502, %v530
  %v554 = vmul.f32 %v505, %v530
  %v555 = vmul.f32 %v508, %v530
  %v556 = vmul.f32 %v511, %v530
  %v557 = vmul.f32 %v514, %v530
  %v558 = vmul.f32 %v517, %v530
  %v559 = vmul.f32 %v520, %v530
  %v560 = vmul.f32 %v523, %v530
  %v561 = vmul.f32 %v526, %v530
  %v562 = vmul.f32 %v529, %v530
  %v563 = vsub.f32 %v402, %v531
  %v564 = vsub.f32 %v403, %v532
  %v565 = vsub.f32 %v404, %v533
  %v566 = vsub.f32 %v405, %v534
  %v567 = vsub.f32 %v406, %v535
  %v568 = vsub.f32 %v407, %v536
  %v569 = vsub.f32 %v408, %v537
  %v570 = vsub.f32 %v409, %v538
  %v571 = vsub.f32 %v410, %v539
  %v572 = vsub.f32 %v411, %v540
  %v573 = vsub.f32 %v412, %v541
  %v574 = vsub.f32 %v413, %v542
  %v575 = vsub.f32 %v414, %v543
  %v576 = vsub.f32 %v415, %v544
  %v577 = vsub.f32 %v416, %v545
  %v578 = vsub.f32 %v417, %v546
  %v579 = vsub.f32 %v418, %v547
  %v580 = vsub.f32 %v419, %v548
  %v581 = vsub.f32 %v420, %v549
  %v582 = vsub.f32 %v421, %v550
  %v583 = vsub.f32 %v422, %v551
  %v584 = vsub.f32 %v423, %v552
  %v585 = vsub.f32 %v424, %v553
  %v586 = vsub.f32 %v425, %v554
  %v587 = vsub.f32 %v426, %v555
  %v588 = vsub.f32 %v427, %v556
  %v589 = vsub.f32 %v428, %v557
  %v590 = vsub.f32 %v429, %v558
  %v591 = vsub.f32 %v430, %v559
  %v592 = vsub.f32 %v431, %v560
  %v593 = vsub.f32 %v432, %v561
  %v594 = vsub.f32 %v433, %v562
  %v595 = vmul.f32 %v563, %v563
  %v596 = vmul.f32 %v564, %v564
  %v597 = vmul.f32 %v565, %v565
  %v598 = vmul.f32 %v566, %v566
  %v599 = vmul.f32 %v567, %v567
  %v600 = vmul.f32 %v568, %v568
  %v601 = vmul.f32 %v569, %v569
  %v602 = vmul.f32 %v570, %v570
  %v603 = vmul.f32 %v571, %v571
  %v604 = vmul.f32 %v572, %v572
  %v605 = vmul.f32 %v573, %v573
  %v606 = vmul.f32 %v574, %v574
  %v607 = vmul.f32 %v575, %v575
  %v608 = vmul.f32 %v576, %v576
  %v609 = vmul.f32 %v577, %v577
  %v610 = vmul.f32 %v578, %v578
  %v611 = vmul.f32 %v579, %v579
  %v612 = vmul.f32 %v580, %v580
  %v613 = vmul.f32 %v581, %v581
  %v614 = vmul.f32 %v582, %v582
  %v615 = vmul.f32 %v583, %v583
  %v616 = vmul.f32 %v584, %v584
  %v617 = vmul.f32 %v585, %v585
  %v618 = vmul.f32 %v586, %v586
  %v619 = vmul.f32 %v587, %v587
  %v620 = vmul.f32 %v588, %v588
  %v621 = vmul.f32 %v589, %v589
  %v622 = vmul.f32 %v590, %v590
  %v623 = vmul.f32 %v591, %v591
  %v624 = vmul.f32 %v592, %v592
  %v625 = vmul.f32 %v593, %v593
  %v626 = vmul.f32 %v594, %v594
  %v627 = vsel %vm192, %v595, 0.0
  %628 = vadd.xlane.f32.xlu0 %v627
  %v629 = vpop.xlane.xlu0 %628
  %v630 = vsel %vm192, %v596, 0.0
  %631 = vadd.xlane.f32.xlu0 %v630
  %v632 = vpop.xlane.xlu0 %631
  %v633 = vsel %vm192, %v597, 0.0
  %634 = vadd.xlane.f32.xlu0 %v633
  %v635 = vpop.xlane.xlu0 %634
  %v636 = vsel %vm192, %v598, 0.0
  %637 = vadd.xlane.f32.xlu0 %v636
  %v638 = vpop.xlane.xlu0 %637
  %v639 = vsel %vm192, %v599, 0.0
  %640 = vadd.xlane.f32.xlu0 %v639
  %v641 = vpop.xlane.xlu0 %640
  %v642 = vsel %vm192, %v600, 0.0
  %643 = vadd.xlane.f32.xlu0 %v642
  %v644 = vpop.xlane.xlu0 %643
  %v645 = vsel %vm192, %v601, 0.0
  %646 = vadd.xlane.f32.xlu0 %v645
  %v647 = vpop.xlane.xlu0 %646
  %v648 = vsel %vm192, %v602, 0.0
  %649 = vadd.xlane.f32.xlu0 %v648
  %v650 = vpop.xlane.xlu0 %649
  %v651 = vsel %vm192, %v603, 0.0
  %652 = vadd.xlane.f32.xlu0 %v651
  %v653 = vpop.xlane.xlu0 %652
  %v654 = vsel %vm192, %v604, 0.0
  %655 = vadd.xlane.f32.xlu0 %v654
  %v656 = vpop.xlane.xlu0 %655
  %v657 = vsel %vm192, %v605, 0.0
  %658 = vadd.xlane.f32.xlu0 %v657
  %v659 = vpop.xlane.xlu0 %658
  %v660 = vsel %vm192, %v606, 0.0
  %661 = vadd.xlane.f32.xlu0 %v660
  %v662 = vpop.xlane.xlu0 %661
  %v663 = vsel %vm192, %v607, 0.0
  %664 = vadd.xlane.f32.xlu0 %v663
  %v665 = vpop.xlane.xlu0 %664
  %v666 = vsel %vm192, %v608, 0.0
  %667 = vadd.xlane.f32.xlu0 %v666
  %v668 = vpop.xlane.xlu0 %667
  %v669 = vsel %vm192, %v609, 0.0
  %670 = vadd.xlane.f32.xlu0 %v669
  %v671 = vpop.xlane.xlu0 %670
  %v672 = vsel %vm192, %v610, 0.0
  %673 = vadd.xlane.f32.xlu0 %v672
  %v674 = vpop.xlane.xlu0 %673
  %v675 = vsel %vm192, %v611, 0.0
  %676 = vadd.xlane.f32.xlu0 %v675
  %v677 = vpop.xlane.xlu0 %676
  %v678 = vsel %vm192, %v612, 0.0
  %679 = vadd.xlane.f32.xlu0 %v678
  %v680 = vpop.xlane.xlu0 %679
  %v681 = vsel %vm192, %v613, 0.0
  %682 = vadd.xlane.f32.xlu0 %v681
  %v683 = vpop.xlane.xlu0 %682
  %v684 = vsel %vm192, %v614, 0.0
  %685 = vadd.xlane.f32.xlu0 %v684
  %v686 = vpop.xlane.xlu0 %685
  %v687 = vsel %vm192, %v615, 0.0
  %688 = vadd.xlane.f32.xlu0 %v687
  %v689 = vpop.xlane.xlu0 %688
  %v690 = vsel %vm192, %v616, 0.0
  %691 = vadd.xlane.f32.xlu0 %v690
  %v692 = vpop.xlane.xlu0 %691
  %v693 = vsel %vm192, %v617, 0.0
  %694 = vadd.xlane.f32.xlu0 %v693
  %v695 = vpop.xlane.xlu0 %694
  %v696 = vsel %vm192, %v618, 0.0
  %697 = vadd.xlane.f32.xlu0 %v696
  %v698 = vpop.xlane.xlu0 %697
  %v699 = vsel %vm192, %v619, 0.0
  %700 = vadd.xlane.f32.xlu0 %v699
  %v701 = vpop.xlane.xlu0 %700
  %v702 = vsel %vm192, %v620, 0.0
  %703 = vadd.xlane.f32.xlu0 %v702
  %v704 = vpop.xlane.xlu0 %703
  %v705 = vsel %vm192, %v621, 0.0
  %706 = vadd.xlane.f32.xlu0 %v705
  %v707 = vpop.xlane.xlu0 %706
  %v708 = vsel %vm192, %v622, 0.0
  %709 = vadd.xlane.f32.xlu0 %v708
  %v710 = vpop.xlane.xlu0 %709
  %v711 = vsel %vm192, %v623, 0.0
  %712 = vadd.xlane.f32.xlu0 %v711
  %v713 = vpop.xlane.xlu0 %712
  %v714 = vsel %vm192, %v624, 0.0
  %715 = vadd.xlane.f32.xlu0 %v714
  %v716 = vpop.xlane.xlu0 %715
  %v717 = vsel %vm192, %v625, 0.0
  %718 = vadd.xlane.f32.xlu0 %v717
  %v719 = vpop.xlane.xlu0 %718
  %v720 = vsel %vm192, %v626, 0.0
  %721 = vadd.xlane.f32.xlu0 %v720
  %v722 = vpop.xlane.xlu0 %721
  %v723 = vmul.f32 %v629, %v530
  %v724 = vmul.f32 %v632, %v530
  %v725 = vmul.f32 %v635, %v530
  %v726 = vmul.f32 %v638, %v530
  %v727 = vmul.f32 %v641, %v530
  %v728 = vmul.f32 %v644, %v530
  %v729 = vmul.f32 %v647, %v530
  %v730 = vmul.f32 %v650, %v530
  %v731 = vmul.f32 %v653, %v530
  %v732 = vmul.f32 %v656, %v530
  %v733 = vmul.f32 %v659, %v530
  %v734 = vmul.f32 %v662, %v530
  %v735 = vmul.f32 %v665, %v530
  %v736 = vmul.f32 %v668, %v530
  %v737 = vmul.f32 %v671, %v530
  %v738 = vmul.f32 %v674, %v530
  %v739 = vmul.f32 %v677, %v530
  %v740 = vmul.f32 %v680, %v530
  %v741 = vmul.f32 %v683, %v530
  %v742 = vmul.f32 %v686, %v530
  %v743 = vmul.f32 %v689, %v530
  %v744 = vmul.f32 %v692, %v530
  %v745 = vmul.f32 %v695, %v530
  %v746 = vmul.f32 %v698, %v530
  %v747 = vmul.f32 %v701, %v530
  %v748 = vmul.f32 %v704, %v530
  %v749 = vmul.f32 %v707, %v530
  %v750 = vmul.f32 %v710, %v530
  %v751 = vmul.f32 %v713, %v530
  %v752 = vmul.f32 %v716, %v530
  %v753 = vmul.f32 %v719, %v530
  %v754 = vmul.f32 %v722, %v530
  %v755 = vadd.f32 %v723, 1e-05
  %v756 = vadd.f32 %v724, 1e-05
  %v757 = vadd.f32 %v725, 1e-05
  %v758 = vadd.f32 %v726, 1e-05
  %v759 = vadd.f32 %v727, 1e-05
  %v760 = vadd.f32 %v728, 1e-05
  %v761 = vadd.f32 %v729, 1e-05
  %v762 = vadd.f32 %v730, 1e-05
  %v763 = vadd.f32 %v731, 1e-05
  %v764 = vadd.f32 %v732, 1e-05
  %v765 = vadd.f32 %v733, 1e-05
  %v766 = vadd.f32 %v734, 1e-05
  %v767 = vadd.f32 %v735, 1e-05
  %v768 = vadd.f32 %v736, 1e-05
  %v769 = vadd.f32 %v737, 1e-05
  %v770 = vadd.f32 %v738, 1e-05
  %v771 = vadd.f32 %v739, 1e-05
  %v772 = vadd.f32 %v740, 1e-05
  %v773 = vadd.f32 %v741, 1e-05
  %v774 = vadd.f32 %v742, 1e-05
  %v775 = vadd.f32 %v743, 1e-05
  %v776 = vadd.f32 %v744, 1e-05
  %v777 = vadd.f32 %v745, 1e-05
  %v778 = vadd.f32 %v746, 1e-05
  %v779 = vadd.f32 %v747, 1e-05
  %v780 = vadd.f32 %v748, 1e-05
  %v781 = vadd.f32 %v749, 1e-05
  %v782 = vadd.f32 %v750, 1e-05
  %v783 = vadd.f32 %v751, 1e-05
  %v784 = vadd.f32 %v752, 1e-05
  %v785 = vadd.f32 %v753, 1e-05
  %v786 = vadd.f32 %v754, 1e-05
  %v787 = vrsqrt.pop %v755
  %v788 = vrsqrt.pop %v756
  %v789 = vrsqrt.pop %v757
  %v790 = vrsqrt.pop %v758
  %v791 = vrsqrt.pop %v759
  %v792 = vrsqrt.pop %v760
  %v793 = vrsqrt.pop %v761
  %v794 = vrsqrt.pop %v762
  %v795 = vrsqrt.pop %v763
  %v796 = vrsqrt.pop %v764
  %v797 = vrsqrt.pop %v765
  %v798 = vrsqrt.pop %v766
  %v799 = vrsqrt.pop %v767
  %v800 = vrsqrt.pop %v768
  %v801 = vrsqrt.pop %v769
  %v802 = vrsqrt.pop %v770
  %v803 = vrsqrt.pop %v771
  %v804 = vrsqrt.pop %v772
  %v805 = vrsqrt.pop %v773
  %v806 = vrsqrt.pop %v774
  %v807 = vrsqrt.pop %v775
  %v808 = vrsqrt.pop %v776
  %v809 = vrsqrt.pop %v777
  %v810 = vrsqrt.pop %v778
  %v811 = vrsqrt.pop %v779
  %v812 = vrsqrt.pop %v780
  %v813 = vrsqrt.pop %v781
  %v814 = vrsqrt.pop %v782
  %v815 = vrsqrt.pop %v783
  %v816 = vrsqrt.pop %v784
  %v817 = vrsqrt.pop %v785
  %v818 = vrsqrt.pop %v786
  %v819 = vmul.f32 %v563, %v787
  %v820 = vmul.f32 %v564, %v788
  %v821 = vmul.f32 %v565, %v789
  %v822 = vmul.f32 %v566, %v790
  %v823 = vmul.f32 %v567, %v791
  %v824 = vmul.f32 %v568, %v792
  %v825 = vmul.f32 %v569, %v793
  %v826 = vmul.f32 %v570, %v794
  %v827 = vmul.f32 %v571, %v795
  %v828 = vmul.f32 %v572, %v796
  %v829 = vmul.f32 %v573, %v797
  %v830 = vmul.f32 %v574, %v798
  %v831 = vmul.f32 %v575, %v799
  %v832 = vmul.f32 %v576, %v800
  %v833 = vmul.f32 %v577, %v801
  %v834 = vmul.f32 %v578, %v802
  %v835 = vmul.f32 %v579, %v803
  %v836 = vmul.f32 %v580, %v804
  %v837 = vmul.f32 %v581, %v805
  %v838 = vmul.f32 %v582, %v806
  %v839 = vmul.f32 %v583, %v807
  %v840 = vmul.f32 %v584, %v808
  %v841 = vmul.f32 %v585, %v809
  %v842 = vmul.f32 %v586, %v810
  %v843 = vmul.f32 %v587, %v811
  %v844 = vmul.f32 %v588, %v812
  %v845 = vmul.f32 %v589, %v813
  %v846 = vmul.f32 %v590, %v814
  %v847 = vmul.f32 %v591, %v815
  %v848 = vmul.f32 %v592, %v816
  %v849 = vmul.f32 %v593, %v817
  %v850 = vmul.f32 %v594, %v818
  %v851 = vlaneseq
  %v852 = vshrl.u32 %v851, 7
  %v853 = vsub.s32 1, %v852
  %v854 = vrot.slane %v59, %v853
  %v855 = vmul.f32 %v819, %v854
  %v856 = vmul.f32 %v820, %v854
  %v857 = vmul.f32 %v821, %v854
  %v858 = vmul.f32 %v822, %v854
  %v859 = vmul.f32 %v823, %v854
  %v860 = vmul.f32 %v824, %v854
  %v861 = vmul.f32 %v825, %v854
  %v862 = vmul.f32 %v826, %v854
  %v863 = vmul.f32 %v827, %v854
  %v864 = vmul.f32 %v828, %v854
  %v865 = vmul.f32 %v829, %v854
  %v866 = vmul.f32 %v830, %v854
  %v867 = vmul.f32 %v831, %v854
  %v868 = vmul.f32 %v832, %v854
  %v869 = vmul.f32 %v833, %v854
  %v870 = vmul.f32 %v834, %v854
  %v871 = vmul.f32 %v835, %v854
  %v872 = vmul.f32 %v836, %v854
  %v873 = vmul.f32 %v837, %v854
  %v874 = vmul.f32 %v838, %v854
  %v875 = vmul.f32 %v839, %v854
  %v876 = vmul.f32 %v840, %v854
  %v877 = vmul.f32 %v841, %v854
  %v878 = vmul.f32 %v842, %v854
  %v879 = vmul.f32 %v843, %v854
  %v880 = vmul.f32 %v844, %v854
  %v881 = vmul.f32 %v845, %v854
  %v882 = vmul.f32 %v846, %v854
  %v883 = vmul.f32 %v847, %v854
  %v884 = vmul.f32 %v848, %v854
  %v885 = vmul.f32 %v849, %v854
  %v886 = vmul.f32 %v850, %v854
  %v887 = vlaneseq
  %v888 = vshrl.u32 %v887, 7
  %v889 = vsub.s32 2, %v888
  %v890 = vrot.slane %v59, %v889
  %v891 = vadd.f32 %v855, %v890
  %v892 = vadd.f32 %v856, %v890
  %v893 = vadd.f32 %v857, %v890
  %v894 = vadd.f32 %v858, %v890
  %v895 = vadd.f32 %v859, %v890
  %v896 = vadd.f32 %v860, %v890
  %v897 = vadd.f32 %v861, %v890
  %v898 = vadd.f32 %v862, %v890
  %v899 = vadd.f32 %v863, %v890
  %v900 = vadd.f32 %v864, %v890
  %v901 = vadd.f32 %v865, %v890
  %v902 = vadd.f32 %v866, %v890
  %v903 = vadd.f32 %v867, %v890
  %v904 = vadd.f32 %v868, %v890
  %v905 = vadd.f32 %v869, %v890
  %v906 = vadd.f32 %v870, %v890
  %v907 = vadd.f32 %v871, %v890
  %v908 = vadd.f32 %v872, %v890
  %v909 = vadd.f32 %v873, %v890
  %v910 = vadd.f32 %v874, %v890
  %v911 = vadd.f32 %v875, %v890
  %v912 = vadd.f32 %v876, %v890
  %v913 = vadd.f32 %v877, %v890
  %v914 = vadd.f32 %v878, %v890
  %v915 = vadd.f32 %v879, %v890
  %v916 = vadd.f32 %v880, %v890
  %v917 = vadd.f32 %v881, %v890
  %v918 = vadd.f32 %v882, %v890
  %v919 = vadd.f32 %v883, %v890
  %v920 = vadd.f32 %v884, %v890
  %v921 = vadd.f32 %v885, %v890
  %v922 = vadd.f32 %v886, %v890
  %v923 = vpack.c.bf16 %v892, %v891
  %v924 = vpack.c.bf16 %v894, %v893
  %v925 = vpack.c.bf16 %v896, %v895
  %v926 = vpack.c.bf16 %v898, %v897
  %v927 = vpack.c.bf16 %v900, %v899
  %v928 = vpack.c.bf16 %v902, %v901
  %v929 = vpack.c.bf16 %v904, %v903
  %v930 = vpack.c.bf16 %v906, %v905
  %v931 = vpack.c.bf16 %v908, %v907
  %v932 = vpack.c.bf16 %v910, %v909
  %v933 = vpack.c.bf16 %v912, %v911
  %v934 = vpack.c.bf16 %v914, %v913
  %v935 = vpack.c.bf16 %v916, %v915
  %v936 = vpack.c.bf16 %v918, %v917
  %v937 = vpack.c.bf16 %v920, %v919
  %v938 = vpack.c.bf16 %v922, %v921
  %v939 = vld [vmem:[%s3] sm:$0xf]
  %v940 = vld [vmem:[%s3 + $0x4] sm:$0xf]
  %v941 = vld [vmem:[%s3 + $0x8] sm:$0xf]
  %v942 = vld [vmem:[%s3 + $0xc] sm:$0xf]
  %v943 = vld [vmem:[%s6] sm:$0x1]
  %v945 = vlaneseq
  %v946 = vshrl.u32 %v945, 7
  %v947 = vsub.s32 0, %v946
  %v948 = vrot.slane %v943, %v947
  %v954 = vunpack.c.l.b16 %v939
  %v955 = vunpack.c.l.b16 %v940
  %v956 = vunpack.c.l.b16 %v941
  %v957 = vunpack.c.l.b16 %v942
  %v958 = vpack.c.b16 %v955, %v954
  %v959 = vpack.c.b16 %v957, %v956
  %v963 = vsel %vm192, %v923, 0
  %v966 = vsel %vm192, %v924, 0
  %v969 = vsel %vm192, %v925, 0
  %v972 = vsel %vm192, %v926, 0
  %v975 = vsel %vm192, %v927, 0
  %v978 = vsel %vm192, %v928, 0
  %v981 = vsel %vm192, %v929, 0
  %v984 = vsel %vm192, %v930, 0
  %v987 = vsel %vm192, %v931, 0
  %v990 = vsel %vm192, %v932, 0
  %v993 = vsel %vm192, %v933, 0
  %v996 = vsel %vm192, %v934, 0
  %v999 = vsel %vm192, %v935, 0
  %v1002 = vsel %vm192, %v936, 0
  %v1005 = vsel %vm192, %v937, 0
  %v1008 = vsel %vm192, %v938, 0
  %1010 = vmatprep.subr.bf16.mxu0 0
  %1011 = vmatpush1.bf16.msra.mxu0 0
  %1012 = vmatprep.subr.bf16.mxu0 0
  %1013 = vmatpush1.bf16.msra.mxu0 0
  %1014 = vmatprep.subr.bf16.mxu0 0
  %1015 = vmatpush1.bf16.msra.mxu0 0
  %1016 = vmatprep.subr.bf16.mxu0 0
  %1017 = vmatpush1.bf16.msra.mxu0 0
  %1018 = vmatprep.subr.bf16.mxu0 0
  %1019 = vmatpush1.bf16.msra.mxu0 0
  %1020 = vmatprep.subr.bf16.mxu0 0
  %1021 = vmatpush1.bf16.msra.mxu0 0
  %1022 = vmatprep.subr.bf16.mxu0 0
  %1023 = vmatpush1.bf16.msra.mxu0 %v959
  %1024 = vmatprep.subr.bf16.mxu0 0
  %1025 = vmatpush1.bf16.msra.mxu0 %v958
  %1026 = vmatprep.subr.bf16.mxu0 0
  %1027 = vmatpush2.bf16.msra.mxu0 0
  %1028 = vmatprep.subr.bf16.mxu0 0
  %1029 = vmatpush2.bf16.msra.mxu0 0
  %1030 = vmatprep.subr.bf16.mxu0 0
  %1031 = vmatpush2.bf16.msra.mxu0 0
  %1032 = vmatprep.subr.bf16.mxu0 0
  %1033 = vmatpush2.bf16.msra.mxu0 0
  %1034 = vmatprep.subr.bf16.mxu0 0
  %1035 = vmatpush2.bf16.msra.mxu0 0
  %1036 = vmatprep.subr.bf16.mxu0 0
  %1037 = vmatpush2.bf16.msra.mxu0 0
  %1038 = vmatprep.subr.bf16.mxu0 0
  %1039 = vmatpush2.bf16.msra.mxu0 0
  %1040 = vmatprep.subr.bf16.mxu0 0
  %1041 = vmatpush2.bf16.msra.mxu0 0
  %1042 = vmatprep.mubr.bf16.mxu0 0
  %1043 = vmatmul.mubr.bf16.gmra.mxu0 %v963
  %v1044 = vpop.f32.mrf.mxu0
  %v1045 = vadd.f32 %v948, %v1044
  %v1046 = vpop.f32.mrf.mxu0
  %v1047 = vpop.f32.mrf.mxu0
  %v1048 = vadd.f32 %v948, %v1047
  %v1049 = vpop.f32.mrf.mxu0
  %1050 = vmatprep.mubr.bf16.mxu0 0
  %1051 = vmatmul.mubr.bf16.gmra.mxu0 %v966
  %v1052 = vpop.f32.mrf.mxu0
  %v1053 = vadd.f32 %v948, %v1052
  %v1054 = vpop.f32.mrf.mxu0
  %v1055 = vpop.f32.mrf.mxu0
  %v1056 = vadd.f32 %v948, %v1055
  %v1057 = vpop.f32.mrf.mxu0
  %1058 = vmatprep.mubr.bf16.mxu0 0
  %1059 = vmatmul.mubr.bf16.gmra.mxu0 %v969
  %v1060 = vpop.f32.mrf.mxu0
  %v1061 = vadd.f32 %v948, %v1060
  %v1062 = vpop.f32.mrf.mxu0
  %v1063 = vpop.f32.mrf.mxu0
  %v1064 = vadd.f32 %v948, %v1063
  %v1065 = vpop.f32.mrf.mxu0
  %1066 = vmatprep.mubr.bf16.mxu0 0
  %1067 = vmatmul.mubr.bf16.gmra.mxu0 %v972
  %v1068 = vpop.f32.mrf.mxu0
  %v1069 = vadd.f32 %v948, %v1068
  %v1070 = vpop.f32.mrf.mxu0
  %v1071 = vpop.f32.mrf.mxu0
  %v1072 = vadd.f32 %v948, %v1071
  %v1073 = vpop.f32.mrf.mxu0
  %1074 = vmatprep.mubr.bf16.mxu0 0
  %1075 = vmatmul.mubr.bf16.gmra.mxu0 %v975
  %v1076 = vpop.f32.mrf.mxu0
  %v1077 = vadd.f32 %v948, %v1076
  %v1078 = vpop.f32.mrf.mxu0
  %v1079 = vpop.f32.mrf.mxu0
  %v1080 = vadd.f32 %v948, %v1079
  %v1081 = vpop.f32.mrf.mxu0
  %1082 = vmatprep.mubr.bf16.mxu0 0
  %1083 = vmatmul.mubr.bf16.gmra.mxu0 %v978
  %v1084 = vpop.f32.mrf.mxu0
  %v1085 = vadd.f32 %v948, %v1084
  %v1086 = vpop.f32.mrf.mxu0
  %v1087 = vpop.f32.mrf.mxu0
  %v1088 = vadd.f32 %v948, %v1087
  %v1089 = vpop.f32.mrf.mxu0
  %1090 = vmatprep.mubr.bf16.mxu0 0
  %1091 = vmatmul.mubr.bf16.gmra.mxu0 %v981
  %v1092 = vpop.f32.mrf.mxu0
  %v1093 = vadd.f32 %v948, %v1092
  %v1094 = vpop.f32.mrf.mxu0
  %v1095 = vpop.f32.mrf.mxu0
  %v1096 = vadd.f32 %v948, %v1095
  %v1097 = vpop.f32.mrf.mxu0
  %1098 = vmatprep.mubr.bf16.mxu0 0
  %1099 = vmatmul.mubr.bf16.gmra.mxu0 %v984
  %v1100 = vpop.f32.mrf.mxu0
  %v1101 = vadd.f32 %v948, %v1100
  %v1102 = vpop.f32.mrf.mxu0
  %v1103 = vpop.f32.mrf.mxu0
  %v1104 = vadd.f32 %v948, %v1103
  %v1105 = vpop.f32.mrf.mxu0
  %1106 = vmatprep.mubr.bf16.mxu0 0
  %1107 = vmatmul.mubr.bf16.gmra.mxu0 %v987
  %v1108 = vpop.f32.mrf.mxu0
  %v1109 = vadd.f32 %v948, %v1108
  %v1110 = vpop.f32.mrf.mxu0
  %v1111 = vpop.f32.mrf.mxu0
  %v1112 = vadd.f32 %v948, %v1111
  %v1113 = vpop.f32.mrf.mxu0
  %1114 = vmatprep.mubr.bf16.mxu0 0
  %1115 = vmatmul.mubr.bf16.gmra.mxu0 %v990
  %v1116 = vpop.f32.mrf.mxu0
  %v1117 = vadd.f32 %v948, %v1116
  %v1118 = vpop.f32.mrf.mxu0
  %v1119 = vpop.f32.mrf.mxu0
  %v1120 = vadd.f32 %v948, %v1119
  %v1121 = vpop.f32.mrf.mxu0
  %1122 = vmatprep.mubr.bf16.mxu0 0
  %1123 = vmatmul.mubr.bf16.gmra.mxu0 %v993
  %v1124 = vpop.f32.mrf.mxu0
  %v1125 = vadd.f32 %v948, %v1124
  %v1126 = vpop.f32.mrf.mxu0
  %v1127 = vpop.f32.mrf.mxu0
  %v1128 = vadd.f32 %v948, %v1127
  %v1129 = vpop.f32.mrf.mxu0
  %1130 = vmatprep.mubr.bf16.mxu0 0
  %1131 = vmatmul.mubr.bf16.gmra.mxu0 %v996
  %v1132 = vpop.f32.mrf.mxu0
  %v1133 = vadd.f32 %v948, %v1132
  %v1134 = vpop.f32.mrf.mxu0
  %v1135 = vpop.f32.mrf.mxu0
  %v1136 = vadd.f32 %v948, %v1135
  %v1137 = vpop.f32.mrf.mxu0
  %1138 = vmatprep.mubr.bf16.mxu0 0
  %1139 = vmatmul.mubr.bf16.gmra.mxu0 %v999
  %v1140 = vpop.f32.mrf.mxu0
  %v1141 = vadd.f32 %v948, %v1140
  %v1142 = vpop.f32.mrf.mxu0
  %v1143 = vpop.f32.mrf.mxu0
  %v1144 = vadd.f32 %v948, %v1143
  %v1145 = vpop.f32.mrf.mxu0
  %1146 = vmatprep.mubr.bf16.mxu0 0
  %1147 = vmatmul.mubr.bf16.gmra.mxu0 %v1002
  %v1148 = vpop.f32.mrf.mxu0
  %v1149 = vadd.f32 %v948, %v1148
  %v1150 = vpop.f32.mrf.mxu0
  %v1151 = vpop.f32.mrf.mxu0
  %v1152 = vadd.f32 %v948, %v1151
  %v1153 = vpop.f32.mrf.mxu0
  %1154 = vmatprep.mubr.bf16.mxu0 0
  %1155 = vmatmul.mubr.bf16.gmra.mxu0 %v1005
  %v1156 = vpop.f32.mrf.mxu0
  %v1157 = vadd.f32 %v948, %v1156
  %v1158 = vpop.f32.mrf.mxu0
  %v1159 = vpop.f32.mrf.mxu0
  %v1160 = vadd.f32 %v948, %v1159
  %v1161 = vpop.f32.mrf.mxu0
  %1162 = vmatprep.mubr.bf16.mxu0 0
  %1163 = vmatmul.mubr.bf16.gmra.mxu0 %v1008
  %v1164 = vpop.f32.mrf.mxu0
  %v1165 = vadd.f32 %v948, %v1164
  %v1166 = vpop.f32.mrf.mxu0
  %v1167 = vpop.f32.mrf.mxu0
  %v1168 = vadd.f32 %v948, %v1167
  %v1169 = vpop.f32.mrf.mxu0
  %1170 = vdwg.mxu0
  %v1171 = vmax.f32 %v1045, 0.0
  %v1172 = vmax.f32 %v1048, 0.0
  %v1173 = vmax.f32 %v1053, 0.0
  %v1174 = vmax.f32 %v1056, 0.0
  %v1175 = vmax.f32 %v1061, 0.0
  %v1176 = vmax.f32 %v1064, 0.0
  %v1177 = vmax.f32 %v1069, 0.0
  %v1178 = vmax.f32 %v1072, 0.0
  %v1179 = vmax.f32 %v1077, 0.0
  %v1180 = vmax.f32 %v1080, 0.0
  %v1181 = vmax.f32 %v1085, 0.0
  %v1182 = vmax.f32 %v1088, 0.0
  %v1183 = vmax.f32 %v1093, 0.0
  %v1184 = vmax.f32 %v1096, 0.0
  %v1185 = vmax.f32 %v1101, 0.0
  %v1186 = vmax.f32 %v1104, 0.0
  %v1187 = vmax.f32 %v1109, 0.0
  %v1188 = vmax.f32 %v1112, 0.0
  %v1189 = vmax.f32 %v1117, 0.0
  %v1190 = vmax.f32 %v1120, 0.0
  %v1191 = vmax.f32 %v1125, 0.0
  %v1192 = vmax.f32 %v1128, 0.0
  %v1193 = vmax.f32 %v1133, 0.0
  %v1194 = vmax.f32 %v1136, 0.0
  %v1195 = vmax.f32 %v1141, 0.0
  %v1196 = vmax.f32 %v1144, 0.0
  %v1197 = vmax.f32 %v1149, 0.0
  %v1198 = vmax.f32 %v1152, 0.0
  %v1199 = vmax.f32 %v1157, 0.0
  %v1200 = vmax.f32 %v1160, 0.0
  %v1201 = vmax.f32 %v1165, 0.0
  %v1202 = vmax.f32 %v1168, 0.0
  %v1203 = vpack.c.bf16 %v1172, %v1171
  %v1204 = vpack.c.bf16 %v1174, %v1173
  %v1205 = vpack.c.bf16 %v1176, %v1175
  %v1206 = vpack.c.bf16 %v1178, %v1177
  %v1207 = vpack.c.bf16 %v1180, %v1179
  %v1208 = vpack.c.bf16 %v1182, %v1181
  %v1209 = vpack.c.bf16 %v1184, %v1183
  %v1210 = vpack.c.bf16 %v1186, %v1185
  %v1211 = vpack.c.bf16 %v1188, %v1187
  %v1212 = vpack.c.bf16 %v1190, %v1189
  %v1213 = vpack.c.bf16 %v1192, %v1191
  %v1214 = vpack.c.bf16 %v1194, %v1193
  %v1215 = vpack.c.bf16 %v1196, %v1195
  %v1216 = vpack.c.bf16 %v1198, %v1197
  %v1217 = vpack.c.bf16 %v1200, %v1199
  %v1218 = vpack.c.bf16 %v1202, %v1201
  %v1219 = vld [vmem:[%s4] sm:$0xf]
  %v1220 = vld [vmem:[%s4 + $0x4] sm:$0xf]
  %v1221 = vld [vmem:[%s4 + $0x8] sm:$0xf]
  %v1222 = vld [vmem:[%s4 + $0xc] sm:$0xf]
  %v1223 = vld [vmem:[%s4 + $0x10] sm:$0xf]
  %v1224 = vld [vmem:[%s4 + $0x14] sm:$0xf]
  %v1225 = vld [vmem:[%s4 + $0x18] sm:$0xf]
  %v1226 = vld [vmem:[%s4 + $0x1c] sm:$0xf]
  %v1227 = vlaneseq
  %v1228 = vshrl.u32 %v1227, 7
  %v1229 = vsub.s32 3, %v1228
  %v1230 = vrot.slane %v59, %v1229
  %v1239 = vunpack.c.l.b16 %v1219
  %v1240 = vunpack.c.l.b16 %v1220
  %v1241 = vunpack.c.l.b16 %v1221
  %v1242 = vunpack.c.l.b16 %v1222
  %v1243 = vunpack.c.l.b16 %v1223
  %v1244 = vunpack.c.l.b16 %v1224
  %v1245 = vunpack.c.l.b16 %v1225
  %v1246 = vunpack.c.l.b16 %v1226
  %v1247 = vpack.c.b16 %v1240, %v1239
  %v1248 = vpack.c.b16 %v1242, %v1241
  %v1249 = vpack.c.b16 %v1244, %v1243
  %v1250 = vpack.c.b16 %v1246, %v1245
  %vm1255 = vcmask 523264
  %v1257 = vsel %vm1255, %v1203, 0
  %v1260 = vsel %vm1255, %v1204, 0
  %v1263 = vsel %vm1255, %v1205, 0
  %v1266 = vsel %vm1255, %v1206, 0
  %v1269 = vsel %vm1255, %v1207, 0
  %v1272 = vsel %vm1255, %v1208, 0
  %v1275 = vsel %vm1255, %v1209, 0
  %v1278 = vsel %vm1255, %v1210, 0
  %v1281 = vsel %vm1255, %v1211, 0
  %v1284 = vsel %vm1255, %v1212, 0
  %v1287 = vsel %vm1255, %v1213, 0
  %v1290 = vsel %vm1255, %v1214, 0
  %v1293 = vsel %vm1255, %v1215, 0
  %v1296 = vsel %vm1255, %v1216, 0
  %v1299 = vsel %vm1255, %v1217, 0
  %v1302 = vsel %vm1255, %v1218, 0
  %1304 = vmatprep.subr.bf16.mxu0 0
  %1305 = vmatpush1.bf16.msra.mxu0 0
  %1306 = vmatprep.subr.bf16.mxu0 0
  %1307 = vmatpush1.bf16.msra.mxu0 0
  %1308 = vmatprep.subr.bf16.mxu0 0
  %1309 = vmatpush1.bf16.msra.mxu0 0
  %1310 = vmatprep.subr.bf16.mxu0 0
  %1311 = vmatpush1.bf16.msra.mxu0 0
  %1312 = vmatprep.subr.bf16.mxu0 0
  %1313 = vmatpush1.bf16.msra.mxu0 %v1250
  %1314 = vmatprep.subr.bf16.mxu0 0
  %1315 = vmatpush1.bf16.msra.mxu0 %v1249
  %1316 = vmatprep.subr.bf16.mxu0 0
  %1317 = vmatpush1.bf16.msra.mxu0 %v1248
  %1318 = vmatprep.subr.bf16.mxu0 0
  %1319 = vmatpush1.bf16.msra.mxu0 %v1247
  %1320 = vmatprep.subr.bf16.mxu0 0
  %1321 = vmatpush2.bf16.msra.mxu0 0
  %1322 = vmatprep.subr.bf16.mxu0 0
  %1323 = vmatpush2.bf16.msra.mxu0 0
  %1324 = vmatprep.subr.bf16.mxu0 0
  %1325 = vmatpush2.bf16.msra.mxu0 0
  %1326 = vmatprep.subr.bf16.mxu0 0
  %1327 = vmatpush2.bf16.msra.mxu0 0
  %1328 = vmatprep.subr.bf16.mxu0 0
  %1329 = vmatpush2.bf16.msra.mxu0 0
  %1330 = vmatprep.subr.bf16.mxu0 0
  %1331 = vmatpush2.bf16.msra.mxu0 0
  %1332 = vmatprep.subr.bf16.mxu0 0
  %1333 = vmatpush2.bf16.msra.mxu0 0
  %1334 = vmatprep.subr.bf16.mxu0 0
  %1335 = vmatpush2.bf16.msra.mxu0 0
  %1336 = vmatprep.mubr.bf16.mxu0 0
  %1337 = vmatmul.mubr.bf16.gmra.mxu0 %v1257
  %v1338 = vpop.f32.mrf.mxu0
  %v1339 = vadd.f32 %v1230, %v1338
  %v1340 = vpop.f32.mrf.mxu0
  %v1341 = vpop.f32.mrf.mxu0
  %v1342 = vadd.f32 %v1230, %v1341
  %v1343 = vpop.f32.mrf.mxu0
  %1344 = vmatprep.mubr.bf16.mxu0 0
  %1345 = vmatmul.mubr.bf16.gmra.mxu0 %v1260
  %v1346 = vpop.f32.mrf.mxu0
  %v1347 = vadd.f32 %v1230, %v1346
  %v1348 = vpop.f32.mrf.mxu0
  %v1349 = vpop.f32.mrf.mxu0
  %v1350 = vadd.f32 %v1230, %v1349
  %v1351 = vpop.f32.mrf.mxu0
  %1352 = vmatprep.mubr.bf16.mxu0 0
  %1353 = vmatmul.mubr.bf16.gmra.mxu0 %v1263
  %v1354 = vpop.f32.mrf.mxu0
  %v1355 = vadd.f32 %v1230, %v1354
  %v1356 = vpop.f32.mrf.mxu0
  %v1357 = vpop.f32.mrf.mxu0
  %v1358 = vadd.f32 %v1230, %v1357
  %v1359 = vpop.f32.mrf.mxu0
  %1360 = vmatprep.mubr.bf16.mxu0 0
  %1361 = vmatmul.mubr.bf16.gmra.mxu0 %v1266
  %v1362 = vpop.f32.mrf.mxu0
  %v1363 = vadd.f32 %v1230, %v1362
  %v1364 = vpop.f32.mrf.mxu0
  %v1365 = vpop.f32.mrf.mxu0
  %v1366 = vadd.f32 %v1230, %v1365
  %v1367 = vpop.f32.mrf.mxu0
  %1368 = vmatprep.mubr.bf16.mxu0 0
  %1369 = vmatmul.mubr.bf16.gmra.mxu0 %v1269
  %v1370 = vpop.f32.mrf.mxu0
  %v1371 = vadd.f32 %v1230, %v1370
  %v1372 = vpop.f32.mrf.mxu0
  %v1373 = vpop.f32.mrf.mxu0
  %v1374 = vadd.f32 %v1230, %v1373
  %v1375 = vpop.f32.mrf.mxu0
  %1376 = vmatprep.mubr.bf16.mxu0 0
  %1377 = vmatmul.mubr.bf16.gmra.mxu0 %v1272
  %v1378 = vpop.f32.mrf.mxu0
  %v1379 = vadd.f32 %v1230, %v1378
  %v1380 = vpop.f32.mrf.mxu0
  %v1381 = vpop.f32.mrf.mxu0
  %v1382 = vadd.f32 %v1230, %v1381
  %v1383 = vpop.f32.mrf.mxu0
  %1384 = vmatprep.mubr.bf16.mxu0 0
  %1385 = vmatmul.mubr.bf16.gmra.mxu0 %v1275
  %v1386 = vpop.f32.mrf.mxu0
  %v1387 = vadd.f32 %v1230, %v1386
  %v1388 = vpop.f32.mrf.mxu0
  %v1389 = vpop.f32.mrf.mxu0
  %v1390 = vadd.f32 %v1230, %v1389
  %v1391 = vpop.f32.mrf.mxu0
  %1392 = vmatprep.mubr.bf16.mxu0 0
  %1393 = vmatmul.mubr.bf16.gmra.mxu0 %v1278
  %v1394 = vpop.f32.mrf.mxu0
  %v1395 = vadd.f32 %v1230, %v1394
  %v1396 = vpop.f32.mrf.mxu0
  %v1397 = vpop.f32.mrf.mxu0
  %v1398 = vadd.f32 %v1230, %v1397
  %v1399 = vpop.f32.mrf.mxu0
  %1400 = vmatprep.mubr.bf16.mxu0 0
  %1401 = vmatmul.mubr.bf16.gmra.mxu0 %v1281
  %v1402 = vpop.f32.mrf.mxu0
  %v1403 = vadd.f32 %v1230, %v1402
  %v1404 = vpop.f32.mrf.mxu0
  %v1405 = vpop.f32.mrf.mxu0
  %v1406 = vadd.f32 %v1230, %v1405
  %v1407 = vpop.f32.mrf.mxu0
  %1408 = vmatprep.mubr.bf16.mxu0 0
  %1409 = vmatmul.mubr.bf16.gmra.mxu0 %v1284
  %v1410 = vpop.f32.mrf.mxu0
  %v1411 = vadd.f32 %v1230, %v1410
  %v1412 = vpop.f32.mrf.mxu0
  %v1413 = vpop.f32.mrf.mxu0
  %v1414 = vadd.f32 %v1230, %v1413
  %v1415 = vpop.f32.mrf.mxu0
  %1416 = vmatprep.mubr.bf16.mxu0 0
  %1417 = vmatmul.mubr.bf16.gmra.mxu0 %v1287
  %v1418 = vpop.f32.mrf.mxu0
  %v1419 = vadd.f32 %v1230, %v1418
  %v1420 = vpop.f32.mrf.mxu0
  %v1421 = vpop.f32.mrf.mxu0
  %v1422 = vadd.f32 %v1230, %v1421
  %v1423 = vpop.f32.mrf.mxu0
  %1424 = vmatprep.mubr.bf16.mxu0 0
  %1425 = vmatmul.mubr.bf16.gmra.mxu0 %v1290
  %v1426 = vpop.f32.mrf.mxu0
  %v1427 = vadd.f32 %v1230, %v1426
  %v1428 = vpop.f32.mrf.mxu0
  %v1429 = vpop.f32.mrf.mxu0
  %v1430 = vadd.f32 %v1230, %v1429
  %v1431 = vpop.f32.mrf.mxu0
  %1432 = vmatprep.mubr.bf16.mxu0 0
  %1433 = vmatmul.mubr.bf16.gmra.mxu0 %v1293
  %v1434 = vpop.f32.mrf.mxu0
  %v1435 = vadd.f32 %v1230, %v1434
  %v1436 = vpop.f32.mrf.mxu0
  %v1437 = vpop.f32.mrf.mxu0
  %v1438 = vadd.f32 %v1230, %v1437
  %v1439 = vpop.f32.mrf.mxu0
  %1440 = vmatprep.mubr.bf16.mxu0 0
  %1441 = vmatmul.mubr.bf16.gmra.mxu0 %v1296
  %v1442 = vpop.f32.mrf.mxu0
  %v1443 = vadd.f32 %v1230, %v1442
  %v1444 = vpop.f32.mrf.mxu0
  %v1445 = vpop.f32.mrf.mxu0
  %v1446 = vadd.f32 %v1230, %v1445
  %v1447 = vpop.f32.mrf.mxu0
  %1448 = vmatprep.mubr.bf16.mxu0 0
  %1449 = vmatmul.mubr.bf16.gmra.mxu0 %v1299
  %v1450 = vpop.f32.mrf.mxu0
  %v1451 = vadd.f32 %v1230, %v1450
  %v1452 = vpop.f32.mrf.mxu0
  %v1453 = vpop.f32.mrf.mxu0
  %v1454 = vadd.f32 %v1230, %v1453
  %v1455 = vpop.f32.mrf.mxu0
  %1456 = vmatprep.mubr.bf16.mxu0 0
  %1457 = vmatmul.mubr.bf16.gmra.mxu0 %v1302
  %v1458 = vpop.f32.mrf.mxu0
  %v1459 = vadd.f32 %v1230, %v1458
  %v1460 = vpop.f32.mrf.mxu0
  %v1461 = vpop.f32.mrf.mxu0
  %v1462 = vadd.f32 %v1230, %v1461
  %v1463 = vpop.f32.mrf.mxu0
  %1464 = vdwg.mxu0
  %v1465 = vadd.f32 %v891, %v1339
  %v1466 = vadd.f32 %v892, %v1342
  %v1467 = vadd.f32 %v893, %v1347
  %v1468 = vadd.f32 %v894, %v1350
  %v1469 = vadd.f32 %v895, %v1355
  %v1470 = vadd.f32 %v896, %v1358
  %v1471 = vadd.f32 %v897, %v1363
  %v1472 = vadd.f32 %v898, %v1366
  %v1473 = vadd.f32 %v899, %v1371
  %v1474 = vadd.f32 %v900, %v1374
  %v1475 = vadd.f32 %v901, %v1379
  %v1476 = vadd.f32 %v902, %v1382
  %v1477 = vadd.f32 %v903, %v1387
  %v1478 = vadd.f32 %v904, %v1390
  %v1479 = vadd.f32 %v905, %v1395
  %v1480 = vadd.f32 %v906, %v1398
  %v1481 = vadd.f32 %v907, %v1403
  %v1482 = vadd.f32 %v908, %v1406
  %v1483 = vadd.f32 %v909, %v1411
  %v1484 = vadd.f32 %v910, %v1414
  %v1485 = vadd.f32 %v911, %v1419
  %v1486 = vadd.f32 %v912, %v1422
  %v1487 = vadd.f32 %v913, %v1427
  %v1488 = vadd.f32 %v914, %v1430
  %v1489 = vadd.f32 %v915, %v1435
  %v1490 = vadd.f32 %v916, %v1438
  %v1491 = vadd.f32 %v917, %v1443
  %v1492 = vadd.f32 %v918, %v1446
  %v1493 = vadd.f32 %v919, %v1451
  %v1494 = vadd.f32 %v920, %v1454
  %v1495 = vadd.f32 %v921, %v1459
  %v1496 = vadd.f32 %v922, %v1462
  %v1497 = vsel %vm192, %v1465, 0.0
  %1498 = vadd.xlane.f32.xlu0 %v1497
  %v1499 = vpop.xlane.xlu0 %1498
  %v1500 = vsel %vm192, %v1466, 0.0
  %1501 = vadd.xlane.f32.xlu0 %v1500
  %v1502 = vpop.xlane.xlu0 %1501
  %v1503 = vsel %vm192, %v1467, 0.0
  %1504 = vadd.xlane.f32.xlu0 %v1503
  %v1505 = vpop.xlane.xlu0 %1504
  %v1506 = vsel %vm192, %v1468, 0.0
  %1507 = vadd.xlane.f32.xlu0 %v1506
  %v1508 = vpop.xlane.xlu0 %1507
  %v1509 = vsel %vm192, %v1469, 0.0
  %1510 = vadd.xlane.f32.xlu0 %v1509
  %v1511 = vpop.xlane.xlu0 %1510
  %v1512 = vsel %vm192, %v1470, 0.0
  %1513 = vadd.xlane.f32.xlu0 %v1512
  %v1514 = vpop.xlane.xlu0 %1513
  %v1515 = vsel %vm192, %v1471, 0.0
  %1516 = vadd.xlane.f32.xlu0 %v1515
  %v1517 = vpop.xlane.xlu0 %1516
  %v1518 = vsel %vm192, %v1472, 0.0
  %1519 = vadd.xlane.f32.xlu0 %v1518
  %v1520 = vpop.xlane.xlu0 %1519
  %v1521 = vsel %vm192, %v1473, 0.0
  %1522 = vadd.xlane.f32.xlu0 %v1521
  %v1523 = vpop.xlane.xlu0 %1522
  %v1524 = vsel %vm192, %v1474, 0.0
  %1525 = vadd.xlane.f32.xlu0 %v1524
  %v1526 = vpop.xlane.xlu0 %1525
  %v1527 = vsel %vm192, %v1475, 0.0
  %1528 = vadd.xlane.f32.xlu0 %v1527
  %v1529 = vpop.xlane.xlu0 %1528
  %v1530 = vsel %vm192, %v1476, 0.0
  %1531 = vadd.xlane.f32.xlu0 %v1530
  %v1532 = vpop.xlane.xlu0 %1531
  %v1533 = vsel %vm192, %v1477, 0.0
  %1534 = vadd.xlane.f32.xlu0 %v1533
  %v1535 = vpop.xlane.xlu0 %1534
  %v1536 = vsel %vm192, %v1478, 0.0
  %1537 = vadd.xlane.f32.xlu0 %v1536
  %v1538 = vpop.xlane.xlu0 %1537
  %v1539 = vsel %vm192, %v1479, 0.0
  %1540 = vadd.xlane.f32.xlu0 %v1539
  %v1541 = vpop.xlane.xlu0 %1540
  %v1542 = vsel %vm192, %v1480, 0.0
  %1543 = vadd.xlane.f32.xlu0 %v1542
  %v1544 = vpop.xlane.xlu0 %1543
  %v1545 = vsel %vm192, %v1481, 0.0
  %1546 = vadd.xlane.f32.xlu0 %v1545
  %v1547 = vpop.xlane.xlu0 %1546
  %v1548 = vsel %vm192, %v1482, 0.0
  %1549 = vadd.xlane.f32.xlu0 %v1548
  %v1550 = vpop.xlane.xlu0 %1549
  %v1551 = vsel %vm192, %v1483, 0.0
  %1552 = vadd.xlane.f32.xlu0 %v1551
  %v1553 = vpop.xlane.xlu0 %1552
  %v1554 = vsel %vm192, %v1484, 0.0
  %1555 = vadd.xlane.f32.xlu0 %v1554
  %v1556 = vpop.xlane.xlu0 %1555
  %v1557 = vsel %vm192, %v1485, 0.0
  %1558 = vadd.xlane.f32.xlu0 %v1557
  %v1559 = vpop.xlane.xlu0 %1558
  %v1560 = vsel %vm192, %v1486, 0.0
  %1561 = vadd.xlane.f32.xlu0 %v1560
  %v1562 = vpop.xlane.xlu0 %1561
  %v1563 = vsel %vm192, %v1487, 0.0
  %1564 = vadd.xlane.f32.xlu0 %v1563
  %v1565 = vpop.xlane.xlu0 %1564
  %v1566 = vsel %vm192, %v1488, 0.0
  %1567 = vadd.xlane.f32.xlu0 %v1566
  %v1568 = vpop.xlane.xlu0 %1567
  %v1569 = vsel %vm192, %v1489, 0.0
  %1570 = vadd.xlane.f32.xlu0 %v1569
  %v1571 = vpop.xlane.xlu0 %1570
  %v1572 = vsel %vm192, %v1490, 0.0
  %1573 = vadd.xlane.f32.xlu0 %v1572
  %v1574 = vpop.xlane.xlu0 %1573
  %v1575 = vsel %vm192, %v1491, 0.0
  %1576 = vadd.xlane.f32.xlu0 %v1575
  %v1577 = vpop.xlane.xlu0 %1576
  %v1578 = vsel %vm192, %v1492, 0.0
  %1579 = vadd.xlane.f32.xlu0 %v1578
  %v1580 = vpop.xlane.xlu0 %1579
  %v1581 = vsel %vm192, %v1493, 0.0
  %1582 = vadd.xlane.f32.xlu0 %v1581
  %v1583 = vpop.xlane.xlu0 %1582
  %v1584 = vsel %vm192, %v1494, 0.0
  %1585 = vadd.xlane.f32.xlu0 %v1584
  %v1586 = vpop.xlane.xlu0 %1585
  %v1587 = vsel %vm192, %v1495, 0.0
  %1588 = vadd.xlane.f32.xlu0 %v1587
  %v1589 = vpop.xlane.xlu0 %1588
  %v1590 = vsel %vm192, %v1496, 0.0
  %1591 = vadd.xlane.f32.xlu0 %v1590
  %v1592 = vpop.xlane.xlu0 %1591
  %v1593 = vmul.f32 %v1499, %v530
  %v1594 = vmul.f32 %v1502, %v530
  %v1595 = vmul.f32 %v1505, %v530
  %v1596 = vmul.f32 %v1508, %v530
  %v1597 = vmul.f32 %v1511, %v530
  %v1598 = vmul.f32 %v1514, %v530
  %v1599 = vmul.f32 %v1517, %v530
  %v1600 = vmul.f32 %v1520, %v530
  %v1601 = vmul.f32 %v1523, %v530
  %v1602 = vmul.f32 %v1526, %v530
  %v1603 = vmul.f32 %v1529, %v530
  %v1604 = vmul.f32 %v1532, %v530
  %v1605 = vmul.f32 %v1535, %v530
  %v1606 = vmul.f32 %v1538, %v530
  %v1607 = vmul.f32 %v1541, %v530
  %v1608 = vmul.f32 %v1544, %v530
  %v1609 = vmul.f32 %v1547, %v530
  %v1610 = vmul.f32 %v1550, %v530
  %v1611 = vmul.f32 %v1553, %v530
  %v1612 = vmul.f32 %v1556, %v530
  %v1613 = vmul.f32 %v1559, %v530
  %v1614 = vmul.f32 %v1562, %v530
  %v1615 = vmul.f32 %v1565, %v530
  %v1616 = vmul.f32 %v1568, %v530
  %v1617 = vmul.f32 %v1571, %v530
  %v1618 = vmul.f32 %v1574, %v530
  %v1619 = vmul.f32 %v1577, %v530
  %v1620 = vmul.f32 %v1580, %v530
  %v1621 = vmul.f32 %v1583, %v530
  %v1622 = vmul.f32 %v1586, %v530
  %v1623 = vmul.f32 %v1589, %v530
  %v1624 = vmul.f32 %v1592, %v530
  %v1625 = vsub.f32 %v1465, %v1593
  %v1626 = vsub.f32 %v1466, %v1594
  %v1627 = vsub.f32 %v1467, %v1595
  %v1628 = vsub.f32 %v1468, %v1596
  %v1629 = vsub.f32 %v1469, %v1597
  %v1630 = vsub.f32 %v1470, %v1598
  %v1631 = vsub.f32 %v1471, %v1599
  %v1632 = vsub.f32 %v1472, %v1600
  %v1633 = vsub.f32 %v1473, %v1601
  %v1634 = vsub.f32 %v1474, %v1602
  %v1635 = vsub.f32 %v1475, %v1603
  %v1636 = vsub.f32 %v1476, %v1604
  %v1637 = vsub.f32 %v1477, %v1605
  %v1638 = vsub.f32 %v1478, %v1606
  %v1639 = vsub.f32 %v1479, %v1607
  %v1640 = vsub.f32 %v1480, %v1608
  %v1641 = vsub.f32 %v1481, %v1609
  %v1642 = vsub.f32 %v1482, %v1610
  %v1643 = vsub.f32 %v1483, %v1611
  %v1644 = vsub.f32 %v1484, %v1612
  %v1645 = vsub.f32 %v1485, %v1613
  %v1646 = vsub.f32 %v1486, %v1614
  %v1647 = vsub.f32 %v1487, %v1615
  %v1648 = vsub.f32 %v1488, %v1616
  %v1649 = vsub.f32 %v1489, %v1617
  %v1650 = vsub.f32 %v1490, %v1618
  %v1651 = vsub.f32 %v1491, %v1619
  %v1652 = vsub.f32 %v1492, %v1620
  %v1653 = vsub.f32 %v1493, %v1621
  %v1654 = vsub.f32 %v1494, %v1622
  %v1655 = vsub.f32 %v1495, %v1623
  %v1656 = vsub.f32 %v1496, %v1624
  %v1657 = vmul.f32 %v1625, %v1625
  %v1658 = vmul.f32 %v1626, %v1626
  %v1659 = vmul.f32 %v1627, %v1627
  %v1660 = vmul.f32 %v1628, %v1628
  %v1661 = vmul.f32 %v1629, %v1629
  %v1662 = vmul.f32 %v1630, %v1630
  %v1663 = vmul.f32 %v1631, %v1631
  %v1664 = vmul.f32 %v1632, %v1632
  %v1665 = vmul.f32 %v1633, %v1633
  %v1666 = vmul.f32 %v1634, %v1634
  %v1667 = vmul.f32 %v1635, %v1635
  %v1668 = vmul.f32 %v1636, %v1636
  %v1669 = vmul.f32 %v1637, %v1637
  %v1670 = vmul.f32 %v1638, %v1638
  %v1671 = vmul.f32 %v1639, %v1639
  %v1672 = vmul.f32 %v1640, %v1640
  %v1673 = vmul.f32 %v1641, %v1641
  %v1674 = vmul.f32 %v1642, %v1642
  %v1675 = vmul.f32 %v1643, %v1643
  %v1676 = vmul.f32 %v1644, %v1644
  %v1677 = vmul.f32 %v1645, %v1645
  %v1678 = vmul.f32 %v1646, %v1646
  %v1679 = vmul.f32 %v1647, %v1647
  %v1680 = vmul.f32 %v1648, %v1648
  %v1681 = vmul.f32 %v1649, %v1649
  %v1682 = vmul.f32 %v1650, %v1650
  %v1683 = vmul.f32 %v1651, %v1651
  %v1684 = vmul.f32 %v1652, %v1652
  %v1685 = vmul.f32 %v1653, %v1653
  %v1686 = vmul.f32 %v1654, %v1654
  %v1687 = vmul.f32 %v1655, %v1655
  %v1688 = vmul.f32 %v1656, %v1656
  %v1689 = vsel %vm192, %v1657, 0.0
  %1690 = vadd.xlane.f32.xlu0 %v1689
  %v1691 = vpop.xlane.xlu0 %1690
  %v1692 = vsel %vm192, %v1658, 0.0
  %1693 = vadd.xlane.f32.xlu0 %v1692
  %v1694 = vpop.xlane.xlu0 %1693
  %v1695 = vsel %vm192, %v1659, 0.0
  %1696 = vadd.xlane.f32.xlu0 %v1695
  %v1697 = vpop.xlane.xlu0 %1696
  %v1698 = vsel %vm192, %v1660, 0.0
  %1699 = vadd.xlane.f32.xlu0 %v1698
  %v1700 = vpop.xlane.xlu0 %1699
  %v1701 = vsel %vm192, %v1661, 0.0
  %1702 = vadd.xlane.f32.xlu0 %v1701
  %v1703 = vpop.xlane.xlu0 %1702
  %v1704 = vsel %vm192, %v1662, 0.0
  %1705 = vadd.xlane.f32.xlu0 %v1704
  %v1706 = vpop.xlane.xlu0 %1705
  %v1707 = vsel %vm192, %v1663, 0.0
  %1708 = vadd.xlane.f32.xlu0 %v1707
  %v1709 = vpop.xlane.xlu0 %1708
  %v1710 = vsel %vm192, %v1664, 0.0
  %1711 = vadd.xlane.f32.xlu0 %v1710
  %v1712 = vpop.xlane.xlu0 %1711
  %v1713 = vsel %vm192, %v1665, 0.0
  %1714 = vadd.xlane.f32.xlu0 %v1713
  %v1715 = vpop.xlane.xlu0 %1714
  %v1716 = vsel %vm192, %v1666, 0.0
  %1717 = vadd.xlane.f32.xlu0 %v1716
  %v1718 = vpop.xlane.xlu0 %1717
  %v1719 = vsel %vm192, %v1667, 0.0
  %1720 = vadd.xlane.f32.xlu0 %v1719
  %v1721 = vpop.xlane.xlu0 %1720
  %v1722 = vsel %vm192, %v1668, 0.0
  %1723 = vadd.xlane.f32.xlu0 %v1722
  %v1724 = vpop.xlane.xlu0 %1723
  %v1725 = vsel %vm192, %v1669, 0.0
  %1726 = vadd.xlane.f32.xlu0 %v1725
  %v1727 = vpop.xlane.xlu0 %1726
  %v1728 = vsel %vm192, %v1670, 0.0
  %1729 = vadd.xlane.f32.xlu0 %v1728
  %v1730 = vpop.xlane.xlu0 %1729
  %v1731 = vsel %vm192, %v1671, 0.0
  %1732 = vadd.xlane.f32.xlu0 %v1731
  %v1733 = vpop.xlane.xlu0 %1732
  %v1734 = vsel %vm192, %v1672, 0.0
  %1735 = vadd.xlane.f32.xlu0 %v1734
  %v1736 = vpop.xlane.xlu0 %1735
  %v1737 = vsel %vm192, %v1673, 0.0
  %1738 = vadd.xlane.f32.xlu0 %v1737
  %v1739 = vpop.xlane.xlu0 %1738
  %v1740 = vsel %vm192, %v1674, 0.0
  %1741 = vadd.xlane.f32.xlu0 %v1740
  %v1742 = vpop.xlane.xlu0 %1741
  %v1743 = vsel %vm192, %v1675, 0.0
  %1744 = vadd.xlane.f32.xlu0 %v1743
  %v1745 = vpop.xlane.xlu0 %1744
  %v1746 = vsel %vm192, %v1676, 0.0
  %1747 = vadd.xlane.f32.xlu0 %v1746
  %v1748 = vpop.xlane.xlu0 %1747
  %v1749 = vsel %vm192, %v1677, 0.0
  %1750 = vadd.xlane.f32.xlu0 %v1749
  %v1751 = vpop.xlane.xlu0 %1750
  %v1752 = vsel %vm192, %v1678, 0.0
  %1753 = vadd.xlane.f32.xlu0 %v1752
  %v1754 = vpop.xlane.xlu0 %1753
  %v1755 = vsel %vm192, %v1679, 0.0
  %1756 = vadd.xlane.f32.xlu0 %v1755
  %v1757 = vpop.xlane.xlu0 %1756
  %v1758 = vsel %vm192, %v1680, 0.0
  %1759 = vadd.xlane.f32.xlu0 %v1758
  %v1760 = vpop.xlane.xlu0 %1759
  %v1761 = vsel %vm192, %v1681, 0.0
  %1762 = vadd.xlane.f32.xlu0 %v1761
  %v1763 = vpop.xlane.xlu0 %1762
  %v1764 = vsel %vm192, %v1682, 0.0
  %1765 = vadd.xlane.f32.xlu0 %v1764
  %v1766 = vpop.xlane.xlu0 %1765
  %v1767 = vsel %vm192, %v1683, 0.0
  %1768 = vadd.xlane.f32.xlu0 %v1767
  %v1769 = vpop.xlane.xlu0 %1768
  %v1770 = vsel %vm192, %v1684, 0.0
  %1771 = vadd.xlane.f32.xlu0 %v1770
  %v1772 = vpop.xlane.xlu0 %1771
  %v1773 = vsel %vm192, %v1685, 0.0
  %1774 = vadd.xlane.f32.xlu0 %v1773
  %v1775 = vpop.xlane.xlu0 %1774
  %v1776 = vsel %vm192, %v1686, 0.0
  %1777 = vadd.xlane.f32.xlu0 %v1776
  %v1778 = vpop.xlane.xlu0 %1777
  %v1779 = vsel %vm192, %v1687, 0.0
  %1780 = vadd.xlane.f32.xlu0 %v1779
  %v1781 = vpop.xlane.xlu0 %1780
  %v1782 = vsel %vm192, %v1688, 0.0
  %1783 = vadd.xlane.f32.xlu0 %v1782
  %v1784 = vpop.xlane.xlu0 %1783
  %v1785 = vmul.f32 %v1691, %v530
  %v1786 = vmul.f32 %v1694, %v530
  %v1787 = vmul.f32 %v1697, %v530
  %v1788 = vmul.f32 %v1700, %v530
  %v1789 = vmul.f32 %v1703, %v530
  %v1790 = vmul.f32 %v1706, %v530
  %v1791 = vmul.f32 %v1709, %v530
  %v1792 = vmul.f32 %v1712, %v530
  %v1793 = vmul.f32 %v1715, %v530
  %v1794 = vmul.f32 %v1718, %v530
  %v1795 = vmul.f32 %v1721, %v530
  %v1796 = vmul.f32 %v1724, %v530
  %v1797 = vmul.f32 %v1727, %v530
  %v1798 = vmul.f32 %v1730, %v530
  %v1799 = vmul.f32 %v1733, %v530
  %v1800 = vmul.f32 %v1736, %v530
  %v1801 = vmul.f32 %v1739, %v530
  %v1802 = vmul.f32 %v1742, %v530
  %v1803 = vmul.f32 %v1745, %v530
  %v1804 = vmul.f32 %v1748, %v530
  %v1805 = vmul.f32 %v1751, %v530
  %v1806 = vmul.f32 %v1754, %v530
  %v1807 = vmul.f32 %v1757, %v530
  %v1808 = vmul.f32 %v1760, %v530
  %v1809 = vmul.f32 %v1763, %v530
  %v1810 = vmul.f32 %v1766, %v530
  %v1811 = vmul.f32 %v1769, %v530
  %v1812 = vmul.f32 %v1772, %v530
  %v1813 = vmul.f32 %v1775, %v530
  %v1814 = vmul.f32 %v1778, %v530
  %v1815 = vmul.f32 %v1781, %v530
  %v1816 = vmul.f32 %v1784, %v530
  %v1817 = vadd.f32 %v1785, 1e-05
  %v1818 = vadd.f32 %v1786, 1e-05
  %v1819 = vadd.f32 %v1787, 1e-05
  %v1820 = vadd.f32 %v1788, 1e-05
  %v1821 = vadd.f32 %v1789, 1e-05
  %v1822 = vadd.f32 %v1790, 1e-05
  %v1823 = vadd.f32 %v1791, 1e-05
  %v1824 = vadd.f32 %v1792, 1e-05
  %v1825 = vadd.f32 %v1793, 1e-05
  %v1826 = vadd.f32 %v1794, 1e-05
  %v1827 = vadd.f32 %v1795, 1e-05
  %v1828 = vadd.f32 %v1796, 1e-05
  %v1829 = vadd.f32 %v1797, 1e-05
  %v1830 = vadd.f32 %v1798, 1e-05
  %v1831 = vadd.f32 %v1799, 1e-05
  %v1832 = vadd.f32 %v1800, 1e-05
  %v1833 = vadd.f32 %v1801, 1e-05
  %v1834 = vadd.f32 %v1802, 1e-05
  %v1835 = vadd.f32 %v1803, 1e-05
  %v1836 = vadd.f32 %v1804, 1e-05
  %v1837 = vadd.f32 %v1805, 1e-05
  %v1838 = vadd.f32 %v1806, 1e-05
  %v1839 = vadd.f32 %v1807, 1e-05
  %v1840 = vadd.f32 %v1808, 1e-05
  %v1841 = vadd.f32 %v1809, 1e-05
  %v1842 = vadd.f32 %v1810, 1e-05
  %v1843 = vadd.f32 %v1811, 1e-05
  %v1844 = vadd.f32 %v1812, 1e-05
  %v1845 = vadd.f32 %v1813, 1e-05
  %v1846 = vadd.f32 %v1814, 1e-05
  %v1847 = vadd.f32 %v1815, 1e-05
  %v1848 = vadd.f32 %v1816, 1e-05
  %v1849 = vrsqrt.pop %v1817
  %v1850 = vrsqrt.pop %v1818
  %v1851 = vrsqrt.pop %v1819
  %v1852 = vrsqrt.pop %v1820
  %v1853 = vrsqrt.pop %v1821
  %v1854 = vrsqrt.pop %v1822
  %v1855 = vrsqrt.pop %v1823
  %v1856 = vrsqrt.pop %v1824
  %v1857 = vrsqrt.pop %v1825
  %v1858 = vrsqrt.pop %v1826
  %v1859 = vrsqrt.pop %v1827
  %v1860 = vrsqrt.pop %v1828
  %v1861 = vrsqrt.pop %v1829
  %v1862 = vrsqrt.pop %v1830
  %v1863 = vrsqrt.pop %v1831
  %v1864 = vrsqrt.pop %v1832
  %v1865 = vrsqrt.pop %v1833
  %v1866 = vrsqrt.pop %v1834
  %v1867 = vrsqrt.pop %v1835
  %v1868 = vrsqrt.pop %v1836
  %v1869 = vrsqrt.pop %v1837
  %v1870 = vrsqrt.pop %v1838
  %v1871 = vrsqrt.pop %v1839
  %v1872 = vrsqrt.pop %v1840
  %v1873 = vrsqrt.pop %v1841
  %v1874 = vrsqrt.pop %v1842
  %v1875 = vrsqrt.pop %v1843
  %v1876 = vrsqrt.pop %v1844
  %v1877 = vrsqrt.pop %v1845
  %v1878 = vrsqrt.pop %v1846
  %v1879 = vrsqrt.pop %v1847
  %v1880 = vrsqrt.pop %v1848
  %v1881 = vmul.f32 %v1625, %v1849
  %v1882 = vmul.f32 %v1626, %v1850
  %v1883 = vmul.f32 %v1627, %v1851
  %v1884 = vmul.f32 %v1628, %v1852
  %v1885 = vmul.f32 %v1629, %v1853
  %v1886 = vmul.f32 %v1630, %v1854
  %v1887 = vmul.f32 %v1631, %v1855
  %v1888 = vmul.f32 %v1632, %v1856
  %v1889 = vmul.f32 %v1633, %v1857
  %v1890 = vmul.f32 %v1634, %v1858
  %v1891 = vmul.f32 %v1635, %v1859
  %v1892 = vmul.f32 %v1636, %v1860
  %v1893 = vmul.f32 %v1637, %v1861
  %v1894 = vmul.f32 %v1638, %v1862
  %v1895 = vmul.f32 %v1639, %v1863
  %v1896 = vmul.f32 %v1640, %v1864
  %v1897 = vmul.f32 %v1641, %v1865
  %v1898 = vmul.f32 %v1642, %v1866
  %v1899 = vmul.f32 %v1643, %v1867
  %v1900 = vmul.f32 %v1644, %v1868
  %v1901 = vmul.f32 %v1645, %v1869
  %v1902 = vmul.f32 %v1646, %v1870
  %v1903 = vmul.f32 %v1647, %v1871
  %v1904 = vmul.f32 %v1648, %v1872
  %v1905 = vmul.f32 %v1649, %v1873
  %v1906 = vmul.f32 %v1650, %v1874
  %v1907 = vmul.f32 %v1651, %v1875
  %v1908 = vmul.f32 %v1652, %v1876
  %v1909 = vmul.f32 %v1653, %v1877
  %v1910 = vmul.f32 %v1654, %v1878
  %v1911 = vmul.f32 %v1655, %v1879
  %v1912 = vmul.f32 %v1656, %v1880
  %v1913 = vlaneseq
  %v1914 = vshrl.u32 %v1913, 7
  %v1915 = vsub.s32 4, %v1914
  %v1916 = vrot.slane %v59, %v1915
  %v1917 = vmul.f32 %v1881, %v1916
  %v1918 = vmul.f32 %v1882, %v1916
  %v1919 = vmul.f32 %v1883, %v1916
  %v1920 = vmul.f32 %v1884, %v1916
  %v1921 = vmul.f32 %v1885, %v1916
  %v1922 = vmul.f32 %v1886, %v1916
  %v1923 = vmul.f32 %v1887, %v1916
  %v1924 = vmul.f32 %v1888, %v1916
  %v1925 = vmul.f32 %v1889, %v1916
  %v1926 = vmul.f32 %v1890, %v1916
  %v1927 = vmul.f32 %v1891, %v1916
  %v1928 = vmul.f32 %v1892, %v1916
  %v1929 = vmul.f32 %v1893, %v1916
  %v1930 = vmul.f32 %v1894, %v1916
  %v1931 = vmul.f32 %v1895, %v1916
  %v1932 = vmul.f32 %v1896, %v1916
  %v1933 = vmul.f32 %v1897, %v1916
  %v1934 = vmul.f32 %v1898, %v1916
  %v1935 = vmul.f32 %v1899, %v1916
  %v1936 = vmul.f32 %v1900, %v1916
  %v1937 = vmul.f32 %v1901, %v1916
  %v1938 = vmul.f32 %v1902, %v1916
  %v1939 = vmul.f32 %v1903, %v1916
  %v1940 = vmul.f32 %v1904, %v1916
  %v1941 = vmul.f32 %v1905, %v1916
  %v1942 = vmul.f32 %v1906, %v1916
  %v1943 = vmul.f32 %v1907, %v1916
  %v1944 = vmul.f32 %v1908, %v1916
  %v1945 = vmul.f32 %v1909, %v1916
  %v1946 = vmul.f32 %v1910, %v1916
  %v1947 = vmul.f32 %v1911, %v1916
  %v1948 = vmul.f32 %v1912, %v1916
  %v1949 = vlaneseq
  %v1950 = vshrl.u32 %v1949, 7
  %v1951 = vsub.s32 5, %v1950
  %v1952 = vrot.slane %v59, %v1951
  %v1953 = vadd.f32 %v1917, %v1952
  %v1954 = vadd.f32 %v1918, %v1952
  %v1955 = vadd.f32 %v1919, %v1952
  %v1956 = vadd.f32 %v1920, %v1952
  %v1957 = vadd.f32 %v1921, %v1952
  %v1958 = vadd.f32 %v1922, %v1952
  %v1959 = vadd.f32 %v1923, %v1952
  %v1960 = vadd.f32 %v1924, %v1952
  %v1961 = vadd.f32 %v1925, %v1952
  %v1962 = vadd.f32 %v1926, %v1952
  %v1963 = vadd.f32 %v1927, %v1952
  %v1964 = vadd.f32 %v1928, %v1952
  %v1965 = vadd.f32 %v1929, %v1952
  %v1966 = vadd.f32 %v1930, %v1952
  %v1967 = vadd.f32 %v1931, %v1952
  %v1968 = vadd.f32 %v1932, %v1952
  %v1969 = vadd.f32 %v1933, %v1952
  %v1970 = vadd.f32 %v1934, %v1952
  %v1971 = vadd.f32 %v1935, %v1952
  %v1972 = vadd.f32 %v1936, %v1952
  %v1973 = vadd.f32 %v1937, %v1952
  %v1974 = vadd.f32 %v1938, %v1952
  %v1975 = vadd.f32 %v1939, %v1952
  %v1976 = vadd.f32 %v1940, %v1952
  %v1977 = vadd.f32 %v1941, %v1952
  %v1978 = vadd.f32 %v1942, %v1952
  %v1979 = vadd.f32 %v1943, %v1952
  %v1980 = vadd.f32 %v1944, %v1952
  %v1981 = vadd.f32 %v1945, %v1952
  %v1982 = vadd.f32 %v1946, %v1952
  %v1983 = vadd.f32 %v1947, %v1952
  %v1984 = vadd.f32 %v1948, %v1952
  %1985 = vst.msk [vmem:[%s7] sm:$0xff] %vm192, %v1953
  %1986 = vst.msk [vmem:[%s7 + $0x8] sm:$0xff] %vm192, %v1954
  %1987 = vst.msk [vmem:[%s7 + $0x10] sm:$0xff] %vm192, %v1955
  %1988 = vst.msk [vmem:[%s7 + $0x18] sm:$0xff] %vm192, %v1956
  %1989 = vst.msk [vmem:[%s7 + $0x20] sm:$0xff] %vm192, %v1957
  %1990 = vst.msk [vmem:[%s7 + $0x28] sm:$0xff] %vm192, %v1958
  %1991 = vst.msk [vmem:[%s7 + $0x30] sm:$0xff] %vm192, %v1959
  %1992 = vst.msk [vmem:[%s7 + $0x38] sm:$0xff] %vm192, %v1960
  %1993 = vst.msk [vmem:[%s7 + $0x40] sm:$0xff] %vm192, %v1961
  %1994 = vst.msk [vmem:[%s7 + $0x48] sm:$0xff] %vm192, %v1962
  %1995 = vst.msk [vmem:[%s7 + $0x50] sm:$0xff] %vm192, %v1963
  %1996 = vst.msk [vmem:[%s7 + $0x58] sm:$0xff] %vm192, %v1964
  %1997 = vst.msk [vmem:[%s7 + $0x60] sm:$0xff] %vm192, %v1965
  %1998 = vst.msk [vmem:[%s7 + $0x68] sm:$0xff] %vm192, %v1966
  %1999 = vst.msk [vmem:[%s7 + $0x70] sm:$0xff] %vm192, %v1967
  %2000 = vst.msk [vmem:[%s7 + $0x78] sm:$0xff] %vm192, %v1968
  %2001 = vst.msk [vmem:[%s7 + $0x80] sm:$0xff] %vm192, %v1969
  %2002 = vst.msk [vmem:[%s7 + $0x88] sm:$0xff] %vm192, %v1970
  %2003 = vst.msk [vmem:[%s7 + $0x90] sm:$0xff] %vm192, %v1971
  %2004 = vst.msk [vmem:[%s7 + $0x98] sm:$0xff] %vm192, %v1972
  %2005 = vst.msk [vmem:[%s7 + $0xa0] sm:$0xff] %vm192, %v1973
  %2006 = vst.msk [vmem:[%s7 + $0xa8] sm:$0xff] %vm192, %v1974
  %2007 = vst.msk [vmem:[%s7 + $0xb0] sm:$0xff] %vm192, %v1975
  %2008 = vst.msk [vmem:[%s7 + $0xb8] sm:$0xff] %vm192, %v1976
  %2009 = vst.msk [vmem:[%s7 + $0xc0] sm:$0xff] %vm192, %v1977
  %2010 = vst.msk [vmem:[%s7 + $0xc8] sm:$0xff] %vm192, %v1978
  %2011 = vst.msk [vmem:[%s7 + $0xd0] sm:$0xff] %vm192, %v1979
  %2012 = vst.msk [vmem:[%s7 + $0xd8] sm:$0xff] %vm192, %v1980
  %2013 = vst.msk [vmem:[%s7 + $0xe0] sm:$0xff] %vm192, %v1981
  %2014 = vst.msk [vmem:[%s7 + $0xe8] sm:$0xff] %vm192, %v1982
  %2015 = vst.msk [vmem:[%s7 + $0xf0] sm:$0xff] %vm192, %v1983
  %2016 = vst.msk [vmem:[%s7 + $0xf8] sm:$0xff] %vm192, %v1984
  // Predicated region
  $region30: #{encoder_forward.5} parent=0 // pred_check
    _
  $region31: #{encoder_forward.5} parent=0 // pred_check_branch
    %2018 = sbr.rel (0) target = $region33
  $region32: #{encoder_forward.5} parent=0 // pred_region
    _
  $region33: #{encoder_forward.5} parent=0 // pred_fallthru
    _
  // Predicated region
  $region34: #{encoder_forward.5} parent=0 // pred_check
    _
  $region35: #{encoder_forward.5} parent=0 // pred_check_branch
    %2020 = sbr.rel (0) target = $region37
  $region36: #{encoder_forward.5} parent=0 // pred_region
    _
  $region37: #{encoder_forward.5} parent=0 // pred_fallthru
    _

// kernel: encoder_forward.4
$region0: #{encoder_forward.4}
  #allocation0 [shape = 'u32[]', space=smem, size = 0x4, offset = 0x4, fixed_abs, tag = 'smem constant byte address 0x4 - core index']
  #allocation1 [shape = 'u32[144,128]{1,0:T(1,128)}', space=vmem, size = 0x12000, scoped, tag = 'internal scratch']
  %s0 = inlined_call_operand.vmem [shape: f32[2,128,32], index: 0, kind: input, shape index: {}]
  %s1 = inlined_call_operand.vmem [shape: bf16[32,96], index: 1, kind: input, shape index: {}]
  %s2 = inlined_call_operand.vmem [shape: f32[1,96], index: 2, kind: input, shape index: {}]
  %s3 = inlined_call_operand.vmem [shape: f32[2,1,128], index: 3, kind: input, shape index: {}]
  %s4 = inlined_call_operand.vmem [shape: bf16[2,128,32], index: 4, kind: output, shape index: {}]
  %s5 = sld [smem:[#allocation0]]
  $region49: #{encoder_forward.4} parent=0
    _
  %s7 = ssub.s32 1, %s5
  %s8 = scalar_select 0, %s7, %s5
  loop: start=0, step=1, limit=4
  $region2: #{encoder_forward.4} parent=0 // loop_pre_header
    _
  $region3: #{encoder_forward.4} parent=0 // loop_header
    %s10 = sphi 0, %s14
    %p11 = scmp.ge.s32.totalorder %s10, 4
    %s20 = sphi 0, %s22
    %s23 = sphi 0, %s20
    %s24 = sphi 0, %s23
    %s40 = sphi 0, %s24
    %s44 = sphi 0, %s44
    %s46 = sphi 0, %s44
    %s47 = sphi 0, %s46
    %s61 = sphi 0, %s47
    %s65 = sphi 0, %s65
    %s67 = sphi 0, %s65
    %s68 = sphi 0, %s67
    %s82 = sphi 0, %s68
    %s88 = sphi 0, %s90
    %s91 = sphi 0, %s88
    %s92 = sphi 0, %s91
    %s108 = sphi 0, %s92
    %s114 = sphi 0, %s116
    %s117 = sphi 0, %s114
    %s118 = sphi 0, %s117
    %s134 = sphi 0, %s118
  $region4: #{encoder_forward.4} parent=0 // loop_header_branch
    %13 = sbr.rel (%p11) target = $region8
  $region5: #{encoder_forward.4} parent=0 // loop_body
    %s15 = ssub.s32 %s10, 1
    %s16 = ssub.s32 %s10, 2
    %s17 = sadd.s32 %s10, 1
    %s18 = ssub.s32 %s10, %s17
    %p19 = scmp.eq.s32.totalorder %s18, 0
    %s21 = sadd.s32 %s20, 1
    %s22 = scalar_select %p19, %s20, %s21
    %p25 = pneg %p19
    %p26 = scmp.eq.s32.totalorder %s10, 1
    %p27 = por %p25, %p26
    %p28 = scmp.ne.s32.totalorder %s20, %s23
    %p29 = scmp.eq.s32.totalorder %s10, 0
    %p30 = por %p28, %p29
    %p31 = scmp.ne.s32.totalorder %s20, %s23
    %p32 = scmp.eq.s32.totalorder %s15, 1
    %p33 = por %p31, %p32
    %p34 = scmp.ne.s32.totalorder %s23, %s24
    %p35 = scmp.eq.s32.totalorder %s15, 0
    %p36 = por %p34, %p35
    %p37 = scmp.ne.s32.totalorder %s23, %s24
    %p38 = scmp.eq.s32.totalorder %s16, 1
    %p39 = por %p37, %p38
    %p41 = scmp.ne.s32.totalorder %s24, %s40
    %p42 = scmp.eq.s32.totalorder %s16, 0
    %p43 = por %p41, %p42
    %s45 = sadd.s32 %s44, 1
    %p48 = scmp.eq.s32.totalorder %s10, 1
    %p49 = scmp.ne.s32.totalorder %s44, %s46
    %p50 = scmp.eq.s32.totalorder %s10, 0
    %p51 = por %p49, %p50
    %p52 = scmp.ne.s32.totalorder %s44, %s46
    %p53 = scmp.eq.s32.totalorder %s15, 1
    %p54 = por %p52, %p53
    %p55 = scmp.ne.s32.totalorder %s46, %s47
    %p56 = scmp.eq.s32.totalorder %s15, 0
    %p57 = por %p55, %p56
    %p58 = scmp.ne.s32.totalorder %s46, %s47
    %p59 = scmp.eq.s32.totalorder %s16, 1
    %p60 = por %p58, %p59
    %p62 = scmp.ne.s32.totalorder %s47, %s61
    %p63 = scmp.eq.s32.totalorder %s16, 0
    %p64 = por %p62, %p63
    %s66 = sadd.s32 %s65, 1
    %p69 = scmp.eq.s32.totalorder %s10, 1
    %p70 = scmp.ne.s32.totalorder %s65, %s67
    %p71 = scmp.eq.s32.totalorder %s10, 0
    %p72 = por %p70, %p71
    %p73 = scmp.ne.s32.totalorder %s65, %s67
    %p74 = scmp.eq.s32.totalorder %s15, 1
    %p75 = por %p73, %p74
    %p76 = scmp.ne.s32.totalorder %s67, %s68
    %p77 = scmp.eq.s32.totalorder %s15, 0
    %p78 = por %p76, %p77
    %p79 = scmp.ne.s32.totalorder %s67, %s68
    %p80 = scmp.eq.s32.totalorder %s16, 1
    %p81 = por %p79, %p80
    %p83 = scmp.ne.s32.totalorder %s68, %s82
    %p84 = scmp.eq.s32.totalorder %s16, 0
    %p85 = por %p83, %p84
    %s86 = ssub.s32 %s10, %s17
    %p87 = scmp.eq.s32.totalorder %s86, 0
    %s89 = sadd.s32 %s88, 1
    %s90 = scalar_select %p87, %s88, %s89
    %p93 = pneg %p87
    %p94 = scmp.eq.s32.totalorder %s10, 1
    %p95 = por %p93, %p94
    %p96 = scmp.ne.s32.totalorder %s88, %s91
    %p97 = scmp.eq.s32.totalorder %s10, 0
    %p98 = por %p96, %p97
    %p99 = scmp.ne.s32.totalorder %s88, %s91
    %p100 = scmp.eq.s32.totalorder %s15, 1
    %p101 = por %p99, %p100
    %p102 = scmp.ne.s32.totalorder %s91, %s92
    %p103 = scmp.eq.s32.totalorder %s15, 0
    %p104 = por %p102, %p103
    %p105 = scmp.ne.s32.totalorder %s91, %s92
    %p106 = scmp.eq.s32.totalorder %s16, 1
    %p107 = por %p105, %p106
    %p109 = scmp.ne.s32.totalorder %s92, %s108
    %p110 = scmp.eq.s32.totalorder %s16, 0
    %p111 = por %p109, %p110
    %s112 = ssub.s32 %s10, %s17
    %p113 = scmp.eq.s32.totalorder %s112, 0
    %s115 = sadd.s32 %s114, 1
    %s116 = scalar_select %p113, %s114, %s115
    %p119 = pneg %p113
    %p120 = scmp.eq.s32.totalorder %s10, 1
    %p121 = por %p119, %p120
    %p122 = scmp.ne.s32.totalorder %s114, %s117
    %p123 = scmp.eq.s32.totalorder %s10, 0
    %p124 = por %p122, %p123
    %p125 = scmp.ne.s32.totalorder %s114, %s117
    %p126 = scmp.eq.s32.totalorder %s15, 1
    %p127 = por %p125, %p126
    %p128 = scmp.ne.s32.totalorder %s117, %s118
    %p129 = scmp.eq.s32.totalorder %s15, 0
    %p130 = por %p128, %p129
    %p131 = scmp.ne.s32.totalorder %s117, %s118
    %p132 = scmp.eq.s32.totalorder %s16, 1
    %p133 = por %p131, %p132
    %p135 = scmp.ne.s32.totalorder %s118, %s134
    %p136 = scmp.eq.s32.totalorder %s16, 0
    %p137 = por %p135, %p136
    %p138 = scmp.le.s32.totalorder 1, %s10
    %p139 = scmp.lt.s32.totalorder %s10, 3
    %p140 = pnand %p138, %p139
    %p141 = pneg %p140
    // Predicated region
    $region9: #{encoder_forward.4} parent=5 // pred_check
      _
    $region10: #{encoder_forward.4} parent=5 // pred_check_branch
      %143 = sbr.rel (%p140) target = $region12
    $region11: #{encoder_forward.4} parent=5 // pred_region
      %s144 = ssub.s32 %s10, 1
      // Predicated region
      $region13: #{encoder_forward.4} parent=11 // pred_check
        %p145 = pneg %p57
      $region14: #{encoder_forward.4} parent=11 // pred_check_branch
        %147 = sbr.rel (%p145) target = $region16
      $region15: #{encoder_forward.4} parent=11 // pred_region
        _
      $region16: #{encoder_forward.4} parent=11 // pred_fallthru
        _
      // Predicated region
      $region17: #{encoder_forward.4} parent=11 // pred_check
        %p148 = pneg %p78
      $region18: #{encoder_forward.4} parent=11 // pred_check_branch
        %150 = sbr.rel (%p148) target = $region20
      $region19: #{encoder_forward.4} parent=11 // pred_region
        _
      $region20: #{encoder_forward.4} parent=11 // pred_fallthru
        _
    $region12: #{encoder_forward.4} parent=5 // pred_fallthru
      _
    %p151 = scmp.lt.s32.totalorder %s10, 2
    // Predicated region
    $region21: #{encoder_forward.4} parent=5 // pred_check
      %p152 = pneg %p151
    $region22: #{encoder_forward.4} parent=5 // pred_check_branch
      %154 = sbr.rel (%p152) target = $region24
    $region23: #{encoder_forward.4} parent=5 // pred_region
      // Predicated region
      $region25: #{encoder_forward.4} parent=23 // pred_check
        %p155 = pneg %p30
      $region26: #{encoder_forward.4} parent=23 // pred_check_branch
        %157 = sbr.rel (%p155) target = $region28
      $region27: #{encoder_forward.4} parent=23 // pred_region
        %p158 = scmp.lt.s32.totalorder %s10, 1
        %s159 = scalar_select %p158, %s10, 1
        %s160 = smul.addr %s159, 16
        %s161 = smul.addr %s160, 8
        %s162 = scalar_lea.vmem %s0, %s161
      $region28: #{encoder_forward.4} parent=23 // pred_fallthru
        _
      // Predicated region
      $region29: #{encoder_forward.4} parent=23 // pred_check
        %p163 = pneg %p98
      $region30: #{encoder_forward.4} parent=23 // pred_check_branch
        %165 = sbr.rel (%p163) target = $region32
      $region31: #{encoder_forward.4} parent=23 // pred_region
        %p166 = scmp.lt.s32.totalorder %s10, 1
        %s167 = scalar_select %p166, %s10, 1
        %s168 = scalar_lea.vmem %s3, %s167
      $region32: #{encoder_forward.4} parent=23 // pred_fallthru
        _
    $region24: #{encoder_forward.4} parent=5 // pred_fallthru
      _
    %p169 = scmp.le.s32.totalorder 1, %s10
    %p170 = scmp.lt.s32.totalorder %s10, 3
    %p171 = pnand %p169, %p170
    %p172 = pneg %p171
    // Predicated region
    $region33: #{encoder_forward.4} parent=5 // pred_check
      _
    $region34: #{encoder_forward.4} parent=5 // pred_check_branch
      %174 = sbr.rel (%p171) target = $region36
    $region35: #{encoder_forward.4} parent=5 // pred_region
      %s175 = ssub.s32 %s10, 1
      %p176 = scmp.lt.s32.totalorder %s15, 1
      %s177 = scalar_select %p176, %s15, 1
      %s178 = smul.addr %s177, 16
      %s179 = smul.addr %s178, 8
      %s180 = scalar_lea.vmem %s0, %s179
      %p181 = pneg %p36
      %p182 = pneg %p33
      %p183 = pneg %p57
      %p184 = pneg %p54
      %p185 = pneg %p78
      %p186 = pneg %p75
      %p187 = scmp.lt.s32.totalorder %s15, 1
      %s188 = scalar_select %p187, %s15, 1
      %s189 = scalar_lea.vmem %s3, %s188
      %p190 = pneg %p104
      %p191 = pneg %p101
      %p192 = pneg %p130
      %p193 = pneg %p127
      %p194 = scmp.lt.s32.totalorder %s15, 1
      %s195 = scalar_select %p194, %s15, 1
      %s196 = smul.addr %s195, 16
      %s197 = smul.addr %s196, 4
      %s198 = scalar_lea.vmem %s4, %s197
      %p199 = scmp.lt.s32.totalorder %s15, 1
      %s200 = scalar_select %p199, %s15, 1
      %s201 = smul.addr %s200, 16
      %s202 = smul.addr %s201, 8
      %s203 = scalar_lea.vmem %s0, %s202
      %p204 = scmp.lt.s32.totalorder %s15, 1
      %s205 = scalar_select %p204, %s15, 1
      %s206 = scalar_lea.vmem %s3, %s205
      %p207 = scmp.lt.s32.totalorder %s15, 1
      %s208 = scalar_select %p207, %s15, 1
      %s209 = smul.addr %s208, 16
      %s210 = smul.addr %s209, 4
      %s211 = scalar_lea.vmem %s4, %s210
      %v213 = vld [vmem:[%s203] sm:$0xff]
      %v214 = vld [vmem:[%s203 + $0x8] sm:$0xff]
      %v215 = vld [vmem:[%s203 + $0x10] sm:$0xff]
      %v216 = vld [vmem:[%s203 + $0x18] sm:$0xff]
      %v217 = vld [vmem:[%s203 + $0x20] sm:$0xff]
      %v218 = vld [vmem:[%s203 + $0x28] sm:$0xff]
      %v219 = vld [vmem:[%s203 + $0x30] sm:$0xff]
      %v220 = vld [vmem:[%s203 + $0x38] sm:$0xff]
      %v221 = vld [vmem:[%s203 + $0x40] sm:$0xff]
      %v222 = vld [vmem:[%s203 + $0x48] sm:$0xff]
      %v223 = vld [vmem:[%s203 + $0x50] sm:$0xff]
      %v224 = vld [vmem:[%s203 + $0x58] sm:$0xff]
      %v225 = vld [vmem:[%s203 + $0x60] sm:$0xff]
      %v226 = vld [vmem:[%s203 + $0x68] sm:$0xff]
      %v227 = vld [vmem:[%s203 + $0x70] sm:$0xff]
      %v228 = vld [vmem:[%s203 + $0x78] sm:$0xff]
      %v229 = vpack.c.bf16 %v214, %v213
      %v230 = vpack.c.bf16 %v216, %v215
      %v231 = vpack.c.bf16 %v218, %v217
      %v232 = vpack.c.bf16 %v220, %v219
      %v233 = vpack.c.bf16 %v222, %v221
      %v234 = vpack.c.bf16 %v224, %v223
      %v235 = vpack.c.bf16 %v226, %v225
      %v236 = vpack.c.bf16 %v228, %v227
      %v237 = vld [vmem:[%s1] sm:$0xf]
      %v238 = vld [vmem:[%s1 + $0x4] sm:$0xf]
      %v239 = vld [vmem:[%s1 + $0x8] sm:$0xf]
      %v240 = vld [vmem:[%s1 + $0xc] sm:$0xf]
      %v241 = vld [vmem:[%s2] sm:$0x1]
      %v243 = vlaneseq
      %v244 = vshrl.u32 %v243, 7
      %v245 = vsub.s32 0, %v244
      %v246 = vrot.slane %v241, %v245
      %v252 = vunpack.c.l.b16 %v237
      %v253 = vunpack.c.l.b16 %v238
      %v254 = vunpack.c.l.b16 %v239
      %v255 = vunpack.c.l.b16 %v240
      %v256 = vpack.c.b16 %v253, %v252
      %v257 = vpack.c.b16 %v255, %v254
      %vm260 = vcmask 261120
      %v262 = vsel %vm260, %v229, 0
      %v265 = vsel %vm260, %v230, 0
      %v268 = vsel %vm260, %v231, 0
      %v271 = vsel %vm260, %v232, 0
      %v274 = vsel %vm260, %v233, 0
      %v277 = vsel %vm260, %v234, 0
      %v280 = vsel %vm260, %v235, 0
      %v283 = vsel %vm260, %v236, 0
      %285 = vmatprep.subr.bf16.mxu0 0
      %286 = vmatpush1.bf16.msra.mxu0 0
      %287 = vmatprep.subr.bf16.mxu0 0
      %288 = vmatpush1.bf16.msra.mxu0 0
      %289 = vmatprep.subr.bf16.mxu0 0
      %290 = vmatpush1.bf16.msra.mxu0 0
      %291 = vmatprep.subr.bf16.mxu0 0
      %292 = vmatpush1.bf16.msra.mxu0 0
      %293 = vmatprep.subr.bf16.mxu0 0
      %294 = vmatpush1.bf16.msra.mxu0 0
      %295 = vmatprep.subr.bf16.mxu0 0
      %296 = vmatpush1.bf16.msra.mxu0 0
      %297 = vmatprep.subr.bf16.mxu0 0
      %298 = vmatpush1.bf16.msra.mxu0 %v257
      %299 = vmatprep.subr.bf16.mxu0 0
      %300 = vmatpush1.bf16.msra.mxu0 %v256
      %301 = vmatprep.subr.bf16.mxu0 0
      %302 = vmatpush2.bf16.msra.mxu0 0
      %303 = vmatprep.subr.bf16.mxu0 0
      %304 = vmatpush2.bf16.msra.mxu0 0
      %305 = vmatprep.subr.bf16.mxu0 0
      %306 = vmatpush2.bf16.msra.mxu0 0
      %307 = vmatprep.subr.bf16.mxu0 0
      %308 = vmatpush2.bf16.msra.mxu0 0
      %309 = vmatprep.subr.bf16.mxu0 0
      %310 = vmatpush2.bf16.msra.mxu0 0
      %311 = vmatprep.subr.bf16.mxu0 0
      %312 = vmatpush2.bf16.msra.mxu0 0
      %313 = vmatprep.subr.bf16.mxu0 0
      %314 = vmatpush2.bf16.msra.mxu0 0
      %315 = vmatprep.subr.bf16.mxu0 0
      %316 = vmatpush2.bf16.msra.mxu0 0
      %317 = vmatprep.mubr.bf16.mxu0 0
      %318 = vmatmul.mubr.bf16.gmra.mxu0 %v262
      %v319 = vpop.f32.mrf.mxu0
      %v320 = vadd.f32 %v246, %v319
      %v321 = vpop.f32.mrf.mxu0
      %v322 = vpop.f32.mrf.mxu0
      %v323 = vadd.f32 %v246, %v322
      %v324 = vpop.f32.mrf.mxu0
      %325 = vmatprep.mubr.bf16.mxu0 0
      %326 = vmatmul.mubr.bf16.gmra.mxu0 %v265
      %v327 = vpop.f32.mrf.mxu0
      %v328 = vadd.f32 %v246, %v327
      %v329 = vpop.f32.mrf.mxu0
      %v330 = vpop.f32.mrf.mxu0
      %v331 = vadd.f32 %v246, %v330
      %v332 = vpop.f32.mrf.mxu0
      %333 = vmatprep.mubr.bf16.mxu0 0
      %334 = vmatmul.mubr.bf16.gmra.mxu0 %v268
      %v335 = vpop.f32.mrf.mxu0
      %v336 = vadd.f32 %v246, %v335
      %v337 = vpop.f32.mrf.mxu0
      %v338 = vpop.f32.mrf.mxu0
      %v339 = vadd.f32 %v246, %v338
      %v340 = vpop.f32.mrf.mxu0
      %341 = vmatprep.mubr.bf16.mxu0 0
      %342 = vmatmul.mubr.bf16.gmra.mxu0 %v271
      %v343 = vpop.f32.mrf.mxu0
      %v344 = vadd.f32 %v246, %v343
      %v345 = vpop.f32.mrf.mxu0
      %v346 = vpop.f32.mrf.mxu0
      %v347 = vadd.f32 %v246, %v346
      %v348 = vpop.f32.mrf.mxu0
      %349 = vmatprep.mubr.bf16.mxu0 0
      %350 = vmatmul.mubr.bf16.gmra.mxu0 %v274
      %v351 = vpop.f32.mrf.mxu0
      %v352 = vadd.f32 %v246, %v351
      %v353 = vpop.f32.mrf.mxu0
      %v354 = vpop.f32.mrf.mxu0
      %v355 = vadd.f32 %v246, %v354
      %v356 = vpop.f32.mrf.mxu0
      %357 = vmatprep.mubr.bf16.mxu0 0
      %358 = vmatmul.mubr.bf16.gmra.mxu0 %v277
      %v359 = vpop.f32.mrf.mxu0
      %v360 = vadd.f32 %v246, %v359
      %v361 = vpop.f32.mrf.mxu0
      %v362 = vpop.f32.mrf.mxu0
      %v363 = vadd.f32 %v246, %v362
      %v364 = vpop.f32.mrf.mxu0
      %365 = vmatprep.mubr.bf16.mxu0 0
      %366 = vmatmul.mubr.bf16.gmra.mxu0 %v280
      %v367 = vpop.f32.mrf.mxu0
      %v368 = vadd.f32 %v246, %v367
      %v369 = vpop.f32.mrf.mxu0
      %v370 = vpop.f32.mrf.mxu0
      %v371 = vadd.f32 %v246, %v370
      %v372 = vpop.f32.mrf.mxu0
      %373 = vmatprep.mubr.bf16.mxu0 0
      %374 = vmatmul.mubr.bf16.gmra.mxu0 %v283
      %v375 = vpop.f32.mrf.mxu0
      %v376 = vadd.f32 %v246, %v375
      %v377 = vpop.f32.mrf.mxu0
      %v378 = vpop.f32.mrf.mxu0
      %v379 = vadd.f32 %v246, %v378
      %v380 = vpop.f32.mrf.mxu0
      %381 = vdwg.mxu0
      %v382 = vld [vmem:[%s206] sm:$0x1]
      %v383 = vmul.f32 %v320, 0.35355338
      %v384 = vmul.f32 %v323, 0.35355338
      %v385 = vmul.f32 %v328, 0.35355338
      %v386 = vmul.f32 %v331, 0.35355338
      %v387 = vmul.f32 %v336, 0.35355338
      %v388 = vmul.f32 %v339, 0.35355338
      %v389 = vmul.f32 %v344, 0.35355338
      %v390 = vmul.f32 %v347, 0.35355338
      %v391 = vmul.f32 %v352, 0.35355338
      %v392 = vmul.f32 %v355, 0.35355338
      %v393 = vmul.f32 %v360, 0.35355338
      %v394 = vmul.f32 %v363, 0.35355338
      %v395 = vmul.f32 %v368, 0.35355338
      %v396 = vmul.f32 %v371, 0.35355338
      %v397 = vmul.f32 %v376, 0.35355338
      %v398 = vmul.f32 %v379, 0.35355338
      %v399 = vpack.c.bf16 %v384, %v383
      %v400 = vpack.c.bf16 %v386, %v385
      %v401 = vpack.c.bf16 %v388, %v387
      %v402 = vpack.c.bf16 %v390, %v389
      %v403 = vpack.c.bf16 %v392, %v391
      %v404 = vpack.c.bf16 %v394, %v393
      %v405 = vpack.c.bf16 %v396, %v395
      %v406 = vpack.c.bf16 %v398, %v397
      %v407 = vpack.c.bf16 %v323, %v320
      %v408 = vpack.c.bf16 %v331, %v328
      %v409 = vpack.c.bf16 %v339, %v336
      %v410 = vpack.c.bf16 %v347, %v344
      %v411 = vpack.c.bf16 %v355, %v352
      %v412 = vpack.c.bf16 %v363, %v360
      %v413 = vpack.c.bf16 %v371, %v368
      %v414 = vpack.c.bf16 %v379, %v376
      %v416 = vlaneseq
      %v417 = vshrl.u32 %v416, 7
      %v418 = vsub.s32 0, %v417
      %v419 = vrot.slane %v382, %v418
      %429 = vrot.lane.b32.xlu0 %v407, 96
      %v430 = vpop.permute.xlu0 %429
      %431 = vrot.lane.b32.xlu0 %v408, 96
      %v432 = vpop.permute.xlu0 %431
      %433 = vrot.lane.b32.xlu0 %v409, 96
      %v434 = vpop.permute.xlu0 %433
      %435 = vrot.lane.b32.xlu0 %v410, 96
      %v436 = vpop.permute.xlu0 %435
      %437 = vrot.lane.b32.xlu0 %v411, 96
      %v438 = vpop.permute.xlu0 %437
      %439 = vrot.lane.b32.xlu0 %v412, 96
      %v440 = vpop.permute.xlu0 %439
      %441 = vrot.lane.b32.xlu0 %v413, 96
      %v442 = vpop.permute.xlu0 %441
      %443 = vrot.lane.b32.xlu0 %v414, 96
      %v444 = vpop.permute.xlu0 %443
      %vm445 = vcmask 64512
      %v447 = vsel %vm445, %v399, 0
      %v450 = vsel %vm445, %v400, 0
      %v453 = vsel %vm445, %v401, 0
      %v456 = vsel %vm445, %v402, 0
      %v459 = vsel %vm445, %v403, 0
      %v462 = vsel %vm445, %v404, 0
      %v465 = vsel %vm445, %v405, 0
      %v468 = vsel %vm445, %v406, 0
      %v471 = vsel %vm445, %v430, 0
      %v474 = vsel %vm445, %v432, 0
      %v477 = vsel %vm445, %v434, 0
      %v480 = vsel %vm445, %v436, 0
      %v483 = vsel %vm445, %v438, 0
      %v486 = vsel %vm445, %v440, 0
      %v489 = vsel %vm445, %v442, 0
      %v492 = vsel %vm445, %v444, 0
      %494 = vmatprep.subr.bf16.mxu0 0
      %495 = vmatpush1.bf16.xpose.msra.mxu0 %v492
      %496 = vmatprep.subr.bf16.mxu0 0
      %497 = vmatpush1.bf16.xpose.msra.mxu0 %v489
      %498 = vmatprep.subr.bf16.mxu0 0
      %499 = vmatpush1.bf16.xpose.msra.mxu0 %v486
      %500 = vmatprep.subr.bf16.mxu0 0
      %501 = vmatpush1.bf16.xpose.msra.mxu0 %v483
      %502 = vmatprep.subr.bf16.mxu0 0
      %503 = vmatpush1.bf16.xpose.msra.mxu0 %v480
      %504 = vmatprep.subr.bf16.mxu0 0
      %505 = vmatpush1.bf16.xpose.msra.mxu0 %v477
      %506 = vmatprep.subr.bf16.mxu0 0
      %507 = vmatpush1.bf16.xpose.msra.mxu0 %v474
      %508 = vmatprep.subr.bf16.mxu0 0
      %509 = vmatpush1.bf16.xpose.msra.mxu0 %v471
      %510 = vmatprep.subr.bf16.mxu0 0
      %511 = vmatpush2.bf16.xpose.msra.mxu0 0
      %512 = vmatprep.subr.bf16.mxu0 0
      %513 = vmatpush2.bf16.xpose.msra.mxu0 0
      %514 = vmatprep.subr.bf16.mxu0 0
      %515 = vmatpush2.bf16.xpose.msra.mxu0 0
      %516 = vmatprep.subr.bf16.mxu0 0
      %517 = vmatpush2.bf16.xpose.msra.mxu0 0
      %518 = vmatprep.subr.bf16.mxu0 0
      %519 = vmatpush2.bf16.xpose.msra.mxu0 0
      %520 = vmatprep.subr.bf16.mxu0 0
      %521 = vmatpush2.bf16.xpose.msra.mxu0 0
      %522 = vmatprep.subr.bf16.mxu0 0
      %523 = vmatpush2.bf16.xpose.msra.mxu0 0
      %524 = vmatprep.subr.bf16.mxu0 0
      %525 = vmatpush2.bf16.xpose.msra.mxu0 0
      %526 = vmatprep.mubr.bf16.mxu0 0
      %527 = vmatmul.mubr.bf16.gmra.mxu0 %v447
      %v528 = vpop.f32.mrf.mxu0
      %v529 = vadd.f32 %v419, %v528
      %v530 = vpop.f32.mrf.mxu0
      %v531 = vpop.f32.mrf.mxu0
      %v532 = vadd.f32 %v419, %v531
      %v533 = vpop.f32.mrf.mxu0
      %534 = vmatprep.mubr.bf16.mxu0 0
      %535 = vmatmul.mubr.bf16.gmra.mxu0 %v450
      %v536 = vpop.f32.mrf.mxu0
      %v537 = vadd.f32 %v419, %v536
      %v538 = vpop.f32.mrf.mxu0
      %v539 = vpop.f32.mrf.mxu0
      %v540 = vadd.f32 %v419, %v539
      %v541 = vpop.f32.mrf.mxu0
      %542 = vmatprep.mubr.bf16.mxu0 0
      %543 = vmatmul.mubr.bf16.gmra.mxu0 %v453
      %v544 = vpop.f32.mrf.mxu0
      %v545 = vadd.f32 %v419, %v544
      %v546 = vpop.f32.mrf.mxu0
      %v547 = vpop.f32.mrf.mxu0
      %v548 = vadd.f32 %v419, %v547
      %v549 = vpop.f32.mrf.mxu0
      %550 = vmatprep.mubr.bf16.mxu0 0
      %551 = vmatmul.mubr.bf16.gmra.mxu0 %v456
      %v552 = vpop.f32.mrf.mxu0
      %v553 = vadd.f32 %v419, %v552
      %v554 = vpop.f32.mrf.mxu0
      %v555 = vpop.f32.mrf.mxu0
      %v556 = vadd.f32 %v419, %v555
      %v557 = vpop.f32.mrf.mxu0
      %558 = vmatprep.mubr.bf16.mxu0 0
      %559 = vmatmul.mubr.bf16.gmra.mxu0 %v459
      %v560 = vpop.f32.mrf.mxu0
      %v561 = vadd.f32 %v419, %v560
      %v562 = vpop.f32.mrf.mxu0
      %v563 = vpop.f32.mrf.mxu0
      %v564 = vadd.f32 %v419, %v563
      %v565 = vpop.f32.mrf.mxu0
      %566 = vmatprep.mubr.bf16.mxu0 0
      %567 = vmatmul.mubr.bf16.gmra.mxu0 %v462
      %v568 = vpop.f32.mrf.mxu0
      %v569 = vadd.f32 %v419, %v568
      %v570 = vpop.f32.mrf.mxu0
      %v571 = vpop.f32.mrf.mxu0
      %v572 = vadd.f32 %v419, %v571
      %v573 = vpop.f32.mrf.mxu0
      %574 = vmatprep.mubr.bf16.mxu0 0
      %575 = vmatmul.mubr.bf16.gmra.mxu0 %v465
      %v576 = vpop.f32.mrf.mxu0
      %v577 = vadd.f32 %v419, %v576
      %v578 = vpop.f32.mrf.mxu0
      %v579 = vpop.f32.mrf.mxu0
      %v580 = vadd.f32 %v419, %v579
      %v581 = vpop.f32.mrf.mxu0
      %582 = vmatprep.mubr.bf16.mxu0 0
      %583 = vmatmul.mubr.bf16.gmra.mxu0 %v468
      %v584 = vpop.f32.mrf.mxu0
      %v585 = vadd.f32 %v419, %v584
      %v586 = vpop.f32.mrf.mxu0
      %v587 = vpop.f32.mrf.mxu0
      %v588 = vadd.f32 %v419, %v587
      %v589 = vpop.f32.mrf.mxu0
      %590 = vdwg.mxu0
      %591 = vmax.xlane.f32.xlu0 %v529
      %v592 = vpop.xlane.xlu0 %591
      %593 = vmax.xlane.f32.xlu0 %v532
      %v594 = vpop.xlane.xlu0 %593
      %595 = vmax.xlane.f32.xlu0 %v537
      %v596 = vpop.xlane.xlu0 %595
      %597 = vmax.xlane.f32.xlu0 %v540
      %v598 = vpop.xlane.xlu0 %597
      %599 = vmax.xlane.f32.xlu0 %v545
      %v600 = vpop.xlane.xlu0 %599
      %601 = vmax.xlane.f32.xlu0 %v548
      %v602 = vpop.xlane.xlu0 %601
      %603 = vmax.xlane.f32.xlu0 %v553
      %v604 = vpop.xlane.xlu0 %603
      %605 = vmax.xlane.f32.xlu0 %v556
      %v606 = vpop.xlane.xlu0 %605
      %607 = vmax.xlane.f32.xlu0 %v561
      %v608 = vpop.xlane.xlu0 %607
      %609 = vmax.xlane.f32.xlu0 %v564
      %v610 = vpop.xlane.xlu0 %609
      %611 = vmax.xlane.f32.xlu0 %v569
      %v612 = vpop.xlane.xlu0 %611
      %613 = vmax.xlane.f32.xlu0 %v572
      %v614 = vpop.xlane.xlu0 %613
      %615 = vmax.xlane.f32.xlu0 %v577
      %v616 = vpop.xlane.xlu0 %615
      %617 = vmax.xlane.f32.xlu0 %v580
      %v618 = vpop.xlane.xlu0 %617
      %619 = vmax.xlane.f32.xlu0 %v585
      %v620 = vpop.xlane.xlu0 %619
      %621 = vmax.xlane.f32.xlu0 %v588
      %v622 = vpop.xlane.xlu0 %621
      %v623 = vsub.f32 %v529, %v592
      %v624 = vsub.f32 %v532, %v594
      %v625 = vsub.f32 %v537, %v596
      %v626 = vsub.f32 %v540, %v598
      %v627 = vsub.f32 %v545, %v600
      %v628 = vsub.f32 %v548, %v602
      %v629 = vsub.f32 %v553, %v604
      %v630 = vsub.f32 %v556, %v606
      %v631 = vsub.f32 %v561, %v608
      %v632 = vsub.f32 %v564, %v610
      %v633 = vsub.f32 %v569, %v612
      %v634 = vsub.f32 %v572, %v614
      %v635 = vsub.f32 %v577, %v616
      %v636 = vsub.f32 %v580, %v618
      %v637 = vsub.f32 %v585, %v620
      %v638 = vsub.f32 %v588, %v622
      %v639 = vmul.f32 %v623, 1.442695
      %v640 = vpow.pop %v639
      %v641 = vmul.f32 %v624, 1.442695
      %v642 = vpow.pop %v641
      %v643 = vmul.f32 %v625, 1.442695
      %v644 = vpow.pop %v643
      %v645 = vmul.f32 %v626, 1.442695
      %v646 = vpow.pop %v645
      %v647 = vmul.f32 %v627, 1.442695
      %v648 = vpow.pop %v647
      %v649 = vmul.f32 %v628, 1.442695
      %v650 = vpow.pop %v649
      %v651 = vmul.f32 %v629, 1.442695
      %v652 = vpow.pop %v651
      %v653 = vmul.f32 %v630, 1.442695
      %v654 = vpow.pop %v653
      %v655 = vmul.f32 %v631, 1.442695
      %v656 = vpow.pop %v655
      %v657 = vmul.f32 %v632, 1.442695
      %v658 = vpow.pop %v657
      %v659 = vmul.f32 %v633, 1.442695
      %v660 = vpow.pop %v659
      %v661 = vmul.f32 %v634, 1.442695
      %v662 = vpow.pop %v661
      %v663 = vmul.f32 %v635, 1.442695
      %v664 = vpow.pop %v663
      %v665 = vmul.f32 %v636, 1.442695
      %v666 = vpow.pop %v665
      %v667 = vmul.f32 %v637, 1.442695
      %v668 = vpow.pop %v667
      %v669 = vmul.f32 %v638, 1.442695
      %v670 = vpow.pop %v669
      %671 = vadd.xlane.f32.xlu0 %v640
      %v672 = vpop.xlane.xlu0 %671
      %673 = vadd.xlane.f32.xlu0 %v642
      %v674 = vpop.xlane.xlu0 %673
      %675 = vadd.xlane.f32.xlu0 %v644
      %v676 = vpop.xlane.xlu0 %675
      %677 = vadd.xlane.f32.xlu0 %v646
      %v678 = vpop.xlane.xlu0 %677
      %679 = vadd.xlane.f32.xlu0 %v648
      %v680 = vpop.xlane.xlu0 %679
      %681 = vadd.xlane.f32.xlu0 %v650
      %v682 = vpop.xlane.xlu0 %681
      %683 = vadd.xlane.f32.xlu0 %v652
      %v684 = vpop.xlane.xlu0 %683
      %685 = vadd.xlane.f32.xlu0 %v654
      %v686 = vpop.xlane.xlu0 %685
      %687 = vadd.xlane.f32.xlu0 %v656
      %v688 = vpop.xlane.xlu0 %687
      %689 = vadd.xlane.f32.xlu0 %v658
      %v690 = vpop.xlane.xlu0 %689
      %691 = vadd.xlane.f32.xlu0 %v660
      %v692 = vpop.xlane.xlu0 %691
      %693 = vadd.xlane.f32.xlu0 %v662
      %v694 = vpop.xlane.xlu0 %693
      %695 = vadd.xlane.f32.xlu0 %v664
      %v696 = vpop.xlane.xlu0 %695
      %697 = vadd.xlane.f32.xlu0 %v666
      %v698 = vpop.xlane.xlu0 %697
      %699 = vadd.xlane.f32.xlu0 %v668
      %v700 = vpop.xlane.xlu0 %699
      %701 = vadd.xlane.f32.xlu0 %v670
      %v702 = vpop.xlane.xlu0 %701
      %v703 = vrcp.pop %v672
      %v704 = vrcp.pop %v674
      %v705 = vrcp.pop %v676
      %v706 = vrcp.pop %v678
      %v707 = vrcp.pop %v680
      %v708 = vrcp.pop %v682
      %v709 = vrcp.pop %v684
      %v710 = vrcp.pop %v686
      %v711 = vrcp.pop %v688
      %v712 = vrcp.pop %v690
      %v713 = vrcp.pop %v692
      %v714 = vrcp.pop %v694
      %v715 = vrcp.pop %v696
      %v716 = vrcp.pop %v698
      %v717 = vrcp.pop %v700
      %v718 = vrcp.pop %v702
      %v719 = vmul.f32 %v640, %v703
      %v720 = vmul.f32 %v642, %v704
      %v721 = vmul.f32 %v644, %v705
      %v722 = vmul.f32 %v646, %v706
      %v723 = vmul.f32 %v648, %v707
      %v724 = vmul.f32 %v650, %v708
      %v725 = vmul.f32 %v652, %v709
      %v726 = vmul.f32 %v654, %v710
      %v727 = vmul.f32 %v656, %v711
      %v728 = vmul.f32 %v658, %v712
      %v729 = vmul.f32 %v660, %v713
      %v730 = vmul.f32 %v662, %v714
      %v731 = vmul.f32 %v664, %v715
      %v732 = vmul.f32 %v666, %v716
      %v733 = vmul.f32 %v668, %v717
      %v734 = vmul.f32 %v670, %v718
      %v735 = vpack.c.bf16 %v720, %v719
      %v736 = vpack.c.bf16 %v722, %v721
      %v737 = vpack.c.bf16 %v724, %v723
      %v738 = vpack.c.bf16 %v726, %v725
      %v739 = vpack.c.bf16 %v728, %v727
      %v740 = vpack.c.bf16 %v730, %v729
      %v741 = vpack.c.bf16 %v732, %v731
      %v742 = vpack.c.bf16 %v734, %v733
      %743 = vrot.lane.b32.xlu0 %v407, 64
      %v744 = vpop.permute.xlu0 %743
      %745 = vrot.lane.b32.xlu0 %v408, 64
      %v746 = vpop.permute.xlu0 %745
      %747 = vrot.lane.b32.xlu0 %v409, 64
      %v748 = vpop.permute.xlu0 %747
      %749 = vrot.lane.b32.xlu0 %v410, 64
      %v750 = vpop.permute.xlu0 %749
      %751 = vrot.lane.b32.xlu0 %v411, 64
      %v752 = vpop.permute.xlu0 %751
      %753 = vrot.lane.b32.xlu0 %v412, 64
      %v754 = vpop.permute.xlu0 %753
      %755 = vrot.lane.b32.xlu0 %v413, 64
      %v756 = vpop.permute.xlu0 %755
      %757 = vrot.lane.b32.xlu0 %v414, 64
      %v758 = vpop.permute.xlu0 %757
      %767 = vmatprep.subr.bf16.mxu0 0
      %768 = vmatpush1.bf16.msra.mxu0 %v758
      %769 = vmatprep.subr.bf16.mxu0 0
      %770 = vmatpush1.bf16.msra.mxu0 %v756
      %771 = vmatprep.subr.bf16.mxu0 0
      %772 = vmatpush1.bf16.msra.mxu0 %v754
      %773 = vmatprep.subr.bf16.mxu0 0
      %774 = vmatpush1.bf16.msra.mxu0 %v752
      %775 = vmatprep.subr.bf16.mxu0 0
      %776 = vmatpush1.bf16.msra.mxu0 %v750
      %777 = vmatprep.subr.bf16.mxu0 0
      %778 = vmatpush1.bf16.msra.mxu0 %v748
      %779 = vmatprep.subr.bf16.mxu0 0
      %780 = vmatpush1.bf16.msra.mxu0 %v746
      %781 = vmatprep.subr.bf16.mxu0 0
      %782 = vmatpush1.bf16.msra.mxu0 %v744
      %783 = vmatprep.subr.bf16.mxu0 0
      %784 = vmatpush2.bf16.msra.mxu0 0
      %785 = vmatprep.subr.bf16.mxu0 0
      %786 = vmatpush2.bf16.msra.mxu0 0
      %787 = vmatprep.subr.bf16.mxu0 0
      %788 = vmatpush2.bf16.msra.mxu0 0
      %789 = vmatprep.subr.bf16.mxu0 0
      %790 = vmatpush2.bf16.msra.mxu0 0
      %791 = vmatprep.subr.bf16.mxu0 0
      %792 = vmatpush2.bf16.msra.mxu0 0
      %793 = vmatprep.subr.bf16.mxu0 0
      %794 = vmatpush2.bf16.msra.mxu0 0
      %795 = vmatprep.subr.bf16.mxu0 0
      %796 = vmatpush2.bf16.msra.mxu0 0
      %797 = vmatprep.subr.bf16.mxu0 0
      %798 = vmatpush2.bf16.msra.mxu0 0
      %799 = vmatprep.mubr.bf16.mxu0 0
      %800 = vmatmul.mubr.bf16.gmra.mxu0 %v735
      %v801 = vpop.f32.mrf.mxu0
      %v802 = vadd.f32 0.0, %v801
      %v803 = vpop.f32.mrf.mxu0
      %v804 = vpop.f32.mrf.mxu0
      %v805 = vadd.f32 0.0, %v804
      %v806 = vpop.f32.mrf.mxu0
      %807 = vmatprep.mubr.bf16.mxu0 0
      %808 = vmatmul.mubr.bf16.gmra.mxu0 %v736
      %v809 = vpop.f32.mrf.mxu0
      %v810 = vadd.f32 0.0, %v809
      %v811 = vpop.f32.mrf.mxu0
      %v812 = vpop.f32.mrf.mxu0
      %v813 = vadd.f32 0.0, %v812
      %v814 = vpop.f32.mrf.mxu0
      %815 = vmatprep.mubr.bf16.mxu0 0
      %816 = vmatmul.mubr.bf16.gmra.mxu0 %v737
      %v817 = vpop.f32.mrf.mxu0
      %v818 = vadd.f32 0.0, %v817
      %v819 = vpop.f32.mrf.mxu0
      %v820 = vpop.f32.mrf.mxu0
      %v821 = vadd.f32 0.0, %v820
      %v822 = vpop.f32.mrf.mxu0
      %823 = vmatprep.mubr.bf16.mxu0 0
      %824 = vmatmul.mubr.bf16.gmra.mxu0 %v738
      %v825 = vpop.f32.mrf.mxu0
      %v826 = vadd.f32 0.0, %v825
      %v827 = vpop.f32.mrf.mxu0
      %v828 = vpop.f32.mrf.mxu0
      %v829 = vadd.f32 0.0, %v828
      %v830 = vpop.f32.mrf.mxu0
      %831 = vmatprep.mubr.bf16.mxu0 0
      %832 = vmatmul.mubr.bf16.gmra.mxu0 %v739
      %v833 = vpop.f32.mrf.mxu0
      %v834 = vadd.f32 0.0, %v833
      %v835 = vpop.f32.mrf.mxu0
      %v836 = vpop.f32.mrf.mxu0
      %v837 = vadd.f32 0.0, %v836
      %v838 = vpop.f32.mrf.mxu0
      %839 = vmatprep.mubr.bf16.mxu0 0
      %840 = vmatmul.mubr.bf16.gmra.mxu0 %v740
      %v841 = vpop.f32.mrf.mxu0
      %v842 = vadd.f32 0.0, %v841
      %v843 = vpop.f32.mrf.mxu0
      %v844 = vpop.f32.mrf.mxu0
      %v845 = vadd.f32 0.0, %v844
      %v846 = vpop.f32.mrf.mxu0
      %847 = vmatprep.mubr.bf16.mxu0 0
      %848 = vmatmul.mubr.bf16.gmra.mxu0 %v741
      %v849 = vpop.f32.mrf.mxu0
      %v850 = vadd.f32 0.0, %v849
      %v851 = vpop.f32.mrf.mxu0
      %v852 = vpop.f32.mrf.mxu0
      %v853 = vadd.f32 0.0, %v852
      %v854 = vpop.f32.mrf.mxu0
      %855 = vmatprep.mubr.bf16.mxu0 0
      %856 = vmatmul.mubr.bf16.gmra.mxu0 %v742
      %v857 = vpop.f32.mrf.mxu0
      %v858 = vadd.f32 0.0, %v857
      %v859 = vpop.f32.mrf.mxu0
      %v860 = vpop.f32.mrf.mxu0
      %v861 = vadd.f32 0.0, %v860
      %v862 = vpop.f32.mrf.mxu0
      %863 = vdwg.mxu0
      %872 = vrot.lane.b32.xlu0 %v399, 120
      %v873 = vpop.permute.xlu0 %872
      %874 = vrot.lane.b32.xlu0 %v400, 120
      %v875 = vpop.permute.xlu0 %874
      %876 = vrot.lane.b32.xlu0 %v401, 120
      %v877 = vpop.permute.xlu0 %876
      %878 = vrot.lane.b32.xlu0 %v402, 120
      %v879 = vpop.permute.xlu0 %878
      %880 = vrot.lane.b32.xlu0 %v403, 120
      %v881 = vpop.permute.xlu0 %880
      %882 = vrot.lane.b32.xlu0 %v404, 120
      %v883 = vpop.permute.xlu0 %882
      %884 = vrot.lane.b32.xlu0 %v405, 120
      %v885 = vpop.permute.xlu0 %884
      %886 = vrot.lane.b32.xlu0 %v406, 120
      %v887 = vpop.permute.xlu0 %886
      %888 = vrot.lane.b32.xlu0 %v407, 88
      %v889 = vpop.permute.xlu0 %888
      %890 = vrot.lane.b32.xlu0 %v408, 88
      %v891 = vpop.permute.xlu0 %890
      %892 = vrot.lane.b32.xlu0 %v409, 88
      %v893 = vpop.permute.xlu0 %892
      %894 = vrot.lane.b32.xlu0 %v410, 88
      %v895 = vpop.permute.xlu0 %894
      %896 = vrot.lane.b32.xlu0 %v411, 88
      %v897 = vpop.permute.xlu0 %896
      %898 = vrot.lane.b32.xlu0 %v412, 88
      %v899 = vpop.permute.xlu0 %898
      %900 = vrot.lane.b32.xlu0 %v413, 88
      %v901 = vpop.permute.xlu0 %900
      %902 = vrot.lane.b32.xlu0 %v414, 88
      %v903 = vpop.permute.xlu0 %902
      %v905 = vsel %vm445, %v873, 0
      %v908 = vsel %vm445, %v875, 0
      %v911 = vsel %vm445, %v877, 0
      %v914 = vsel %vm445, %v879, 0
      %v917 = vsel %vm445, %v881, 0
      %v920 = vsel %vm445, %v883, 0
      %v923 = vsel %vm445, %v885, 0
      %v926 = vsel %vm445, %v887, 0
      %v929 = vsel %vm445, %v889, 0
      %v932 = vsel %vm445, %v891, 0
      %v935 = vsel %vm445, %v893, 0
      %v938 = vsel %vm445, %v895, 0
      %v941 = vsel %vm445, %v897, 0
      %v944 = vsel %vm445, %v899, 0
      %v947 = vsel %vm445, %v901, 0
      %v950 = vsel %vm445, %v903, 0
      %952 = vmatprep.subr.bf16.mxu0 0
      %953 = vmatpush1.bf16.xpose.msra.mxu0 %v950
      %954 = vmatprep.subr.bf16.mxu0 0
      %955 = vmatpush1.bf16.xpose.msra.mxu0 %v947
      %956 = vmatprep.subr.bf16.mxu0 0
      %957 = vmatpush1.bf16.xpose.msra.mxu0 %v944
      %958 = vmatprep.subr.bf16.mxu0 0
      %959 = vmatpush1.bf16.xpose.msra.mxu0 %v941
      %960 = vmatprep.subr.bf16.mxu0 0
      %961 = vmatpush1.bf16.xpose.msra.mxu0 %v938
      %962 = vmatprep.subr.bf16.mxu0 0
      %963 = vmatpush1.bf16.xpose.msra.mxu0 %v935
      %964 = vmatprep.subr.bf16.mxu0 0
      %965 = vmatpush1.bf16.xpose.msra.mxu0 %v932
      %966 = vmatprep.subr.bf16.mxu0 0
      %967 = vmatpush1.bf16.xpose.msra.mxu0 %v929
      %968 = vmatprep.subr.bf16.mxu0 0
      %969 = vmatpush2.bf16.xpose.msra.mxu0 0
      %970 = vmatprep.subr.bf16.mxu0 0
      %971 = vmatpush2.bf16.xpose.msra.mxu0 0
      %972 = vmatprep.subr.bf16.mxu0 0
      %973 = vmatpush2.bf16.xpose.msra.mxu0 0
      %974 = vmatprep.subr.bf16.mxu0 0
      %975 = vmatpush2.bf16.xpose.msra.mxu0 0
      %976 = vmatprep.subr.bf16.mxu0 0
      %977 = vmatpush2.bf16.xpose.msra.mxu0 0
      %978 = vmatprep.subr.bf16.mxu0 0
      %979 = vmatpush2.bf16.xpose.msra.mxu0 0
      %980 = vmatprep.subr.bf16.mxu0 0
      %981 = vmatpush2.bf16.xpose.msra.mxu0 0
      %982 = vmatprep.subr.bf16.mxu0 0
      %983 = vmatpush2.bf16.xpose.msra.mxu0 0
      %984 = vmatprep.mubr.bf16.mxu0 0
      %985 = vmatmul.mubr.bf16.gmra.mxu0 %v905
      %v986 = vpop.f32.mrf.mxu0
      %v987 = vadd.f32 %v419, %v986
      %v988 = vpop.f32.mrf.mxu0
      %v989 = vpop.f32.mrf.mxu0
      %v990 = vadd.f32 %v419, %v989
      %v991 = vpop.f32.mrf.mxu0
      %992 = vmatprep.mubr.bf16.mxu0 0
      %993 = vmatmul.mubr.bf16.gmra.mxu0 %v908
      %v994 = vpop.f32.mrf.mxu0
      %v995 = vadd.f32 %v419, %v994
      %v996 = vpop.f32.mrf.mxu0
      %v997 = vpop.f32.mrf.mxu0
      %v998 = vadd.f32 %v419, %v997
      %v999 = vpop.f32.mrf.mxu0
      %1000 = vmatprep.mubr.bf16.mxu0 0
      %1001 = vmatmul.mubr.bf16.gmra.mxu0 %v911
      %v1002 = vpop.f32.mrf.mxu0
      %v1003 = vadd.f32 %v419, %v1002
      %v1004 = vpop.f32.mrf.mxu0
      %v1005 = vpop.f32.mrf.mxu0
      %v1006 = vadd.f32 %v419, %v1005
      %v1007 = vpop.f32.mrf.mxu0
      %1008 = vmatprep.mubr.bf16.mxu0 0
      %1009 = vmatmul.mubr.bf16.gmra.mxu0 %v914
      %v1010 = vpop.f32.mrf.mxu0
      %v1011 = vadd.f32 %v419, %v1010
      %v1012 = vpop.f32.mrf.mxu0
      %v1013 = vpop.f32.mrf.mxu0
      %v1014 = vadd.f32 %v419, %v1013
      %v1015 = vpop.f32.mrf.mxu0
      %1016 = vmatprep.mubr.bf16.mxu0 0
      %1017 = vmatmul.mubr.bf16.gmra.mxu0 %v917
      %v1018 = vpop.f32.mrf.mxu0
      %v1019 = vadd.f32 %v419, %v1018
      %v1020 = vpop.f32.mrf.mxu0
      %v1021 = vpop.f32.mrf.mxu0
      %v1022 = vadd.f32 %v419, %v1021
      %v1023 = vpop.f32.mrf.mxu0
      %1024 = vmatprep.mubr.bf16.mxu0 0
      %1025 = vmatmul.mubr.bf16.gmra.mxu0 %v920
      %v1026 = vpop.f32.mrf.mxu0
      %v1027 = vadd.f32 %v419, %v1026
      %v1028 = vpop.f32.mrf.mxu0
      %v1029 = vpop.f32.mrf.mxu0
      %v1030 = vadd.f32 %v419, %v1029
      %v1031 = vpop.f32.mrf.mxu0
      %1032 = vmatprep.mubr.bf16.mxu0 0
      %1033 = vmatmul.mubr.bf16.gmra.mxu0 %v923
      %v1034 = vpop.f32.mrf.mxu0
      %v1035 = vadd.f32 %v419, %v1034
      %v1036 = vpop.f32.mrf.mxu0
      %v1037 = vpop.f32.mrf.mxu0
      %v1038 = vadd.f32 %v419, %v1037
      %v1039 = vpop.f32.mrf.mxu0
      %1040 = vmatprep.mubr.bf16.mxu0 0
      %1041 = vmatmul.mubr.bf16.gmra.mxu0 %v926
      %v1042 = vpop.f32.mrf.mxu0
      %v1043 = vadd.f32 %v419, %v1042
      %v1044 = vpop.f32.mrf.mxu0
      %v1045 = vpop.f32.mrf.mxu0
      %v1046 = vadd.f32 %v419, %v1045
      %v1047 = vpop.f32.mrf.mxu0
      %1048 = vdwg.mxu0
      %1049 = vmax.xlane.f32.xlu0 %v987
      %v1050 = vpop.xlane.xlu0 %1049
      %1051 = vmax.xlane.f32.xlu0 %v990
      %v1052 = vpop.xlane.xlu0 %1051
      %1053 = vmax.xlane.f32.xlu0 %v995
      %v1054 = vpop.xlane.xlu0 %1053
      %1055 = vmax.xlane.f32.xlu0 %v998
      %v1056 = vpop.xlane.xlu0 %1055
      %1057 = vmax.xlane.f32.xlu0 %v1003
      %v1058 = vpop.xlane.xlu0 %1057
      %1059 = vmax.xlane.f32.xlu0 %v1006
      %v1060 = vpop.xlane.xlu0 %1059
      %1061 = vmax.xlane.f32.xlu0 %v1011
      %v1062 = vpop.xlane.xlu0 %1061
      %1063 = vmax.xlane.f32.xlu0 %v1014
      %v1064 = vpop.xlane.xlu0 %1063
      %1065 = vmax.xlane.f32.xlu0 %v1019
      %v1066 = vpop.xlane.xlu0 %1065
      %1067 = vmax.xlane.f32.xlu0 %v1022
      %v1068 = vpop.xlane.xlu0 %1067
      %1069 = vmax.xlane.f32.xlu0 %v1027
      %v1070 = vpop.xlane.xlu0 %1069
      %1071 = vmax.xlane.f32.xlu0 %v1030
      %v1072 = vpop.xlane.xlu0 %1071
      %1073 = vmax.xlane.f32.xlu0 %v1035
      %v1074 = vpop.xlane.xlu0 %1073
      %1075 = vmax.xlane.f32.xlu0 %v1038
      %v1076 = vpop.xlane.xlu0 %1075
      %1077 = vmax.xlane.f32.xlu0 %v1043
      %v1078 = vpop.xlane.xlu0 %1077
      %1079 = vmax.xlane.f32.xlu0 %v1046
      %v1080 = vpop.xlane.xlu0 %1079
      %v1081 = vsub.f32 %v987, %v1050
      %v1082 = vsub.f32 %v990, %v1052
      %v1083 = vsub.f32 %v995, %v1054
      %v1084 = vsub.f32 %v998, %v1056
      %v1085 = vsub.f32 %v1003, %v1058
      %v1086 = vsub.f32 %v1006, %v1060
      %v1087 = vsub.f32 %v1011, %v1062
      %v1088 = vsub.f32 %v1014, %v1064
      %v1089 = vsub.f32 %v1019, %v1066
      %v1090 = vsub.f32 %v1022, %v1068
      %v1091 = vsub.f32 %v1027, %v1070
      %v1092 = vsub.f32 %v1030, %v1072
      %v1093 = vsub.f32 %v1035, %v1074
      %v1094 = vsub.f32 %v1038, %v1076
      %v1095 = vsub.f32 %v1043, %v1078
      %v1096 = vsub.f32 %v1046, %v1080
      %v1097 = vmul.f32 %v1081, 1.442695
      %v1098 = vpow.pop %v1097
      %v1099 = vmul.f32 %v1082, 1.442695
      %v1100 = vpow.pop %v1099
      %v1101 = vmul.f32 %v1083, 1.442695
      %v1102 = vpow.pop %v1101
      %v1103 = vmul.f32 %v1084, 1.442695
      %v1104 = vpow.pop %v1103
      %v1105 = vmul.f32 %v1085, 1.442695
      %v1106 = vpow.pop %v1105
      %v1107 = vmul.f32 %v1086, 1.442695
      %v1108 = vpow.pop %v1107
      %v1109 = vmul.f32 %v1087, 1.442695
      %v1110 = vpow.pop %v1109
      %v1111 = vmul.f32 %v1088, 1.442695
      %v1112 = vpow.pop %v1111
      %v1113 = vmul.f32 %v1089, 1.442695
      %v1114 = vpow.pop %v1113
      %v1115 = vmul.f32 %v1090, 1.442695
      %v1116 = vpow.pop %v1115
      %v1117 = vmul.f32 %v1091, 1.442695
      %v1118 = vpow.pop %v1117
      %v1119 = vmul.f32 %v1092, 1.442695
      %v1120 = vpow.pop %v1119
      %v1121 = vmul.f32 %v1093, 1.442695
      %v1122 = vpow.pop %v1121
      %v1123 = vmul.f32 %v1094, 1.442695
      %v1124 = vpow.pop %v1123
      %v1125 = vmul.f32 %v1095, 1.442695
      %v1126 = vpow.pop %v1125
      %v1127 = vmul.f32 %v1096, 1.442695
      %v1128 = vpow.pop %v1127
      %1129 = vadd.xlane.f32.xlu0 %v1098
      %v1130 = vpop.xlane.xlu0 %1129
      %1131 = vadd.xlane.f32.xlu0 %v1100
      %v1132 = vpop.xlane.xlu0 %1131
      %1133 = vadd.xlane.f32.xlu0 %v1102
      %v1134 = vpop.xlane.xlu0 %1133
      %1135 = vadd.xlane.f32.xlu0 %v1104
      %v1136 = vpop.xlane.xlu0 %1135
      %1137 = vadd.xlane.f32.xlu0 %v1106
      %v1138 = vpop.xlane.xlu0 %1137
      %1139 = vadd.xlane.f32.xlu0 %v1108
      %v1140 = vpop.xlane.xlu0 %1139
      %1141 = vadd.xlane.f32.xlu0 %v1110
      %v1142 = vpop.xlane.xlu0 %1141
      %1143 = vadd.xlane.f32.xlu0 %v1112
      %v1144 = vpop.xlane.xlu0 %1143
      %1145 = vadd.xlane.f32.xlu0 %v1114
      %v1146 = vpop.xlane.xlu0 %1145
      %1147 = vadd.xlane.f32.xlu0 %v1116
      %v1148 = vpop.xlane.xlu0 %1147
      %1149 = vadd.xlane.f32.xlu0 %v1118
      %v1150 = vpop.xlane.xlu0 %1149
      %1151 = vadd.xlane.f32.xlu0 %v1120
      %v1152 = vpop.xlane.xlu0 %1151
      %1153 = vadd.xlane.f32.xlu0 %v1122
      %v1154 = vpop.xlane.xlu0 %1153
      %1155 = vadd.xlane.f32.xlu0 %v1124
      %v1156 = vpop.xlane.xlu0 %1155
      %1157 = vadd.xlane.f32.xlu0 %v1126
      %v1158 = vpop.xlane.xlu0 %1157
      %1159 = vadd.xlane.f32.xlu0 %v1128
      %v1160 = vpop.xlane.xlu0 %1159
      %v1161 = vrcp.pop %v1130
      %v1162 = vrcp.pop %v1132
      %v1163 = vrcp.pop %v1134
      %v1164 = vrcp.pop %v1136
      %v1165 = vrcp.pop %v1138
      %v1166 = vrcp.pop %v1140
      %v1167 = vrcp.pop %v1142
      %v1168 = vrcp.pop %v1144
      %v1169 = vrcp.pop %v1146
      %v1170 = vrcp.pop %v1148
      %v1171 = vrcp.pop %v1150
      %v1172 = vrcp.pop %v1152
      %v1173 = vrcp.pop %v1154
      %v1174 = vrcp.pop %v1156
      %v1175 = vrcp.pop %v1158
      %v1176 = vrcp.pop %v1160
      %v1177 = vmul.f32 %v1098, %v1161
      %v1178 = vmul.f32 %v1100, %v1162
      %v1179 = vmul.f32 %v1102, %v1163
      %v1180 = vmul.f32 %v1104, %v1164
      %v1181 = vmul.f32 %v1106, %v1165
      %v1182 = vmul.f32 %v1108, %v1166
      %v1183 = vmul.f32 %v1110, %v1167
      %v1184 = vmul.f32 %v1112, %v1168
      %v1185 = vmul.f32 %v1114, %v1169
      %v1186 = vmul.f32 %v1116, %v1170
      %v1187 = vmul.f32 %v1118, %v1171
      %v1188 = vmul.f32 %v1120, %v1172
      %v1189 = vmul.f32 %v1122, %v1173
      %v1190 = vmul.f32 %v1124, %v1174
      %v1191 = vmul.f32 %v1126, %v1175
      %v1192 = vmul.f32 %v1128, %v1176
      %v1193 = vpack.c.bf16 %v1178, %v1177
      %v1194 = vpack.c.bf16 %v1180, %v1179
      %v1195 = vpack.c.bf16 %v1182, %v1181
      %v1196 = vpack.c.bf16 %v1184, %v1183
      %v1197 = vpack.c.bf16 %v1186, %v1185
      %v1198 = vpack.c.bf16 %v1188, %v1187
      %v1199 = vpack.c.bf16 %v1190, %v1189
      %v1200 = vpack.c.bf16 %v1192, %v1191
      %1201 = vrot.lane.b32.xlu0 %v407, 56
      %v1202 = vpop.permute.xlu0 %1201
      %1203 = vrot.lane.b32.xlu0 %v408, 56
      %v1204 = vpop.permute.xlu0 %1203
      %1205 = vrot.lane.b32.xlu0 %v409, 56
      %v1206 = vpop.permute.xlu0 %1205
      %1207 = vrot.lane.b32.xlu0 %v410, 56
      %v1208 = vpop.permute.xlu0 %1207
      %1209 = vrot.lane.b32.xlu0 %v411, 56
      %v1210 = vpop.permute.xlu0 %1209
      %1211 = vrot.lane.b32.xlu0 %v412, 56
      %v1212 = vpop.permute.xlu0 %1211
      %1213 = vrot.lane.b32.xlu0 %v413, 56
      %v1214 = vpop.permute.xlu0 %1213
      %1215 = vrot.lane.b32.xlu0 %v414, 56
      %v1216 = vpop.permute.xlu0 %1215
      %1225 = vmatprep.subr.bf16.mxu0 0
      %1226 = vmatpush1.bf16.msra.mxu0 %v1216
      %1227 = vmatprep.subr.bf16.mxu0 0
      %1228 = vmatpush1.bf16.msra.mxu0 %v1214
      %1229 = vmatprep.subr.bf16.mxu0 0
      %1230 = vmatpush1.bf16.msra.mxu0 %v1212
      %1231 = vmatprep.subr.bf16.mxu0 0
      %1232 = vmatpush1.bf16.msra.mxu0 %v1210
      %1233 = vmatprep.subr.bf16.mxu0 0
      %1234 = vmatpush1.bf16.msra.mxu0 %v1208
      %1235 = vmatprep.subr.bf16.mxu0 0
      %1236 = vmatpush1.bf16.msra.mxu0 %v1206
      %1237 = vmatprep.subr.bf16.mxu0 0
      %1238 = vmatpush1.bf16.msra.mxu0 %v1204
      %1239 = vmatprep.subr.bf16.mxu0 0
      %1240 = vmatpush1.bf16.msra.mxu0 %v1202
      %1241 = vmatprep.subr.bf16.mxu0 0
      %1242 = vmatpush2.bf16.msra.mxu0 0
      %1243 = vmatprep.subr.bf16.mxu0 0
      %1244 = vmatpush2.bf16.msra.mxu0 0
      %1245 = vmatprep.subr.bf16.mxu0 0
      %1246 = vmatpush2.bf16.msra.mxu0 0
      %1247 = vmatprep.subr.bf16.mxu0 0
      %1248 = vmatpush2.bf16.msra.mxu0 0
      %1249 = vmatprep.subr.bf16.mxu0 0
      %1250 = vmatpush2.bf16.msra.mxu0 0
      %1251 = vmatprep.subr.bf16.mxu0 0
      %1252 = vmatpush2.bf16.msra.mxu0 0
      %1253 = vmatprep.subr.bf16.mxu0 0
      %1254 = vmatpush2.bf16.msra.mxu0 0
      %1255 = vmatprep.subr.bf16.mxu0 0
      %1256 = vmatpush2.bf16.msra.mxu0 0
      %1257 = vmatprep.mubr.bf16.mxu0 0
      %1258 = vmatmul.mubr.bf16.gmra.mxu0 %v1193
      %v1259 = vpop.f32.mrf.mxu0
      %v1260 = vadd.f32 0.0, %v1259
      %v1261 = vpop.f32.mrf.mxu0
      %v1262 = vpop.f32.mrf.mxu0
      %v1263 = vadd.f32 0.0, %v1262
      %v1264 = vpop.f32.mrf.mxu0
      %1265 = vmatprep.mubr.bf16.mxu0 0
      %1266 = vmatmul.mubr.bf16.gmra.mxu0 %v1194
      %v1267 = vpop.f32.mrf.mxu0
      %v1268 = vadd.f32 0.0, %v1267
      %v1269 = vpop.f32.mrf.mxu0
      %v1270 = vpop.f32.mrf.mxu0
      %v1271 = vadd.f32 0.0, %v1270
      %v1272 = vpop.f32.mrf.mxu0
      %1273 = vmatprep.mubr.bf16.mxu0 0
      %1274 = vmatmul.mubr.bf16.gmra.mxu0 %v1195
      %v1275 = vpop.f32.mrf.mxu0
      %v1276 = vadd.f32 0.0, %v1275
      %v1277 = vpop.f32.mrf.mxu0
      %v1278 = vpop.f32.mrf.mxu0
      %v1279 = vadd.f32 0.0, %v1278
      %v1280 = vpop.f32.mrf.mxu0
      %1281 = vmatprep.mubr.bf16.mxu0 0
      %1282 = vmatmul.mubr.bf16.gmra.mxu0 %v1196
      %v1283 = vpop.f32.mrf.mxu0
      %v1284 = vadd.f32 0.0, %v1283
      %v1285 = vpop.f32.mrf.mxu0
      %v1286 = vpop.f32.mrf.mxu0
      %v1287 = vadd.f32 0.0, %v1286
      %v1288 = vpop.f32.mrf.mxu0
      %1289 = vmatprep.mubr.bf16.mxu0 0
      %1290 = vmatmul.mubr.bf16.gmra.mxu0 %v1197
      %v1291 = vpop.f32.mrf.mxu0
      %v1292 = vadd.f32 0.0, %v1291
      %v1293 = vpop.f32.mrf.mxu0
      %v1294 = vpop.f32.mrf.mxu0
      %v1295 = vadd.f32 0.0, %v1294
      %v1296 = vpop.f32.mrf.mxu0
      %1297 = vmatprep.mubr.bf16.mxu0 0
      %1298 = vmatmul.mubr.bf16.gmra.mxu0 %v1198
      %v1299 = vpop.f32.mrf.mxu0
      %v1300 = vadd.f32 0.0, %v1299
      %v1301 = vpop.f32.mrf.mxu0
      %v1302 = vpop.f32.mrf.mxu0
      %v1303 = vadd.f32 0.0, %v1302
      %v1304 = vpop.f32.mrf.mxu0
      %1305 = vmatprep.mubr.bf16.mxu0 0
      %1306 = vmatmul.mubr.bf16.gmra.mxu0 %v1199
      %v1307 = vpop.f32.mrf.mxu0
      %v1308 = vadd.f32 0.0, %v1307
      %v1309 = vpop.f32.mrf.mxu0
      %v1310 = vpop.f32.mrf.mxu0
      %v1311 = vadd.f32 0.0, %v1310
      %v1312 = vpop.f32.mrf.mxu0
      %1313 = vmatprep.mubr.bf16.mxu0 0
      %1314 = vmatmul.mubr.bf16.gmra.mxu0 %v1200
      %v1315 = vpop.f32.mrf.mxu0
      %v1316 = vadd.f32 0.0, %v1315
      %v1317 = vpop.f32.mrf.mxu0
      %v1318 = vpop.f32.mrf.mxu0
      %v1319 = vadd.f32 0.0, %v1318
      %v1320 = vpop.f32.mrf.mxu0
      %1321 = vdwg.mxu0
      %1322 = vrot.lane.b32.xlu0 %v399, 112
      %v1323 = vpop.permute.xlu0 %1322
      %1324 = vrot.lane.b32.xlu0 %v400, 112
      %v1325 = vpop.permute.xlu0 %1324
      %1326 = vrot.lane.b32.xlu0 %v401, 112
      %v1327 = vpop.permute.xlu0 %1326
      %1328 = vrot.lane.b32.xlu0 %v402, 112
      %v1329 = vpop.permute.xlu0 %1328
      %1330 = vrot.lane.b32.xlu0 %v403, 112
      %v1331 = vpop.permute.xlu0 %1330
      %1332 = vrot.lane.b32.xlu0 %v404, 112
      %v1333 = vpop.permute.xlu0 %1332
      %1334 = vrot.lane.b32.xlu0 %v405, 112
      %v1335 = vpop.permute.xlu0 %1334
      %1336 = vrot.lane.b32.xlu0 %v406, 112
      %v1337 = vpop.permute.xlu0 %1336
      %1338 = vrot.lane.b32.xlu0 %v407, 80
      %v1339 = vpop.permute.xlu0 %1338
      %1340 = vrot.lane.b32.xlu0 %v408, 80
      %v1341 = vpop.permute.xlu0 %1340
      %1342 = vrot.lane.b32.xlu0 %v409, 80
      %v1343 = vpop.permute.xlu0 %1342
      %1344 = vrot.lane.b32.xlu0 %v410, 80
      %v1345 = vpop.permute.xlu0 %1344
      %1346 = vrot.lane.b32.xlu0 %v411, 80
      %v1347 = vpop.permute.xlu0 %1346
      %1348 = vrot.lane.b32.xlu0 %v412, 80
      %v1349 = vpop.permute.xlu0 %1348
      %1350 = vrot.lane.b32.xlu0 %v413, 80
      %v1351 = vpop.permute.xlu0 %1350
      %1352 = vrot.lane.b32.xlu0 %v414, 80
      %v1353 = vpop.permute.xlu0 %1352
      %v1355 = vsel %vm445, %v1323, 0
      %v1358 = vsel %vm445, %v1325, 0
      %v1361 = vsel %vm445, %v1327, 0
      %v1364 = vsel %vm445, %v1329, 0
      %v1367 = vsel %vm445, %v1331, 0
      %v1370 = vsel %vm445, %v1333, 0
      %v1373 = vsel %vm445, %v1335, 0
      %v1376 = vsel %vm445, %v1337, 0
      %v1379 = vsel %vm445, %v1339, 0
      %v1382 = vsel %vm445, %v1341, 0
      %v1385 = vsel %vm445, %v1343, 0
      %v1388 = vsel %vm445, %v1345, 0
      %v1391 = vsel %vm445, %v1347, 0
      %v1394 = vsel %vm445, %v1349, 0
      %v1397 = vsel %vm445, %v1351, 0
      %v1400 = vsel %vm445, %v1353, 0
      %1402 = vmatprep.subr.bf16.mxu0 0
      %1403 = vmatpush1.bf16.xpose.msra.mxu0 %v1400
      %1404 = vmatprep.subr.bf16.mxu0 0
      %1405 = vmatpush1.bf16.xpose.msra.mxu0 %v1397
      %1406 = vmatprep.subr.bf16.mxu0 0
      %1407 = vmatpush1.bf16.xpose.msra.mxu0 %v1394
      %1408 = vmatprep.subr.bf16.mxu0 0
      %1409 = vmatpush1.bf16.xpose.msra.mxu0 %v1391
      %1410 = vmatprep.subr.bf16.mxu0 0
      %1411 = vmatpush1.bf16.xpose.msra.mxu0 %v1388
      %1412 = vmatprep.subr.bf16.mxu0 0
      %1413 = vmatpush1.bf16.xpose.msra.mxu0 %v1385
      %1414 = vmatprep.subr.bf16.mxu0 0
      %1415 = vmatpush1.bf16.xpose.msra.mxu0 %v1382
      %1416 = vmatprep.subr.bf16.mxu0 0
      %1417 = vmatpush1.bf16.xpose.msra.mxu0 %v1379
      %1418 = vmatprep.subr.bf16.mxu0 0
      %1419 = vmatpush2.bf16.xpose.msra.mxu0 0
      %1420 = vmatprep.subr.bf16.mxu0 0
      %1421 = vmatpush2.bf16.xpose.msra.mxu0 0
      %1422 = vmatprep.subr.bf16.mxu0 0
      %1423 = vmatpush2.bf16.xpose.msra.mxu0 0
      %1424 = vmatprep.subr.bf16.mxu0 0
      %1425 = vmatpush2.bf16.xpose.msra.mxu0 0
      %1426 = vmatprep.subr.bf16.mxu0 0
      %1427 = vmatpush2.bf16.xpose.msra.mxu0 0
      %1428 = vmatprep.subr.bf16.mxu0 0
      %1429 = vmatpush2.bf16.xpose.msra.mxu0 0
      %1430 = vmatprep.subr.bf16.mxu0 0
      %1431 = vmatpush2.bf16.xpose.msra.mxu0 0
      %1432 = vmatprep.subr.bf16.mxu0 0
      %1433 = vmatpush2.bf16.xpose.msra.mxu0 0
      %1434 = vmatprep.mubr.bf16.mxu0 0
      %1435 = vmatmul.mubr.bf16.gmra.mxu0 %v1355
      %v1436 = vpop.f32.mrf.mxu0
      %v1437 = vadd.f32 %v419, %v1436
      %v1438 = vpop.f32.mrf.mxu0
      %v1439 = vpop.f32.mrf.mxu0
      %v1440 = vadd.f32 %v419, %v1439
      %v1441 = vpop.f32.mrf.mxu0
      %1442 = vmatprep.mubr.bf16.mxu0 0
      %1443 = vmatmul.mubr.bf16.gmra.mxu0 %v1358
      %v1444 = vpop.f32.mrf.mxu0
      %v1445 = vadd.f32 %v419, %v1444
      %v1446 = vpop.f32.mrf.mxu0
      %v1447 = vpop.f32.mrf.mxu0
      %v1448 = vadd.f32 %v419, %v1447
      %v1449 = vpop.f32.mrf.mxu0
      %1450 = vmatprep.mubr.bf16.mxu0 0
      %1451 = vmatmul.mubr.bf16.gmra.mxu0 %v1361
      %v1452 = vpop.f32.mrf.mxu0
      %v1453 = vadd.f32 %v419, %v1452
      %v1454 = vpop.f32.mrf.mxu0
      %v1455 = vpop.f32.mrf.mxu0
      %v1456 = vadd.f32 %v419, %v1455
      %v1457 = vpop.f32.mrf.mxu0
      %1458 = vmatprep.mubr.bf16.mxu0 0
      %1459 = vmatmul.mubr.bf16.gmra.mxu0 %v1364
      %v1460 = vpop.f32.mrf.mxu0
      %v1461 = vadd.f32 %v419, %v1460
      %v1462 = vpop.f32.mrf.mxu0
      %v1463 = vpop.f32.mrf.mxu0
      %v1464 = vadd.f32 %v419, %v1463
      %v1465 = vpop.f32.mrf.mxu0
      %1466 = vmatprep.mubr.bf16.mxu0 0
      %1467 = vmatmul.mubr.bf16.gmra.mxu0 %v1367
      %v1468 = vpop.f32.mrf.mxu0
      %v1469 = vadd.f32 %v419, %v1468
      %v1470 = vpop.f32.mrf.mxu0
      %v1471 = vpop.f32.mrf.mxu0
      %v1472 = vadd.f32 %v419, %v1471
      %v1473 = vpop.f32.mrf.mxu0
      %1474 = vmatprep.mubr.bf16.mxu0 0
      %1475 = vmatmul.mubr.bf16.gmra.mxu0 %v1370
      %v1476 = vpop.f32.mrf.mxu0
      %v1477 = vadd.f32 %v419, %v1476
      %v1478 = vpop.f32.mrf.mxu0
      %v1479 = vpop.f32.mrf.mxu0
      %v1480 = vadd.f32 %v419, %v1479
      %v1481 = vpop.f32.mrf.mxu0
      %1482 = vmatprep.mubr.bf16.mxu0 0
      %1483 = vmatmul.mubr.bf16.gmra.mxu0 %v1373
      %v1484 = vpop.f32.mrf.mxu0
      %v1485 = vadd.f32 %v419, %v1484
      %v1486 = vpop.f32.mrf.mxu0
      %v1487 = vpop.f32.mrf.mxu0
      %v1488 = vadd.f32 %v419, %v1487
      %v1489 = vpop.f32.mrf.mxu0
      %1490 = vmatprep.mubr.bf16.mxu0 0
      %1491 = vmatmul.mubr.bf16.gmra.mxu0 %v1376
      %v1492 = vpop.f32.mrf.mxu0
      %v1493 = vadd.f32 %v419, %v1492
      %v1494 = vpop.f32.mrf.mxu0
      %v1495 = vpop.f32.mrf.mxu0
      %v1496 = vadd.f32 %v419, %v1495
      %v1497 = vpop.f32.mrf.mxu0
      %1498 = vdwg.mxu0
      %1499 = vmax.xlane.f32.xlu0 %v1437
      %v1500 = vpop.xlane.xlu0 %1499
      %1501 = vmax.xlane.f32.xlu0 %v1440
      %v1502 = vpop.xlane.xlu0 %1501
      %1503 = vmax.xlane.f32.xlu0 %v1445
      %v1504 = vpop.xlane.xlu0 %1503
      %1505 = vmax.xlane.f32.xlu0 %v1448
      %v1506 = vpop.xlane.xlu0 %1505
      %1507 = vmax.xlane.f32.xlu0 %v1453
      %v1508 = vpop.xlane.xlu0 %1507
      %1509 = vmax.xlane.f32.xlu0 %v1456
      %v1510 = vpop.xlane.xlu0 %1509
      %1511 = vmax.xlane.f32.xlu0 %v1461
      %v1512 = vpop.xlane.xlu0 %1511
      %1513 = vmax.xlane.f32.xlu0 %v1464
      %v1514 = vpop.xlane.xlu0 %1513
      %1515 = vmax.xlane.f32.xlu0 %v1469
      %v1516 = vpop.xlane.xlu0 %1515
      %1517 = vmax.xlane.f32.xlu0 %v1472
      %v1518 = vpop.xlane.xlu0 %1517
      %1519 = vmax.xlane.f32.xlu0 %v1477
      %v1520 = vpop.xlane.xlu0 %1519
      %1521 = vmax.xlane.f32.xlu0 %v1480
      %v1522 = vpop.xlane.xlu0 %1521
      %1523 = vmax.xlane.f32.xlu0 %v1485
      %v1524 = vpop.xlane.xlu0 %1523
      %1525 = vmax.xlane.f32.xlu0 %v1488
      %v1526 = vpop.xlane.xlu0 %1525
      %1527 = vmax.xlane.f32.xlu0 %v1493
      %v1528 = vpop.xlane.xlu0 %1527
      %1529 = vmax.xlane.f32.xlu0 %v1496
      %v1530 = vpop.xlane.xlu0 %1529
      %v1531 = vsub.f32 %v1437, %v1500
      %v1532 = vsub.f32 %v1440, %v1502
      %v1533 = vsub.f32 %v1445, %v1504
      %v1534 = vsub.f32 %v1448, %v1506
      %v1535 = vsub.f32 %v1453, %v1508
      %v1536 = vsub.f32 %v1456, %v1510
      %v1537 = vsub.f32 %v1461, %v1512
      %v1538 = vsub.f32 %v1464, %v1514
      %v1539 = vsub.f32 %v1469, %v1516
      %v1540 = vsub.f32 %v1472, %v1518
      %v1541 = vsub.f32 %v1477, %v1520
      %v1542 = vsub.f32 %v1480, %v1522
      %v1543 = vsub.f32 %v1485, %v1524
      %v1544 = vsub.f32 %v1488, %v1526
      %v1545 = vsub.f32 %v1493, %v1528
      %v1546 = vsub.f32 %v1496, %v1530
      %v1547 = vmul.f32 %v1531, 1.442695
      %v1548 = vpow.pop %v1547
      %v1549 = vmul.f32 %v1532, 1.442695
      %v1550 = vpow.pop %v1549
      %v1551 = vmul.f32 %v1533, 1.442695
      %v1552 = vpow.pop %v1551
      %v1553 = vmul.f32 %v1534, 1.442695
      %v1554 = vpow.pop %v1553
      %v1555 = vmul.f32 %v1535, 1.442695
      %v1556 = vpow.pop %v1555
      %v1557 = vmul.f32 %v1536, 1.442695
      %v1558 = vpow.pop %v1557
      %v1559 = vmul.f32 %v1537, 1.442695
      %v1560 = vpow.pop %v1559
      %v1561 = vmul.f32 %v1538, 1.442695
      %v1562 = vpow.pop %v1561
      %v1563 = vmul.f32 %v1539, 1.442695
      %v1564 = vpow.pop %v1563
      %v1565 = vmul.f32 %v1540, 1.442695
      %v1566 = vpow.pop %v1565
      %v1567 = vmul.f32 %v1541, 1.442695
      %v1568 = vpow.pop %v1567
      %v1569 = vmul.f32 %v1542, 1.442695
      %v1570 = vpow.pop %v1569
      %v1571 = vmul.f32 %v1543, 1.442695
      %v1572 = vpow.pop %v1571
      %v1573 = vmul.f32 %v1544, 1.442695
      %v1574 = vpow.pop %v1573
      %v1575 = vmul.f32 %v1545, 1.442695
      %v1576 = vpow.pop %v1575
      %v1577 = vmul.f32 %v1546, 1.442695
      %v1578 = vpow.pop %v1577
      %1579 = vadd.xlane.f32.xlu0 %v1548
      %v1580 = vpop.xlane.xlu0 %1579
      %1581 = vadd.xlane.f32.xlu0 %v1550
      %v1582 = vpop.xlane.xlu0 %1581
      %1583 = vadd.xlane.f32.xlu0 %v1552
      %v1584 = vpop.xlane.xlu0 %1583
      %1585 = vadd.xlane.f32.xlu0 %v1554
      %v1586 = vpop.xlane.xlu0 %1585
      %1587 = vadd.xlane.f32.xlu0 %v1556
      %v1588 = vpop.xlane.xlu0 %1587
      %1589 = vadd.xlane.f32.xlu0 %v1558
      %v1590 = vpop.xlane.xlu0 %1589
      %1591 = vadd.xlane.f32.xlu0 %v1560
      %v1592 = vpop.xlane.xlu0 %1591
      %1593 = vadd.xlane.f32.xlu0 %v1562
      %v1594 = vpop.xlane.xlu0 %1593
      %1595 = vadd.xlane.f32.xlu0 %v1564
      %v1596 = vpop.xlane.xlu0 %1595
      %1597 = vadd.xlane.f32.xlu0 %v1566
      %v1598 = vpop.xlane.xlu0 %1597
      %1599 = vadd.xlane.f32.xlu0 %v1568
      %v1600 = vpop.xlane.xlu0 %1599
      %1601 = vadd.xlane.f32.xlu0 %v1570
      %v1602 = vpop.xlane.xlu0 %1601
      %1603 = vadd.xlane.f32.xlu0 %v1572
      %v1604 = vpop.xlane.xlu0 %1603
      %1605 = vadd.xlane.f32.xlu0 %v1574
      %v1606 = vpop.xlane.xlu0 %1605
      %1607 = vadd.xlane.f32.xlu0 %v1576
      %v1608 = vpop.xlane.xlu0 %1607
      %1609 = vadd.xlane.f32.xlu0 %v1578
      %v1610 = vpop.xlane.xlu0 %1609
      %v1611 = vrcp.pop %v1580
      %v1612 = vrcp.pop %v1582
      %v1613 = vrcp.pop %v1584
      %v1614 = vrcp.pop %v1586
      %v1615 = vrcp.pop %v1588
      %v1616 = vrcp.pop %v1590
      %v1617 = vrcp.pop %v1592
      %v1618 = vrcp.pop %v1594
      %v1619 = vrcp.pop %v1596
      %v1620 = vrcp.pop %v1598
      %v1621 = vrcp.pop %v1600
      %v1622 = vrcp.pop %v1602
      %v1623 = vrcp.pop %v1604
      %v1624 = vrcp.pop %v1606
      %v1625 = vrcp.pop %v1608
      %v1626 = vrcp.pop %v1610
      %v1627 = vmul.f32 %v1548, %v1611
      %v1628 = vmul.f32 %v1550, %v1612
      %v1629 = vmul.f32 %v1552, %v1613
      %v1630 = vmul.f32 %v1554, %v1614
      %v1631 = vmul.f32 %v1556, %v1615
      %v1632 = vmul.f32 %v1558, %v1616
      %v1633 = vmul.f32 %v1560, %v1617
      %v1634 = vmul.f32 %v1562, %v1618
      %v1635 = vmul.f32 %v1564, %v1619
      %v1636 = vmul.f32 %v1566, %v1620
      %v1637 = vmul.f32 %v1568, %v1621
      %v1638 = vmul.f32 %v1570, %v1622
      %v1639 = vmul.f32 %v1572, %v1623
      %v1640 = vmul.f32 %v1574, %v1624
      %v1641 = vmul.f32 %v1576, %v1625
      %v1642 = vmul.f32 %v1578, %v1626
      %v1643 = vpack.c.bf16 %v1628, %v1627
      %v1644 = vpack.c.bf16 %v1630, %v1629
      %v1645 = vpack.c.bf16 %v1632, %v1631
      %v1646 = vpack.c.bf16 %v1634, %v1633
      %v1647 = vpack.c.bf16 %v1636, %v1635
      %v1648 = vpack.c.bf16 %v1638, %v1637
      %v1649 = vpack.c.bf16 %v1640, %v1639
      %v1650 = vpack.c.bf16 %v1642, %v1641
      %1651 = vrot.lane.b32.xlu0 %v407, 48
      %v1652 = vpop.permute.xlu0 %1651
      %1653 = vrot.lane.b32.xlu0 %v408, 48
      %v1654 = vpop.permute.xlu0 %1653
      %1655 = vrot.lane.b32.xlu0 %v409, 48
      %v1656 = vpop.permute.xlu0 %1655
      %1657 = vrot.lane.b32.xlu0 %v410, 48
      %v1658 = vpop.permute.xlu0 %1657
      %1659 = vrot.lane.b32.xlu0 %v411, 48
      %v1660 = vpop.permute.xlu0 %1659
      %1661 = vrot.lane.b32.xlu0 %v412, 48
      %v1662 = vpop.permute.xlu0 %1661
      %1663 = vrot.lane.b32.xlu0 %v413, 48
      %v1664 = vpop.permute.xlu0 %1663
      %1665 = vrot.lane.b32.xlu0 %v414, 48
      %v1666 = vpop.permute.xlu0 %1665
      %1675 = vmatprep.subr.bf16.mxu0 0
      %1676 = vmatpush1.bf16.msra.mxu0 %v1666
      %1677 = vmatprep.subr.bf16.mxu0 0
      %1678 = vmatpush1.bf16.msra.mxu0 %v1664
      %1679 = vmatprep.subr.bf16.mxu0 0
      %1680 = vmatpush1.bf16.msra.mxu0 %v1662
      %1681 = vmatprep.subr.bf16.mxu0 0
      %1682 = vmatpush1.bf16.msra.mxu0 %v1660
      %1683 = vmatprep.subr.bf16.mxu0 0
      %1684 = vmatpush1.bf16.msra.mxu0 %v1658
      %1685 = vmatprep.subr.bf16.mxu0 0
      %1686 = vmatpush1.bf16.msra.mxu0 %v1656
      %1687 = vmatprep.subr.bf16.mxu0 0
      %1688 = vmatpush1.bf16.msra.mxu0 %v1654
      %1689 = vmatprep.subr.bf16.mxu0 0
      %1690 = vmatpush1.bf16.msra.mxu0 %v1652
      %1691 = vmatprep.subr.bf16.mxu0 0
      %1692 = vmatpush2.bf16.msra.mxu0 0
      %1693 = vmatprep.subr.bf16.mxu0 0
      %1694 = vmatpush2.bf16.msra.mxu0 0
      %1695 = vmatprep.subr.bf16.mxu0 0
      %1696 = vmatpush2.bf16.msra.mxu0 0
      %1697 = vmatprep.subr.bf16.mxu0 0
      %1698 = vmatpush2.bf16.msra.mxu0 0
      %1699 = vmatprep.subr.bf16.mxu0 0
      %1700 = vmatpush2.bf16.msra.mxu0 0
      %1701 = vmatprep.subr.bf16.mxu0 0
      %1702 = vmatpush2.bf16.msra.mxu0 0
      %1703 = vmatprep.subr.bf16.mxu0 0
      %1704 = vmatpush2.bf16.msra.mxu0 0
      %1705 = vmatprep.subr.bf16.mxu0 0
      %1706 = vmatpush2.bf16.msra.mxu0 0
      %1707 = vmatprep.mubr.bf16.mxu0 0
      %1708 = vmatmul.mubr.bf16.gmra.mxu0 %v1643
      %v1709 = vpop.f32.mrf.mxu0
      %v1710 = vadd.f32 0.0, %v1709
      %v1711 = vpop.f32.mrf.mxu0
      %v1712 = vpop.f32.mrf.mxu0
      %v1713 = vadd.f32 0.0, %v1712
      %v1714 = vpop.f32.mrf.mxu0
      %1715 = vmatprep.mubr.bf16.mxu0 0
      %1716 = vmatmul.mubr.bf16.gmra.mxu0 %v1644
      %v1717 = vpop.f32.mrf.mxu0
      %v1718 = vadd.f32 0.0, %v1717
      %v1719 = vpop.f32.mrf.mxu0
      %v1720 = vpop.f32.mrf.mxu0
      %v1721 = vadd.f32 0.0, %v1720
      %v1722 = vpop.f32.mrf.mxu0
      %1723 = vmatprep.mubr.bf16.mxu0 0
      %1724 = vmatmul.mubr.bf16.gmra.mxu0 %v1645
      %v1725 = vpop.f32.mrf.mxu0
      %v1726 = vadd.f32 0.0, %v1725
      %v1727 = vpop.f32.mrf.mxu0
      %v1728 = vpop.f32.mrf.mxu0
      %v1729 = vadd.f32 0.0, %v1728
      %v1730 = vpop.f32.mrf.mxu0
      %1731 = vmatprep.mubr.bf16.mxu0 0
      %1732 = vmatmul.mubr.bf16.gmra.mxu0 %v1646
      %v1733 = vpop.f32.mrf.mxu0
      %v1734 = vadd.f32 0.0, %v1733
      %v1735 = vpop.f32.mrf.mxu0
      %v1736 = vpop.f32.mrf.mxu0
      %v1737 = vadd.f32 0.0, %v1736
      %v1738 = vpop.f32.mrf.mxu0
      %1739 = vmatprep.mubr.bf16.mxu0 0
      %1740 = vmatmul.mubr.bf16.gmra.mxu0 %v1647
      %v1741 = vpop.f32.mrf.mxu0
      %v1742 = vadd.f32 0.0, %v1741
      %v1743 = vpop.f32.mrf.mxu0
      %v1744 = vpop.f32.mrf.mxu0
      %v1745 = vadd.f32 0.0, %v1744
      %v1746 = vpop.f32.mrf.mxu0
      %1747 = vmatprep.mubr.bf16.mxu0 0
      %1748 = vmatmul.mubr.bf16.gmra.mxu0 %v1648
      %v1749 = vpop.f32.mrf.mxu0
      %v1750 = vadd.f32 0.0, %v1749
      %v1751 = vpop.f32.mrf.mxu0
      %v1752 = vpop.f32.mrf.mxu0
      %v1753 = vadd.f32 0.0, %v1752
      %v1754 = vpop.f32.mrf.mxu0
      %1755 = vmatprep.mubr.bf16.mxu0 0
      %1756 = vmatmul.mubr.bf16.gmra.mxu0 %v1649
      %v1757 = vpop.f32.mrf.mxu0
      %v1758 = vadd.f32 0.0, %v1757
      %v1759 = vpop.f32.mrf.mxu0
      %v1760 = vpop.f32.mrf.mxu0
      %v1761 = vadd.f32 0.0, %v1760
      %v1762 = vpop.f32.mrf.mxu0
      %1763 = vmatprep.mubr.bf16.mxu0 0
      %1764 = vmatmul.mubr.bf16.gmra.mxu0 %v1650
      %v1765 = vpop.f32.mrf.mxu0
      %v1766 = vadd.f32 0.0, %v1765
      %v1767 = vpop.f32.mrf.mxu0
      %v1768 = vpop.f32.mrf.mxu0
      %v1769 = vadd.f32 0.0, %v1768
      %v1770 = vpop.f32.mrf.mxu0
      %1771 = vdwg.mxu0
      %1772 = vrot.lane.b32.xlu0 %v399, 104
      %v1773 = vpop.permute.xlu0 %1772
      %1774 = vrot.lane.b32.xlu0 %v400, 104
      %v1775 = vpop.permute.xlu0 %1774
      %1776 = vrot.lane.b32.xlu0 %v401, 104
      %v1777 = vpop.permute.xlu0 %1776
      %1778 = vrot.lane.b32.xlu0 %v402, 104
      %v1779 = vpop.permute.xlu0 %1778
      %1780 = vrot.lane.b32.xlu0 %v403, 104
      %v1781 = vpop.permute.xlu0 %1780
      %1782 = vrot.lane.b32.xlu0 %v404, 104
      %v1783 = vpop.permute.xlu0 %1782
      %1784 = vrot.lane.b32.xlu0 %v405, 104
      %v1785 = vpop.permute.xlu0 %1784
      %1786 = vrot.lane.b32.xlu0 %v406, 104
      %v1787 = vpop.permute.xlu0 %1786
      %1788 = vrot.lane.b32.xlu0 %v407, 72
      %v1789 = vpop.permute.xlu0 %1788
      %1790 = vrot.lane.b32.xlu0 %v408, 72
      %v1791 = vpop.permute.xlu0 %1790
      %1792 = vrot.lane.b32.xlu0 %v409, 72
      %v1793 = vpop.permute.xlu0 %1792
      %1794 = vrot.lane.b32.xlu0 %v410, 72
      %v1795 = vpop.permute.xlu0 %1794
      %1796 = vrot.lane.b32.xlu0 %v411, 72
      %v1797 = vpop.permute.xlu0 %1796
      %1798 = vrot.lane.b32.xlu0 %v412, 72
      %v1799 = vpop.permute.xlu0 %1798
      %1800 = vrot.lane.b32.xlu0 %v413, 72
      %v1801 = vpop.permute.xlu0 %1800
      %1802 = vrot.lane.b32.xlu0 %v414, 72
      %v1803 = vpop.permute.xlu0 %1802
      %v1805 = vsel %vm445, %v1773, 0
      %v1808 = vsel %vm445, %v1775, 0
      %v1811 = vsel %vm445, %v1777, 0
      %v1814 = vsel %vm445, %v1779, 0
      %v1817 = vsel %vm445, %v1781, 0
      %v1820 = vsel %vm445, %v1783, 0
      %v1823 = vsel %vm445, %v1785, 0
      %v1826 = vsel %vm445, %v1787, 0
      %v1829 = vsel %vm445, %v1789, 0
      %v1832 = vsel %vm445, %v1791, 0
      %v1835 = vsel %vm445, %v1793, 0
      %v1838 = vsel %vm445, %v1795, 0
      %v1841 = vsel %vm445, %v1797, 0
      %v1844 = vsel %vm445, %v1799, 0
      %v1847 = vsel %vm445, %v1801, 0
      %v1850 = vsel %vm445, %v1803, 0
      %1852 = vmatprep.subr.bf16.mxu0 0
      %1853 = vmatpush1.bf16.xpose.msra.mxu0 %v1850
      %1854 = vmatprep.subr.bf16.mxu0 0
      %1855 = vmatpush1.bf16.xpose.msra.mxu0 %v1847
      %1856 = vmatprep.subr.bf16.mxu0 0
      %1857 = vmatpush1.bf16.xpose.msra.mxu0 %v1844
      %1858 = vmatprep.subr.bf16.mxu0 0
      %1859 = vmatpush1.bf16.xpose.msra.mxu0 %v1841
      %1860 = vmatprep.subr.bf16.mxu0 0
      %1861 = vmatpush1.bf16.xpose.msra.mxu0 %v1838
      %1862 = vmatprep.subr.bf16.mxu0 0
      %1863 = vmatpush1.bf16.xpose.msra.mxu0 %v1835
      %1864 = vmatprep.subr.bf16.mxu0 0
      %1865 = vmatpush1.bf16.xpose.msra.mxu0 %v1832
      %1866 = vmatprep.subr.bf16.mxu0 0
      %1867 = vmatpush1.bf16.xpose.msra.mxu0 %v1829
      %1868 = vmatprep.subr.bf16.mxu0 0
      %1869 = vmatpush2.bf16.xpose.msra.mxu0 0
      %1870 = vmatprep.subr.bf16.mxu0 0
      %1871 = vmatpush2.bf16.xpose.msra.mxu0 0
      %1872 = vmatprep.subr.bf16.mxu0 0
      %1873 = vmatpush2.bf16.xpose.msra.mxu0 0
      %1874 = vmatprep.subr.bf16.mxu0 0
      %1875 = vmatpush2.bf16.xpose.msra.mxu0 0
      %1876 = vmatprep.subr.bf16.mxu0 0
      %1877 = vmatpush2.bf16.xpose.msra.mxu0 0
      %1878 = vmatprep.subr.bf16.mxu0 0
      %1879 = vmatpush2.bf16.xpose.msra.mxu0 0
      %1880 = vmatprep.subr.bf16.mxu0 0
      %1881 = vmatpush2.bf16.xpose.msra.mxu0 0
      %1882 = vmatprep.subr.bf16.mxu0 0
      %1883 = vmatpush2.bf16.xpose.msra.mxu0 0
      %1884 = vmatprep.mubr.bf16.mxu0 0
      %1885 = vmatmul.mubr.bf16.gmra.mxu0 %v1805
      %v1886 = vpop.f32.mrf.mxu0
      %v1887 = vadd.f32 %v419, %v1886
      %v1888 = vpop.f32.mrf.mxu0
      %v1889 = vpop.f32.mrf.mxu0
      %v1890 = vadd.f32 %v419, %v1889
      %v1891 = vpop.f32.mrf.mxu0
      %1892 = vmatprep.mubr.bf16.mxu0 0
      %1893 = vmatmul.mubr.bf16.gmra.mxu0 %v1808
      %v1894 = vpop.f32.mrf.mxu0
      %v1895 = vadd.f32 %v419, %v1894
      %v1896 = vpop.f32.mrf.mxu0
      %v1897 = vpop.f32.mrf.mxu0
      %v1898 = vadd.f32 %v419, %v1897
      %v1899 = vpop.f32.mrf.mxu0
      %1900 = vmatprep.mubr.bf16.mxu0 0
      %1901 = vmatmul.mubr.bf16.gmra.mxu0 %v1811
      %v1902 = vpop.f32.mrf.mxu0
      %v1903 = vadd.f32 %v419, %v1902
      %v1904 = vpop.f32.mrf.mxu0
      %v1905 = vpop.f32.mrf.mxu0
      %v1906 = vadd.f32 %v419, %v1905
      %v1907 = vpop.f32.mrf.mxu0
      %1908 = vmatprep.mubr.bf16.mxu0 0
      %1909 = vmatmul.mubr.bf16.gmra.mxu0 %v1814
      %v1910 = vpop.f32.mrf.mxu0
      %v1911 = vadd.f32 %v419, %v1910
      %v1912 = vpop.f32.mrf.mxu0
      %v1913 = vpop.f32.mrf.mxu0
      %v1914 = vadd.f32 %v419, %v1913
      %v1915 = vpop.f32.mrf.mxu0
      %1916 = vmatprep.mubr.bf16.mxu0 0
      %1917 = vmatmul.mubr.bf16.gmra.mxu0 %v1817
      %v1918 = vpop.f32.mrf.mxu0
      %v1919 = vadd.f32 %v419, %v1918
      %v1920 = vpop.f32.mrf.mxu0
      %v1921 = vpop.f32.mrf.mxu0
      %v1922 = vadd.f32 %v419, %v1921
      %v1923 = vpop.f32.mrf.mxu0
      %1924 = vmatprep.mubr.bf16.mxu0 0
      %1925 = vmatmul.mubr.bf16.gmra.mxu0 %v1820
      %v1926 = vpop.f32.mrf.mxu0
      %v1927 = vadd.f32 %v419, %v1926
      %v1928 = vpop.f32.mrf.mxu0
      %v1929 = vpop.f32.mrf.mxu0
      %v1930 = vadd.f32 %v419, %v1929
      %v1931 = vpop.f32.mrf.mxu0
      %1932 = vmatprep.mubr.bf16.mxu0 0
      %1933 = vmatmul.mubr.bf16.gmra.mxu0 %v1823
      %v1934 = vpop.f32.mrf.mxu0
      %v1935 = vadd.f32 %v419, %v1934
      %v1936 = vpop.f32.mrf.mxu0
      %v1937 = vpop.f32.mrf.mxu0
      %v1938 = vadd.f32 %v419, %v1937
      %v1939 = vpop.f32.mrf.mxu0
      %1940 = vmatprep.mubr.bf16.mxu0 0
      %1941 = vmatmul.mubr.bf16.gmra.mxu0 %v1826
      %v1942 = vpop.f32.mrf.mxu0
      %v1943 = vadd.f32 %v419, %v1942
      %v1944 = vpop.f32.mrf.mxu0
      %v1945 = vpop.f32.mrf.mxu0
      %v1946 = vadd.f32 %v419, %v1945
      %v1947 = vpop.f32.mrf.mxu0
      %1948 = vdwg.mxu0
      %1949 = vmax.xlane.f32.xlu0 %v1887
      %v1950 = vpop.xlane.xlu0 %1949
      %1951 = vmax.xlane.f32.xlu0 %v1890
      %v1952 = vpop.xlane.xlu0 %1951
      %1953 = vmax.xlane.f32.xlu0 %v1895
      %v1954 = vpop.xlane.xlu0 %1953
      %1955 = vmax.xlane.f32.xlu0 %v1898
      %v1956 = vpop.xlane.xlu0 %1955
      %1957 = vmax.xlane.f32.xlu0 %v1903
      %v1958 = vpop.xlane.xlu0 %1957
      %1959 = vmax.xlane.f32.xlu0 %v1906
      %v1960 = vpop.xlane.xlu0 %1959
      %1961 = vmax.xlane.f32.xlu0 %v1911
      %v1962 = vpop.xlane.xlu0 %1961
      %1963 = vmax.xlane.f32.xlu0 %v1914
      %v1964 = vpop.xlane.xlu0 %1963
      %1965 = vmax.xlane.f32.xlu0 %v1919
      %v1966 = vpop.xlane.xlu0 %1965
      %1967 = vmax.xlane.f32.xlu0 %v1922
      %v1968 = vpop.xlane.xlu0 %1967
      %1969 = vmax.xlane.f32.xlu0 %v1927
      %v1970 = vpop.xlane.xlu0 %1969
      %1971 = vmax.xlane.f32.xlu0 %v1930
      %v1972 = vpop.xlane.xlu0 %1971
      %1973 = vmax.xlane.f32.xlu0 %v1935
      %v1974 = vpop.xlane.xlu0 %1973
      %1975 = vmax.xlane.f32.xlu0 %v1938
      %v1976 = vpop.xlane.xlu0 %1975
      %1977 = vmax.xlane.f32.xlu0 %v1943
      %v1978 = vpop.xlane.xlu0 %1977
      %1979 = vmax.xlane.f32.xlu0 %v1946
      %v1980 = vpop.xlane.xlu0 %1979
      %v1981 = vsub.f32 %v1887, %v1950
      %v1982 = vsub.f32 %v1890, %v1952
      %v1983 = vsub.f32 %v1895, %v1954
      %v1984 = vsub.f32 %v1898, %v1956
      %v1985 = vsub.f32 %v1903, %v1958
      %v1986 = vsub.f32 %v1906, %v1960
      %v1987 = vsub.f32 %v1911, %v1962
      %v1988 = vsub.f32 %v1914, %v1964
      %v1989 = vsub.f32 %v1919, %v1966
      %v1990 = vsub.f32 %v1922, %v1968
      %v1991 = vsub.f32 %v1927, %v1970
      %v1992 = vsub.f32 %v1930, %v1972
      %v1993 = vsub.f32 %v1935, %v1974
      %v1994 = vsub.f32 %v1938, %v1976
      %v1995 = vsub.f32 %v1943, %v1978
      %v1996 = vsub.f32 %v1946, %v1980
      %v1997 = vmul.f32 %v1981, 1.442695
      %v1998 = vpow.pop %v1997
      %v1999 = vmul.f32 %v1982, 1.442695
      %v2000 = vpow.pop %v1999
      %v2001 = vmul.f32 %v1983, 1.442695
      %v2002 = vpow.pop %v2001
      %v2003 = vmul.f32 %v1984, 1.442695
      %v2004 = vpow.pop %v2003
      %v2005 = vmul.f32 %v1985, 1.442695
      %v2006 = vpow.pop %v2005
      %v2007 = vmul.f32 %v1986, 1.442695
      %v2008 = vpow.pop %v2007
      %v2009 = vmul.f32 %v1987, 1.442695
      %v2010 = vpow.pop %v2009
      %v2011 = vmul.f32 %v1988, 1.442695
      %v2012 = vpow.pop %v2011
      %v2013 = vmul.f32 %v1989, 1.442695
      %v2014 = vpow.pop %v2013
      %v2015 = vmul.f32 %v1990, 1.442695
      %v2016 = vpow.pop %v2015
      %v2017 = vmul.f32 %v1991, 1.442695
      %v2018 = vpow.pop %v2017
      %v2019 = vmul.f32 %v1992, 1.442695
      %v2020 = vpow.pop %v2019
      %v2021 = vmul.f32 %v1993, 1.442695
      %v2022 = vpow.pop %v2021
      %v2023 = vmul.f32 %v1994, 1.442695
      %v2024 = vpow.pop %v2023
      %v2025 = vmul.f32 %v1995, 1.442695
      %v2026 = vpow.pop %v2025
      %v2027 = vmul.f32 %v1996, 1.442695
      %v2028 = vpow.pop %v2027
      %2029 = vadd.xlane.f32.xlu0 %v1998
      %v2030 = vpop.xlane.xlu0 %2029
      %2031 = vadd.xlane.f32.xlu0 %v2000
      %v2032 = vpop.xlane.xlu0 %2031
      %2033 = vadd.xlane.f32.xlu0 %v2002
      %v2034 = vpop.xlane.xlu0 %2033
      %2035 = vadd.xlane.f32.xlu0 %v2004
      %v2036 = vpop.xlane.xlu0 %2035
      %2037 = vadd.xlane.f32.xlu0 %v2006
      %v2038 = vpop.xlane.xlu0 %2037
      %2039 = vadd.xlane.f32.xlu0 %v2008
      %v2040 = vpop.xlane.xlu0 %2039
      %2041 = vadd.xlane.f32.xlu0 %v2010
      %v2042 = vpop.xlane.xlu0 %2041
      %2043 = vadd.xlane.f32.xlu0 %v2012
      %v2044 = vpop.xlane.xlu0 %2043
      %2045 = vadd.xlane.f32.xlu0 %v2014
      %v2046 = vpop.xlane.xlu0 %2045
      %2047 = vadd.xlane.f32.xlu0 %v2016
      %v2048 = vpop.xlane.xlu0 %2047
      %2049 = vadd.xlane.f32.xlu0 %v2018
      %v2050 = vpop.xlane.xlu0 %2049
      %2051 = vadd.xlane.f32.xlu0 %v2020
      %v2052 = vpop.xlane.xlu0 %2051
      %2053 = vadd.xlane.f32.xlu0 %v2022
      %v2054 = vpop.xlane.xlu0 %2053
      %2055 = vadd.xlane.f32.xlu0 %v2024
      %v2056 = vpop.xlane.xlu0 %2055
      %2057 = vadd.xlane.f32.xlu0 %v2026
      %v2058 = vpop.xlane.xlu0 %2057
      %2059 = vadd.xlane.f32.xlu0 %v2028
      %v2060 = vpop.xlane.xlu0 %2059
      %v2061 = vrcp.pop %v2030
      %v2062 = vrcp.pop %v2032
      %v2063 = vrcp.pop %v2034
      %v2064 = vrcp.pop %v2036
      %v2065 = vrcp.pop %v2038
      %v2066 = vrcp.pop %v2040
      %v2067 = vrcp.pop %v2042
      %v2068 = vrcp.pop %v2044
      %v2069 = vrcp.pop %v2046
      %v2070 = vrcp.pop %v2048
      %v2071 = vrcp.pop %v2050
      %v2072 = vrcp.pop %v2052
      %v2073 = vrcp.pop %v2054
      %v2074 = vrcp.pop %v2056
      %v2075 = vrcp.pop %v2058
      %v2076 = vrcp.pop %v2060
      %v2077 = vmul.f32 %v1998, %v2061
      %v2078 = vmul.f32 %v2000, %v2062
      %v2079 = vmul.f32 %v2002, %v2063
      %v2080 = vmul.f32 %v2004, %v2064
      %v2081 = vmul.f32 %v2006, %v2065
      %v2082 = vmul.f32 %v2008, %v2066
      %v2083 = vmul.f32 %v2010, %v2067
      %v2084 = vmul.f32 %v2012, %v2068
      %v2085 = vmul.f32 %v2014, %v2069
      %v2086 = vmul.f32 %v2016, %v2070
      %v2087 = vmul.f32 %v2018, %v2071
      %v2088 = vmul.f32 %v2020, %v2072
      %v2089 = vmul.f32 %v2022, %v2073
      %v2090 = vmul.f32 %v2024, %v2074
      %v2091 = vmul.f32 %v2026, %v2075
      %v2092 = vmul.f32 %v2028, %v2076
      %v2093 = vpack.c.bf16 %v2078, %v2077
      %v2094 = vpack.c.bf16 %v2080, %v2079
      %v2095 = vpack.c.bf16 %v2082, %v2081
      %v2096 = vpack.c.bf16 %v2084, %v2083
      %v2097 = vpack.c.bf16 %v2086, %v2085
      %v2098 = vpack.c.bf16 %v2088, %v2087
      %v2099 = vpack.c.bf16 %v2090, %v2089
      %v2100 = vpack.c.bf16 %v2092, %v2091
      %2101 = vrot.lane.b32.xlu0 %v407, 40
      %v2102 = vpop.permute.xlu0 %2101
      %2103 = vrot.lane.b32.xlu0 %v408, 40
      %v2104 = vpop.permute.xlu0 %2103
      %2105 = vrot.lane.b32.xlu0 %v409, 40
      %v2106 = vpop.permute.xlu0 %2105
      %2107 = vrot.lane.b32.xlu0 %v410, 40
      %v2108 = vpop.permute.xlu0 %2107
      %2109 = vrot.lane.b32.xlu0 %v411, 40
      %v2110 = vpop.permute.xlu0 %2109
      %2111 = vrot.lane.b32.xlu0 %v412, 40
      %v2112 = vpop.permute.xlu0 %2111
      %2113 = vrot.lane.b32.xlu0 %v413, 40
      %v2114 = vpop.permute.xlu0 %2113
      %2115 = vrot.lane.b32.xlu0 %v414, 40
      %v2116 = vpop.permute.xlu0 %2115
      %2125 = vmatprep.subr.bf16.mxu0 0
      %2126 = vmatpush1.bf16.msra.mxu0 %v2116
      %2127 = vmatprep.subr.bf16.mxu0 0
      %2128 = vmatpush1.bf16.msra.mxu0 %v2114
      %2129 = vmatprep.subr.bf16.mxu0 0
      %2130 = vmatpush1.bf16.msra.mxu0 %v2112
      %2131 = vmatprep.subr.bf16.mxu0 0
      %2132 = vmatpush1.bf16.msra.mxu0 %v2110
      %2133 = vmatprep.subr.bf16.mxu0 0
      %2134 = vmatpush1.bf16.msra.mxu0 %v2108
      %2135 = vmatprep.subr.bf16.mxu0 0
      %2136 = vmatpush1.bf16.msra.mxu0 %v2106
      %2137 = vmatprep.subr.bf16.mxu0 0
      %2138 = vmatpush1.bf16.msra.mxu0 %v2104
      %2139 = vmatprep.subr.bf16.mxu0 0
      %2140 = vmatpush1.bf16.msra.mxu0 %v2102
      %2141 = vmatprep.subr.bf16.mxu0 0
      %2142 = vmatpush2.bf16.msra.mxu0 0
      %2143 = vmatprep.subr.bf16.mxu0 0
      %2144 = vmatpush2.bf16.msra.mxu0 0
      %2145 = vmatprep.subr.bf16.mxu0 0
      %2146 = vmatpush2.bf16.msra.mxu0 0
      %2147 = vmatprep.subr.bf16.mxu0 0
      %2148 = vmatpush2.bf16.msra.mxu0 0
      %2149 = vmatprep.subr.bf16.mxu0 0
      %2150 = vmatpush2.bf16.msra.mxu0 0
      %2151 = vmatprep.subr.bf16.mxu0 0
      %2152 = vmatpush2.bf16.msra.mxu0 0
      %2153 = vmatprep.subr.bf16.mxu0 0
      %2154 = vmatpush2.bf16.msra.mxu0 0
      %2155 = vmatprep.subr.bf16.mxu0 0
      %2156 = vmatpush2.bf16.msra.mxu0 0
      %2157 = vmatprep.mubr.bf16.mxu0 0
      %2158 = vmatmul.mubr.bf16.gmra.mxu0 %v2093
      %v2159 = vpop.f32.mrf.mxu0
      %v2160 = vadd.f32 0.0, %v2159
      %v2161 = vpop.f32.mrf.mxu0
      %v2162 = vpop.f32.mrf.mxu0
      %v2163 = vadd.f32 0.0, %v2162
      %v2164 = vpop.f32.mrf.mxu0
      %2165 = vmatprep.mubr.bf16.mxu0 0
      %2166 = vmatmul.mubr.bf16.gmra.mxu0 %v2094
      %v2167 = vpop.f32.mrf.mxu0
      %v2168 = vadd.f32 0.0, %v2167
      %v2169 = vpop.f32.mrf.mxu0
      %v2170 = vpop.f32.mrf.mxu0
      %v2171 = vadd.f32 0.0, %v2170
      %v2172 = vpop.f32.mrf.mxu0
      %2173 = vmatprep.mubr.bf16.mxu0 0
      %2174 = vmatmul.mubr.bf16.gmra.mxu0 %v2095
      %v2175 = vpop.f32.mrf.mxu0
      %v2176 = vadd.f32 0.0, %v2175
      %v2177 = vpop.f32.mrf.mxu0
      %v2178 = vpop.f32.mrf.mxu0
      %v2179 = vadd.f32 0.0, %v2178
      %v2180 = vpop.f32.mrf.mxu0
      %2181 = vmatprep.mubr.bf16.mxu0 0
      %2182 = vmatmul.mubr.bf16.gmra.mxu0 %v2096
      %v2183 = vpop.f32.mrf.mxu0
      %v2184 = vadd.f32 0.0, %v2183
      %v2185 = vpop.f32.mrf.mxu0
      %v2186 = vpop.f32.mrf.mxu0
      %v2187 = vadd.f32 0.0, %v2186
      %v2188 = vpop.f32.mrf.mxu0
      %2189 = vmatprep.mubr.bf16.mxu0 0
      %2190 = vmatmul.mubr.bf16.gmra.mxu0 %v2097
      %v2191 = vpop.f32.mrf.mxu0
      %v2192 = vadd.f32 0.0, %v2191
      %v2193 = vpop.f32.mrf.mxu0
      %v2194 = vpop.f32.mrf.mxu0
      %v2195 = vadd.f32 0.0, %v2194
      %v2196 = vpop.f32.mrf.mxu0
      %2197 = vmatprep.mubr.bf16.mxu0 0
      %2198 = vmatmul.mubr.bf16.gmra.mxu0 %v2098
      %v2199 = vpop.f32.mrf.mxu0
      %v2200 = vadd.f32 0.0, %v2199
      %v2201 = vpop.f32.mrf.mxu0
      %v2202 = vpop.f32.mrf.mxu0
      %v2203 = vadd.f32 0.0, %v2202
      %v2204 = vpop.f32.mrf.mxu0
      %2205 = vmatprep.mubr.bf16.mxu0 0
      %2206 = vmatmul.mubr.bf16.gmra.mxu0 %v2099
      %v2207 = vpop.f32.mrf.mxu0
      %v2208 = vadd.f32 0.0, %v2207
      %v2209 = vpop.f32.mrf.mxu0
      %v2210 = vpop.f32.mrf.mxu0
      %v2211 = vadd.f32 0.0, %v2210
      %v2212 = vpop.f32.mrf.mxu0
      %2213 = vmatprep.mubr.bf16.mxu0 0
      %2214 = vmatmul.mubr.bf16.gmra.mxu0 %v2100
      %v2215 = vpop.f32.mrf.mxu0
      %v2216 = vadd.f32 0.0, %v2215
      %v2217 = vpop.f32.mrf.mxu0
      %v2218 = vpop.f32.mrf.mxu0
      %v2219 = vadd.f32 0.0, %v2218
      %v2220 = vpop.f32.mrf.mxu0
      %2221 = vdwg.mxu0
      %2238 = vrot.lane.b32.xlu0 %v1260, 8
      %v2239 = vpop.permute.xlu0 %2238
      %2240 = vrot.lane.b32.xlu0 %v1263, 8
      %v2241 = vpop.permute.xlu0 %2240
      %2242 = vrot.lane.b32.xlu0 %v1268, 8
      %v2243 = vpop.permute.xlu0 %2242
      %2244 = vrot.lane.b32.xlu0 %v1271, 8
      %v2245 = vpop.permute.xlu0 %2244
      %2246 = vrot.lane.b32.xlu0 %v1276, 8
      %v2247 = vpop.permute.xlu0 %2246
      %2248 = vrot.lane.b32.xlu0 %v1279, 8
      %v2249 = vpop.permute.xlu0 %2248
      %2250 = vrot.lane.b32.xlu0 %v1284, 8
      %v2251 = vpop.permute.xlu0 %2250
      %2252 = vrot.lane.b32.xlu0 %v1287, 8
      %v2253 = vpop.permute.xlu0 %2252
      %2254 = vrot.lane.b32.xlu0 %v1292, 8
      %v2255 = vpop.permute.xlu0 %2254
      %2256 = vrot.lane.b32.xlu0 %v1295, 8
      %v2257 = vpop.permute.xlu0 %2256
      %2258 = vrot.lane.b32.xlu0 %v1300, 8
      %v2259 = vpop.permute.xlu0 %2258
      %2260 = vrot.lane.b32.xlu0 %v1303, 8
      %v2261 = vpop.permute.xlu0 %2260
      %2262 = vrot.lane.b32.xlu0 %v1308, 8
      %v2263 = vpop.permute.xlu0 %2262
      %2264 = vrot.lane.b32.xlu0 %v1311, 8
      %v2265 = vpop.permute.xlu0 %2264
      %2266 = vrot.lane.b32.xlu0 %v1316, 8
      %v2267 = vpop.permute.xlu0 %2266
      %2268 = vrot.lane.b32.xlu0 %v1319, 8
      %v2269 = vpop.permute.xlu0 %2268
      %2302 = vrot.lane.b32.xlu0 %v1710, 16
      %v2303 = vpop.permute.xlu0 %2302
      %2304 = vrot.lane.b32.xlu0 %v1713, 16
      %v2305 = vpop.permute.xlu0 %2304
      %2306 = vrot.lane.b32.xlu0 %v1718, 16
      %v2307 = vpop.permute.xlu0 %2306
      %2308 = vrot.lane.b32.xlu0 %v1721, 16
      %v2309 = vpop.permute.xlu0 %2308
      %2310 = vrot.lane.b32.xlu0 %v1726, 16
      %v2311 = vpop.permute.xlu0 %2310
      %2312 = vrot.lane.b32.xlu0 %v1729, 16
      %v2313 = vpop.permute.xlu0 %2312
      %2314 = vrot.lane.b32.xlu0 %v1734, 16
      %v2315 = vpop.permute.xlu0 %2314
      %2316 = vrot.lane.b32.xlu0 %v1737, 16
      %v2317 = vpop.permute.xlu0 %2316
      %2318 = vrot.lane.b32.xlu0 %v1742, 16
      %v2319 = vpop.permute.xlu0 %2318
      %2320 = vrot.lane.b32.xlu0 %v1745, 16
      %v2321 = vpop.permute.xlu0 %2320
      %2322 = vrot.lane.b32.xlu0 %v1750, 16
      %v2323 = vpop.permute.xlu0 %2322
      %2324 = vrot.lane.b32.xlu0 %v1753, 16
      %v2325 = vpop.permute.xlu0 %2324
      %2326 = vrot.lane.b32.xlu0 %v1758, 16
      %v2327 = vpop.permute.xlu0 %2326
      %2328 = vrot.lane.b32.xlu0 %v1761, 16
      %v2329 = vpop.permute.xlu0 %2328
      %2330 = vrot.lane.b32.xlu0 %v1766, 16
      %v2331 = vpop.permute.xlu0 %2330
      %2332 = vrot.lane.b32.xlu0 %v1769, 16
      %v2333 = vpop.permute.xlu0 %2332
      %2366 = vrot.lane.b32.xlu0 %v2160, 24
      %v2367 = vpop.permute.xlu0 %2366
      %2368 = vrot.lane.b32.xlu0 %v2163, 24
      %v2369 = vpop.permute.xlu0 %2368
      %2370 = vrot.lane.b32.xlu0 %v2168, 24
      %v2371 = vpop.permute.xlu0 %2370
      %2372 = vrot.lane.b32.xlu0 %v2171, 24
      %v2373 = vpop.permute.xlu0 %2372
      %2374 = vrot.lane.b32.xlu0 %v2176, 24
      %v2375 = vpop.permute.xlu0 %2374
      %2376 = vrot.lane.b32.xlu0 %v2179, 24
      %v2377 = vpop.permute.xlu0 %2376
      %2378 = vrot.lane.b32.xlu0 %v2184, 24
      %v2379 = vpop.permute.xlu0 %2378
      %2380 = vrot.lane.b32.xlu0 %v2187, 24
      %v2381 = vpop.permute.xlu0 %2380
      %2382 = vrot.lane.b32.xlu0 %v2192, 24
      %v2383 = vpop.permute.xlu0 %2382
      %2384 = vrot.lane.b32.xlu0 %v2195, 24
      %v2385 = vpop.permute.xlu0 %2384
      %2386 = vrot.lane.b32.xlu0 %v2200, 24
      %v2387 = vpop.permute.xlu0 %2386
      %2388 = vrot.lane.b32.xlu0 %v2203, 24
      %v2389 = vpop.permute.xlu0 %2388
      %2390 = vrot.lane.b32.xlu0 %v2208, 24
      %v2391 = vpop.permute.xlu0 %2390
      %2392 = vrot.lane.b32.xlu0 %v2211, 24
      %v2393 = vpop.permute.xlu0 %2392
      %2394 = vrot.lane.b32.xlu0 %v2216, 24
      %v2395 = vpop.permute.xlu0 %2394
      %2396 = vrot.lane.b32.xlu0 %v2219, 24
      %v2397 = vpop.permute.xlu0 %2396
      %v2414 = vsel %vm445, %v802, %v2239
      %v2415 = vsel %vm445, %v805, %v2241
      %v2416 = vsel %vm445, %v810, %v2243
      %v2417 = vsel %vm445, %v813, %v2245
      %v2418 = vsel %vm445, %v818, %v2247
      %v2419 = vsel %vm445, %v821, %v2249
      %v2420 = vsel %vm445, %v826, %v2251
      %v2421 = vsel %vm445, %v829, %v2253
      %v2422 = vsel %vm445, %v834, %v2255
      %v2423 = vsel %vm445, %v837, %v2257
      %v2424 = vsel %vm445, %v842, %v2259
      %v2425 = vsel %vm445, %v845, %v2261
      %v2426 = vsel %vm445, %v850, %v2263
      %v2427 = vsel %vm445, %v853, %v2265
      %v2428 = vsel %vm445, %v858, %v2267
      %v2429 = vsel %vm445, %v861, %v2269
      %vm2430 = vcmask 130048
      %v2431 = vsel %vm2430, %v2414, %v2303
      %v2432 = vsel %vm2430, %v2415, %v2305
      %v2433 = vsel %vm2430, %v2416, %v2307
      %v2434 = vsel %vm2430, %v2417, %v2309
      %v2435 = vsel %vm2430, %v2418, %v2311
      %v2436 = vsel %vm2430, %v2419, %v2313
      %v2437 = vsel %vm2430, %v2420, %v2315
      %v2438 = vsel %vm2430, %v2421, %v2317
      %v2439 = vsel %vm2430, %v2422, %v2319
      %v2440 = vsel %vm2430, %v2423, %v2321
      %v2441 = vsel %vm2430, %v2424, %v2323
      %v2442 = vsel %vm2430, %v2425, %v2325
      %v2443 = vsel %vm2430, %v2426, %v2327
      %v2444 = vsel %vm2430, %v2427, %v2329
      %v2445 = vsel %vm2430, %v2428, %v2331
      %v2446 = vsel %vm2430, %v2429, %v2333
      %vm2447 = vcmask 195584
      %v2448 = vsel %vm2447, %v2431, %v2367
      %v2449 = vsel %vm2447, %v2432, %v2369
      %v2450 = vsel %vm2447, %v2433, %v2371
      %v2451 = vsel %vm2447, %v2434, %v2373
      %v2452 = vsel %vm2447, %v2435, %v2375
      %v2453 = vsel %vm2447, %v2436, %v2377
      %v2454 = vsel %vm2447, %v2437, %v2379
      %v2455 = vsel %vm2447, %v2438, %v2381
      %v2456 = vsel %vm2447, %v2439, %v2383
      %v2457 = vsel %vm2447, %v2440, %v2385
      %v2458 = vsel %vm2447, %v2441, %v2387
      %v2459 = vsel %vm2447, %v2442, %v2389
      %v2460 = vsel %vm2447, %v2443, %v2391
      %v2461 = vsel %vm2447, %v2444, %v2393
      %v2462 = vsel %vm2447, %v2445, %v2395
      %v2463 = vsel %vm2447, %v2446, %v2397
      %v2464 = vpack.c.bf16 %v2449, %v2448
      %v2465 = vpack.c.bf16 %v2451, %v2450
      %v2466 = vpack.c.bf16 %v2453, %v2452
      %v2467 = vpack.c.bf16 %v2455, %v2454
      %v2468 = vpack.c.bf16 %v2457, %v2456
      %v2469 = vpack.c.bf16 %v2459, %v2458
      %v2470 = vpack.c.bf16 %v2461, %v2460
      %v2471 = vpack.c.bf16 %v2463, %v2462
      %v2480 = vunpack.c.l.b16 %v2464
      %v2481 = vunpack.c.h.b16 %v2464
      %v2482 = vunpack.c.l.b16 %v2465
      %v2483 = vunpack.c.h.b16 %v2465
      %v2484 = vunpack.c.l.b16 %v2466
      %v2485 = vunpack.c.h.b16 %v2466
      %v2486 = vunpack.c.l.b16 %v2467
      %v2487 = vunpack.c.h.b16 %v2467
      %v2488 = vunpack.c.l.b16 %v2468
      %v2489 = vunpack.c.h.b16 %v2468
      %v2490 = vunpack.c.l.b16 %v2469
      %v2491 = vunpack.c.h.b16 %v2469
      %v2492 = vunpack.c.l.b16 %v2470
      %v2493 = vunpack.c.h.b16 %v2470
      %v2494 = vunpack.c.l.b16 %v2471
      %v2495 = vunpack.c.h.b16 %v2471
      %v2496 = vpack.c.b16 %v2480, %v2480
      %v2497 = vpack.c.b16 %v2481, %v2481
      %v2498 = vpack.c.b16 %v2482, %v2482
      %v2499 = vpack.c.b16 %v2483, %v2483
      %v2500 = vpack.c.b16 %v2484, %v2484
      %v2501 = vpack.c.b16 %v2485, %v2485
      %v2502 = vpack.c.b16 %v2486, %v2486
      %v2503 = vpack.c.b16 %v2487, %v2487
      %v2504 = vpack.c.b16 %v2488, %v2488
      %v2505 = vpack.c.b16 %v2489, %v2489
      %v2506 = vpack.c.b16 %v2490, %v2490
      %v2507 = vpack.c.b16 %v2491, %v2491
      %v2508 = vpack.c.b16 %v2492, %v2492
      %v2509 = vpack.c.b16 %v2493, %v2493
      %v2510 = vpack.c.b16 %v2494, %v2494
      %v2511 = vpack.c.b16 %v2495, %v2495
      %vm2528 = vcmask 257024
      %2529 = vst.msk [vmem:[%s211] sm:$0xf] %vm2528, %v2496
      %2530 = vst.msk [vmem:[%s211 + $0x4] sm:$0xf] %vm2528, %v2497
      %2531 = vst.msk [vmem:[%s211 + $0x8] sm:$0xf] %vm2528, %v2498
      %2532 = vst.msk [vmem:[%s211 + $0xc] sm:$0xf] %vm2528, %v2499
      %2533 = vst.msk [vmem:[%s211 + $0x10] sm:$0xf] %vm2528, %v2500
      %2534 = vst.msk [vmem:[%s211 + $0x14] sm:$0xf] %vm2528, %v2501
      %2535 = vst.msk [vmem:[%s211 + $0x18] sm:$0xf] %vm2528, %v2502
      %2536 = vst.msk [vmem:[%s211 + $0x1c] sm:$0xf] %vm2528, %v2503
      %2537 = vst.msk [vmem:[%s211 + $0x20] sm:$0xf] %vm2528, %v2504
      %2538 = vst.msk [vmem:[%s211 + $0x24] sm:$0xf] %vm2528, %v2505
      %2539 = vst.msk [vmem:[%s211 + $0x28] sm:$0xf] %vm2528, %v2506
      %2540 = vst.msk [vmem:[%s211 + $0x2c] sm:$0xf] %vm2528, %v2507
      %2541 = vst.msk [vmem:[%s211 + $0x30] sm:$0xf] %vm2528, %v2508
      %2542 = vst.msk [vmem:[%s211 + $0x34] sm:$0xf] %vm2528, %v2509
      %2543 = vst.msk [vmem:[%s211 + $0x38] sm:$0xf] %vm2528, %v2510
      %2544 = vst.msk [vmem:[%s211 + $0x3c] sm:$0xf] %vm2528, %v2511
      %p2545 = scmp.lt.s32.totalorder %s15, 1
      %s2546 = scalar_select %p2545, %s15, 1
      %s2547 = smul.addr %s2546, 16
      %s2548 = smul.addr %s2547, 4
      %s2549 = scalar_lea.vmem %s4, %s2548
      // Predicated region
      $region37: #{encoder_forward.4} parent=35 // pred_check
        %p2550 = pneg %p127
      $region38: #{encoder_forward.4} parent=35 // pred_check_branch
        %2552 = sbr.rel (%p2550) target = $region40
      $region39: #{encoder_forward.4} parent=35 // pred_region
        _
      $region40: #{encoder_forward.4} parent=35 // pred_fallthru
        _
    $region36: #{encoder_forward.4} parent=5 // pred_fallthru
      _
    %p2553 = scmp.le.s32.totalorder 2, %s10
    // Predicated region
    $region41: #{encoder_forward.4} parent=5 // pred_check
      %p2554 = pneg %p2553
    $region42: #{encoder_forward.4} parent=5 // pred_check_branch
      %2556 = sbr.rel (%p2554) target = $region44
    $region43: #{encoder_forward.4} parent=5 // pred_region
      %s2557 = ssub.s32 %s10, 2
      // Predicated region
      $region45: #{encoder_forward.4} parent=43 // pred_check
        %p2558 = pneg %p133
      $region46: #{encoder_forward.4} parent=43 // pred_check_branch
        %2560 = sbr.rel (%p2558) target = $region48
      $region47: #{encoder_forward.4} parent=43 // pred_region
        %p2561 = scmp.lt.s32.totalorder %s16, 1
        %s2562 = scalar_select %p2561, %s16, 1
        %s2563 = smul.addr %s2562, 16
        %s2564 = smul.addr %s2563, 4
        %s2565 = scalar_lea.vmem %s4, %s2564
      $region48: #{encoder_forward.4} parent=43 // pred_fallthru
        _
    $region44: #{encoder_forward.4} parent=5 // pred_fallthru
      _
  $region6: #{encoder_forward.4} parent=0 // loop_footer
    %s14 = sadd.s32 1, %s10
  $region7: #{encoder_forward.4} parent=0 // loop_footer_branch
    %9 = sbr.rel target = $region3
  $region8: #{encoder_forward.4} parent=0 // loop_exit
    _

</llo_original>
